<compile_context>
chip_gen: v7x
topology: tpu7x:2x2x1
jax: 0.10.0
libtpu: 0.0.40
codegen_flags: <defaults>
</compile_context>

<pallas_src>
import functools

import jax
import jax.numpy as jnp
from jax import lax
from jax.experimental import pallas as pl
from jax.experimental.pallas import tpu as pltpu


# ----------------------------------------------------------------------------- helpers
def _round_up(x, m):
    return (x + m - 1) // m * m


def _pad_axis(w, axis, new_size):
    pad = [(0, 0)] * w.ndim
    pad[axis] = (0, new_size - w.shape[axis])
    return jnp.pad(w, pad)


def _pad_gate_cols(w, h, hp):
    """Pad the trailing 4*h gate axis to 4*hp, keeping the (i, f, g, o) gate blocks
    each aligned to a multiple-of-128 column offset."""
    parts = [w[..., k * h:(k + 1) * h] for k in range(4)]
    pad = [(0, 0)] * (w.ndim - 1) + [(0, hp - h)]
    return jnp.concatenate([jnp.pad(p, pad) for p in parts], axis=-1)


def _nbytes(shape, itemsize):
    n = 1
    for s in shape:
        n *= int(s)
    return n * itemsize


# ----------------------------------------------------------------------------- kernel
def _lstm_recurrence_kernel(
    xg_ref,       # (TB, Bp, 4Hp) bf16  gathered layer-0 input projection (no bias)
    whh0_ref,     # (Hp, 4Hp)     bf16  layer-0 hidden->gates weight
    b0_ref,       # (1, 4Hp)      f32   layer-0 bias (b_ih + b_hh)
    wihr_ref,     # (Lm1, Hp, 4Hp) bf16 W_ih for layers >= 1
    whhr_ref,     # (Lm1, Hp, 4Hp) bf16 W_hh for layers >= 1
    br_ref,       # (Lm1, 1, 4Hp) f32   bias (b_ih + b_hh) for layers >= 1
    fc1w_ref,     # (Hp, 256)     bf16
    fc1b_ref,     # (1, 256)      f32
    fc2w_ref,     # (256, Op)     bf16
    fc2b_ref,     # (1, Op)       f32
    hn_ref,       # (L, Bp, Hp)   f32   out: final hidden state
    cn_ref,       # (L, Bp, Hp)   f32   out: final cell state
    logits_ref,   # (Bp, Op)      f32   out: fc head logits
    h_s,          # scratch VMEM (L, Bp, Hp) f32 (block-boundary state only)
    c_s,          # scratch VMEM (L, Bp, Hp) f32
    *,
    num_layers,
    hidden_pad,
    batch_pad,
    time_block,
    seq_len,
):
    Hp, Bp, TB, L = hidden_pad, batch_pad, time_block, num_layers
    blk = pl.program_id(0)
    needs_mask = (seq_len % TB) != 0  # static: padded timesteps exist only then

    # hidden=None in the PyTorch module -> zero-initialized (h, c).
    @pl.when(blk == 0)
    def _():
        h_s[...] = jnp.zeros_like(h_s)
        c_s[...] = jnp.zeros_like(c_s)

    # --- hoisted, loop-invariant loads / broadcasts (JAX does not CSE these) ----------
    whh0 = whh0_ref[...]
    b0 = jnp.broadcast_to(b0_ref[...], (Bp, 4 * Hp))
    w_ih = [wihr_ref[l] for l in range(L - 1)]
    w_hh = [whhr_ref[l] for l in range(L - 1)]
    b_r = [jnp.broadcast_to(br_ref[l], (Bp, 4 * Hp)) for l in range(L - 1)]

    # Block-start state: load from scratch once per block; keep it in vregs inside the
    # unrolled time loop (no per-timestep VMEM round-trips on the serial path).
    h0 = tuple(h_s[l] for l in range(L))
    c0 = tuple(c_s[l] for l in range(L))

    def sigmoid(x):  # one EUP op (tanh) instead of exp + reciprocal
        return 0.5 * jnp.tanh(0.5 * x) + 0.5

    def cell(gates, c_prev):
        # Gate slices are whole 128-lane vregs because Hp is a multiple of 128.
        i_g = sigmoid(gates[:, 0 * Hp:1 * Hp])
        f_g = sigmoid(gates[:, 1 * Hp:2 * Hp])
        g_g = jnp.tanh(gates[:, 2 * Hp:3 * Hp])
        o_g = sigmoid(gates[:, 3 * Hp:4 * Hp])
        c_new = f_g * c_prev + i_g * g_g
        h_new = o_g * jnp.tanh(c_new)
        return h_new, c_new

    def step(i, carry):
        hs, cs = carry
        hs, cs = list(hs), list(cs)
        if needs_mask:
            valid = (blk * TB + i) < seq_len

        # Layer 0: the input-side projection is a gathered table row (xg_ref); only the
        # recurrent h @ W_hh matmul remains on the serial path.
        gates = jnp.dot(hs[0].astype(jnp.bfloat16), whh0,
                        preferred_element_type=jnp.float32)
        gates = gates + xg_ref[i].astype(jnp.float32) + b0
        h_new, c_new = cell(gates, cs[0])
        if needs_mask:
            h_new = jnp.where(valid, h_new, hs[0])
            c_new = jnp.where(valid, c_new, cs[0])
        hs[0], cs[0] = h_new, c_new
        x = h_new  # inter-layer dropout is identity in eval mode

        # Layers 1..L-1: two K=Hp MXU pushes per layer (no per-step concat).
        for l in range(1, L):
            g = (jnp.dot(x.astype(jnp.bfloat16), w_ih[l - 1],
                         preferred_element_type=jnp.float32)
                 + jnp.dot(hs[l].astype(jnp.bfloat16), w_hh[l - 1],
                           preferred_element_type=jnp.float32)
                 + b_r[l - 1])
            h_new, c_new = cell(g, cs[l])
            if needs_mask:
                h_new = jnp.where(valid, h_new, hs[l])
                c_new = jnp.where(valid, c_new, cs[l])
            hs[l], cs[l] = h_new, c_new
            x = h_new
        return tuple(hs), tuple(cs)

    hs, cs = lax.fori_loop(0, TB, step, (h0, c0), unroll=True)

    # Persist block-boundary state for the next time block.
    for l in range(L):
        h_s[l] = hs[l]
        c_s[l] = cs[l]

    # Last block: emit final states and run the fused fc1/relu/fc2 head on the top-layer
    # final hidden state (== lstm_output[:, -1, :]).  Dropout is identity in eval mode.
    @pl.when(blk == pl.num_programs(0) - 1)
    def _():
        for l in range(L):
            hn_ref[l] = hs[l]
            cn_ref[l] = cs[l]
        z = jnp.dot(hs[L - 1].astype(jnp.bfloat16), fc1w_ref[...],
                    preferred_element_type=jnp.float32) + fc1b_ref[...]
        z = jnp.maximum(z, 0.0)
        logits_ref[...] = jnp.dot(z.astype(jnp.bfloat16), fc2w_ref[...],
                                  preferred_element_type=jnp.float32) + fc2b_ref[...]


# ----------------------------------------------------------------------------- param prep
def _prepare_params(params, *, hidden_size, num_layers, hp, op):
    """Pad to lane/sublane-dense shapes, fold layer-0 input projection into a gather
    table, cast matmul weights to bf16 (f32 accumulation in-kernel)."""
    H, L = hidden_size, num_layers

    emb = _pad_axis(params["embedding"], 1, hp)                       # (V, Hp)  f32
    bias = _pad_gate_cols(params["bias"], H, hp)                      # (L, 1, 4Hp) f32
    w_ih = _pad_gate_cols(_pad_axis(params["w_ih"], 1, hp), H, hp)    # (L, Hp, 4Hp) f32
    w_hh = _pad_gate_cols(_pad_axis(params["w_hh"], 1, hp), H, hp)    # (L, Hp, 4Hp) f32

    # Gather table: embedding @ W_ih[0]  (one tiny GEMM, f32 accum, stored bf16).
    proj_table = jnp.dot(emb, w_ih[0],
                         preferred_element_type=jnp.float32).astype(jnp.bfloat16)

    prepared = {
        "proj_table": proj_table,                                     # (V, 4Hp) bf16
        "w_hh0": w_hh[0].astype(jnp.bfloat16),                        # (Hp, 4Hp)
        "b0": bias[0],                                                # (1, 4Hp) f32
        "fc1_w": _pad_axis(params["fc1_w"], 0, hp).astype(jnp.bfloat16),   # (Hp, 256)
        "fc1_b": params["fc1_b"],                                     # (1, 256) f32
        "fc2_w": _pad_axis(params["fc2_w"], 1, op).astype(jnp.bfloat16),   # (256, Op)
        "fc2_b": _pad_axis(params["fc2_b"], 1, op),                   # (1, Op) f32
    }
    if L > 1:
        prepared["w_ih_rest"] = w_ih[1:].astype(jnp.bfloat16)         # (L-1, Hp, 4Hp)
        prepared["w_hh_rest"] = w_hh[1:].astype(jnp.bfloat16)         # (L-1, Hp, 4Hp)
        prepared["b_rest"] = bias[1:]                                 # (L-1, 1, 4Hp)
    else:  # placeholders (never read when num_layers == 1)
        prepared["w_ih_rest"] = jnp.zeros((1, hp, 4 * hp), jnp.bfloat16)
        prepared["w_hh_rest"] = jnp.zeros((1, hp, 4 * hp), jnp.bfloat16)
        prepared["b_rest"] = jnp.zeros((1, 1, 4 * hp), jnp.float32)
    return prepared


# ----------------------------------------------------------------------------- forward
def music_rnn_forward(x_tokens, params, *, hidden_size, num_layers, output_size):
    """x_tokens: int32 (B, T) token ids. Returns (logits (B, O), (h_n, c_n))."""
    B, T = x_tokens.shape
    H, L, O = hidden_size, num_layers, output_size

    Hp = _round_up(max(H, 1), 128)   # lane-aligned hidden size
    Bp = _round_up(max(B, 1), 8)     # sublane-dense batch
    Op = _round_up(max(O, 1), 128)   # lane-dense logits (no masked vst)
    TB = min(32, _round_up(T, 8))    # fixed time block (no divisor pathology)
    T_pad = _round_up(T, TB)
    Lm1 = max(L - 1, 1)
    n_blocks = T_pad // TB

    p = _prepare_params(params, hidden_size=H, num_layers=L, hp=Hp, op=Op)

    # Layer-0 input projection = pure gather from the precomputed table, produced
    # directly in time-major order (no (Bp,T,Hp) embedding intermediate / transpose).
    x_p = jnp.zeros((Bp, T), jnp.int32).at[:B].set(x_tokens)
    xg = p["proj_table"][jnp.transpose(x_p)]                 # (T, Bp, 4Hp) bf16
    if T_pad != T:
        xg = jnp.pad(xg, ((0, T_pad - T), (0, 0), (0, 0)))   # padded steps masked in-kernel

    kernel = functools.partial(
        _lstm_recurrence_kernel, num_layers=L, hidden_pad=Hp, batch_pad=Bp,
        time_block=TB, seq_len=T)

    grid_spec = pltpu.PrefetchScalarGridSpec(
        num_scalar_prefetch=0,
        grid=(n_blocks,),
        in_specs=[
            pl.BlockSpec((TB, Bp, 4 * Hp), lambda t: (t, 0, 0)),       # xg, one time block
            pl.BlockSpec((Hp, 4 * Hp), lambda t: (0, 0)),              # W_hh layer 0
            pl.BlockSpec((1, 4 * Hp), lambda t: (0, 0)),               # b0
            pl.BlockSpec((Lm1, Hp, 4 * Hp), lambda t: (0, 0, 0)),      # W_ih layers>=1
            pl.BlockSpec((Lm1, Hp, 4 * Hp), lambda t: (0, 0, 0)),      # W_hh layers>=1
            pl.BlockSpec((Lm1, 1, 4 * Hp), lambda t: (0, 0, 0)),       # bias layers>=1
            pl.BlockSpec((Hp, 256), lambda t: (0, 0)),                 # fc1 weight
            pl.BlockSpec((1, 256), lambda t: (0, 0)),                  # fc1 bias
            pl.BlockSpec((256, Op), lambda t: (0, 0)),                 # fc2 weight
            pl.BlockSpec((1, Op), lambda t: (0, 0)),                   # fc2 bias
        ],
        out_specs=[
            pl.BlockSpec((L, Bp, Hp), lambda t: (0, 0, 0)),            # h_n
            pl.BlockSpec((L, Bp, Hp), lambda t: (0, 0, 0)),            # c_n
            pl.BlockSpec((Bp, Op), lambda t: (0, 0)),                  # logits
        ],
        scratch_shapes=[
            pltpu.VMEM((L, Bp, Hp), jnp.float32),                      # h state (block boundary)
            pltpu.VMEM((L, Bp, Hp), jnp.float32),                      # c state (block boundary)
        ],
    )

    # VMEM budget from actual buffers (inputs double-buffered) + margin, instead of a
    # flat number; keeps headroom on v7x's 64 MiB physical VMEM.
    vmem_needed = (
        2 * _nbytes((TB, Bp, 4 * Hp), 2)
        + 2 * _nbytes((Hp, 4 * Hp), 2)
        + 2 * _nbytes((1, 4 * Hp), 4)
        + 4 * _nbytes((Lm1, Hp, 4 * Hp), 2)
        + 2 * _nbytes((Lm1, 1, 4 * Hp), 4)
        + 2 * (_nbytes((Hp, 256), 2) + _nbytes((1, 256), 4)
               + _nbytes((256, Op), 2) + _nbytes((1, Op), 4))
        + 4 * _nbytes((L, Bp, Hp), 4)      # hn + cn outputs
        + _nbytes((Bp, Op), 4)             # logits output
        + 2 * _nbytes((L, Bp, Hp), 4)      # scratch
    )
    vmem_limit = min(max(vmem_needed + 4 * 1024 * 1024, 16 * 1024 * 1024),
                     100 * 1024 * 1024)

    h_n_p, c_n_p, logits_p = pl.pallas_call(
        kernel,
        out_shape=(
            jax.ShapeDtypeStruct((L, Bp, Hp), jnp.float32),
            jax.ShapeDtypeStruct((L, Bp, Hp), jnp.float32),
            jax.ShapeDtypeStruct((Bp, Op), jnp.float32),
        ),
        grid_spec=grid_spec,
        compiler_params=pltpu.CompilerParams(
            # The time axis is a sequential recurrence.  (On v7x with large batch one
            # could add a leading "parallel" batch-block axis for the second TensorCore.)
            dimension_semantics=("arbitrary",),
            vmem_limit_bytes=int(vmem_limit),
        ),
    )(xg, p["w_hh0"], p["b0"], p["w_ih_rest"], p["w_hh_rest"], p["b_rest"],
      p["fc1_w"], p["fc1_b"], p["fc2_w"], p["fc2_b"])

    logits = logits_p[:B, :O]
    h_n = h_n_p[:, :B, :H]
    c_n = c_n_p[:, :B, :H]
    return logits, (h_n, c_n)


# ----------------------------------------------------------------------------- params
def init_params(key, *, input_size, hidden_size, output_size, num_layers):
    """Deterministic synthetic parameters matching MusicRNN.__init__ shapes.
    LSTM/FC weights are stored pre-transposed as (in_features, out_features);
    per-layer LSTM biases are pre-summed (b_ih + b_hh)."""
    H = hidden_size
    keys = jax.random.split(key, 8)
    scale = 1.0 / jnp.sqrt(jnp.float32(H))
    params = {
        # nn.Embedding(input_size, hidden_size)
        "embedding": jax.random.normal(keys[0], (input_size, H), jnp.float32) * 0.1,
        # nn.LSTM(H, H, num_layers): W_ih/W_hh pre-transposed -> (L, H, 4H)
        "w_ih": jax.random.uniform(keys[1], (num_layers, H, 4 * H), jnp.float32,
                                   -scale, scale),
        "w_hh": jax.random.uniform(keys[2], (num_layers, H, 4 * H), jnp.float32,
                                   -scale, scale),
        "bias": (jax.random.uniform(keys[3], (num_layers, 1, 4 * H), jnp.float32,
                                    -scale, scale)
                 + jax.random.uniform(keys[4], (num_layers, 1, 4 * H), jnp.float32,
                                      -scale, scale)),
        # nn.Linear(H, 256)
        "fc1_w": jax.random.normal(keys[5], (H, 256), jnp.float32) * 0.05,
        "fc1_b": jnp.zeros((1, 256), jnp.float32),
        # nn.Linear(256, output_size)
        "fc2_w": jax.random.normal(keys[6], (256, output_size), jnp.float32) * 0.05,
        "fc2_b": jnp.zeros((1, output_size), jnp.float32),
    }
    return params


if __name__ == "__main__":
    INPUT_SIZE = 64     # vocabulary size
    HIDDEN_SIZE = 32
    OUTPUT_SIZE = 16
    NUM_LAYERS = 2
    BATCH = 2
    SEQ = 8

    key = jax.random.PRNGKey(0)
    pkey, xkey = jax.random.split(key)
    params = init_params(
        pkey,
        input_size=INPUT_SIZE,
        hidden_size=HIDDEN_SIZE,
        output_size=OUTPUT_SIZE,
        num_layers=NUM_LAYERS,
    )
    x_tokens = jax.random.randint(xkey, (BATCH, SEQ), 0, INPUT_SIZE, dtype=jnp.int32)

    logits, (h_n, c_n) = music_rnn_forward(
        x_tokens,
        params,
        hidden_size=HIDDEN_SIZE,
        num_layers=NUM_LAYERS,
        output_size=OUTPUT_SIZE,
    )
    jax.block_until_ready((logits, h_n, c_n))

    assert logits.shape == (BATCH, OUTPUT_SIZE)
    assert h_n.shape == (NUM_LAYERS, BATCH, HIDDEN_SIZE)
    assert c_n.shape == (NUM_LAYERS, BATCH, HIDDEN_SIZE)
    print("KERNEL_OK")
</pallas_src>

<mosaic_0001>
module attributes {stable_mosaic.version = 11 : i64} {
  func.func @_lstm_recurrence_kernel(%arg0: i32, %arg1: memref<8x8x512xbf16, #tpu.memory_space<vmem>>, %arg2: memref<128x512xbf16, #tpu.memory_space<vmem>>, %arg3: memref<1x512xf32, #tpu.memory_space<vmem>>, %arg4: memref<1x128x512xbf16, #tpu.memory_space<vmem>>, %arg5: memref<1x128x512xbf16, #tpu.memory_space<vmem>>, %arg6: memref<1x1x512xf32, #tpu.memory_space<vmem>>, %arg7: memref<128x256xbf16, #tpu.memory_space<vmem>>, %arg8: memref<1x256xf32, #tpu.memory_space<vmem>>, %arg9: memref<256x128xbf16, #tpu.memory_space<vmem>>, %arg10: memref<1x128xf32, #tpu.memory_space<vmem>>, %arg11: memref<2x8x128xf32, #tpu.memory_space<vmem>>, %arg12: memref<2x8x128xf32, #tpu.memory_space<vmem>>, %arg13: memref<8x128xf32, #tpu.memory_space<vmem>>, %arg14: memref<2x8x128xf32, #tpu.memory_space<vmem>>, %arg15: memref<2x8x128xf32, #tpu.memory_space<vmem>>) attributes {dimension_semantics = [#tpu.dimension_semantics<arbitrary>], iteration_bounds = array<i64: 1>, scalar_prefetch = 0 : i64, scratch_operands = 2 : i64, tpu.core_type = #tpu.core_type<tc>, window_params = [{transform_indices = @transform_0, window_bounds = array<i64: 8, 8, 512>}, {pipeline_mode = #tpu.pipeline_mode<synchronous>, transform_indices = @transform_1, window_bounds = array<i64: 128, 512>}, {pipeline_mode = #tpu.pipeline_mode<synchronous>, transform_indices = @transform_2, window_bounds = array<i64: 1, 512>}, {pipeline_mode = #tpu.pipeline_mode<synchronous>, transform_indices = @transform_3, window_bounds = array<i64: 1, 128, 512>}, {pipeline_mode = #tpu.pipeline_mode<synchronous>, transform_indices = @transform_4, window_bounds = array<i64: 1, 128, 512>}, {pipeline_mode = #tpu.pipeline_mode<synchronous>, transform_indices = @transform_5, window_bounds = array<i64: 1, 1, 512>}, {pipeline_mode = #tpu.pipeline_mode<synchronous>, transform_indices = @transform_6, window_bounds = array<i64: 128, 256>}, {pipeline_mode = #tpu.pipeline_mode<synchronous>, transform_indices = @transform_7, window_bounds = array<i64: 1, 256>}, {pipeline_mode = #tpu.pipeline_mode<synchronous>, transform_indices = @transform_8, window_bounds = array<i64: 256, 128>}, {pipeline_mode = #tpu.pipeline_mode<synchronous>, transform_indices = @transform_9, window_bounds = array<i64: 1, 128>}, {pipeline_mode = #tpu.pipeline_mode<synchronous>, transform_indices = @transform_10, window_bounds = array<i64: 2, 8, 128>}, {pipeline_mode = #tpu.pipeline_mode<synchronous>, transform_indices = @transform_11, window_bounds = array<i64: 2, 8, 128>}, {pipeline_mode = #tpu.pipeline_mode<synchronous>, transform_indices = @transform_12, window_bounds = array<i64: 8, 128>}]} {
    %c0_i32 = arith.constant 0 : i32
    %0 = arith.cmpi eq, %arg0, %c0_i32 : i32
    %1 = arith.extui %0 : i1 to i32
    %c0_i32_0 = arith.constant 0 : i32
    %2 = arith.cmpi ne, %1, %c0_i32_0 : i32
    scf.if %2 {
      %cst_222 = arith.constant 0.000000e+00 : f32
      %646 = vector.broadcast %cst_222 : f32 to vector<2x8x128xf32>
      %c0_223 = arith.constant 0 : index
      %c0_224 = arith.constant 0 : index
      %c0_225 = arith.constant 0 : index
      %647 = vector.load %arg14[%c0_223, %c0_224, %c0_225] : memref<2x8x128xf32, #tpu.memory_space<vmem>>, vector<2x8x128xf32>
      tpu.vector_store %arg14[%c0_223, %c0_224, %c0_225], %646 {strides = array<i32>} : memref<2x8x128xf32, #tpu.memory_space<vmem>>, vector<2x8x128xf32>,
      %cst_226 = arith.constant 0.000000e+00 : f32
      %648 = vector.broadcast %cst_226 : f32 to vector<2x8x128xf32>
      %c0_227 = arith.constant 0 : index
      %c0_228 = arith.constant 0 : index
      %c0_229 = arith.constant 0 : index
      %649 = vector.load %arg15[%c0_227, %c0_228, %c0_229] : memref<2x8x128xf32, #tpu.memory_space<vmem>>, vector<2x8x128xf32>
      tpu.vector_store %arg15[%c0_227, %c0_228, %c0_229], %648 {strides = array<i32>} : memref<2x8x128xf32, #tpu.memory_space<vmem>>, vector<2x8x128xf32>,
    } else {
    }
    %c0 = arith.constant 0 : index
    %c0_1 = arith.constant 0 : index
    %3 = vector.load %arg2[%c0, %c0_1] : memref<128x512xbf16, #tpu.memory_space<vmem>>, vector<128x512xbf16>
    %c0_2 = arith.constant 0 : index
    %c0_3 = arith.constant 0 : index
    %4 = vector.load %arg3[%c0_2, %c0_3] : memref<1x512xf32, #tpu.memory_space<vmem>>, vector<1x512xf32>
    %5 = vector.shape_cast %4 : vector<1x512xf32> to vector<1x512xf32>
    %6 = vector.broadcast %5 : vector<1x512xf32> to vector<8x512xf32>
    %c0_4 = arith.constant 0 : index
    %c0_5 = arith.constant 0 : index
    %c0_6 = arith.constant 0 : index
    %7 = vector.load %arg4[%c0_4, %c0_5, %c0_6] : memref<1x128x512xbf16, #tpu.memory_space<vmem>>, vector<1x128x512xbf16>
    %8 = vector.shape_cast %7 : vector<1x128x512xbf16> to vector<128x512xbf16>
    %c0_7 = arith.constant 0 : index
    %c0_8 = arith.constant 0 : index
    %c0_9 = arith.constant 0 : index
    %9 = vector.load %arg5[%c0_7, %c0_8, %c0_9] : memref<1x128x512xbf16, #tpu.memory_space<vmem>>, vector<1x128x512xbf16>
    %10 = vector.shape_cast %9 : vector<1x128x512xbf16> to vector<128x512xbf16>
    %c0_10 = arith.constant 0 : index
    %c0_11 = arith.constant 0 : index
    %c0_12 = arith.constant 0 : index
    %11 = vector.load %arg6[%c0_10, %c0_11, %c0_12] : memref<1x1x512xf32, #tpu.memory_space<vmem>>, vector<1x1x512xf32>
    %12 = vector.shape_cast %11 : vector<1x1x512xf32> to vector<1x512xf32>
    %13 = vector.shape_cast %12 : vector<1x512xf32> to vector<1x512xf32>
    %14 = vector.broadcast %13 : vector<1x512xf32> to vector<8x512xf32>
    %c0_13 = arith.constant 0 : index
    %c0_14 = arith.constant 0 : index
    %c0_15 = arith.constant 0 : index
    %15 = vector.load %arg14[%c0_13, %c0_14, %c0_15] : memref<2x8x128xf32, #tpu.memory_space<vmem>>, vector<1x8x128xf32>
    %16 = vector.shape_cast %15 : vector<1x8x128xf32> to vector<8x128xf32>
    %c1 = arith.constant 1 : index
    %c0_16 = arith.constant 0 : index
    %c0_17 = arith.constant 0 : index
    %17 = vector.load %arg14[%c1, %c0_16, %c0_17] : memref<2x8x128xf32, #tpu.memory_space<vmem>>, vector<1x8x128xf32>
    %18 = vector.shape_cast %17 : vector<1x8x128xf32> to vector<8x128xf32>
    %c0_18 = arith.constant 0 : index
    %c0_19 = arith.constant 0 : index
    %c0_20 = arith.constant 0 : index
    %19 = vector.load %arg15[%c0_18, %c0_19, %c0_20] : memref<2x8x128xf32, #tpu.memory_space<vmem>>, vector<1x8x128xf32>
    %20 = vector.shape_cast %19 : vector<1x8x128xf32> to vector<8x128xf32>
    %c1_21 = arith.constant 1 : index
    %c0_22 = arith.constant 0 : index
    %c0_23 = arith.constant 0 : index
    %21 = vector.load %arg15[%c1_21, %c0_22, %c0_23] : memref<2x8x128xf32, #tpu.memory_space<vmem>>, vector<1x8x128xf32>
    %22 = vector.shape_cast %21 : vector<1x8x128xf32> to vector<8x128xf32>
    %c0_i32_24 = arith.constant 0 : i32
    %23 = arith.truncf %16 : vector<8x128xf32> to vector<8x128xbf16>
    %cst = arith.constant dense<0.000000e+00> : vector<8x512xf32>
    %24 = tpu.matmul %23, %3, %cst {dimension_numbers = #tpu.dot_dimension_numbers<[1], [0], [0], [1], [0, 0, 1, 1], [], []>} : vector<8x128xbf16>, vector<128x512xbf16>, vector<8x512xf32> -> vector<8x512xf32>
    %25 = arith.index_cast %c0_i32_24 : i32 to index
    %c0_25 = arith.constant 0 : index
    %c0_26 = arith.constant 0 : index
    %26 = vector.load %arg1[%25, %c0_25, %c0_26] : memref<8x8x512xbf16, #tpu.memory_space<vmem>>, vector<1x8x512xbf16>
    %27 = vector.shape_cast %26 : vector<1x8x512xbf16> to vector<8x512xbf16>
    %28 = arith.extf %27 : vector<8x512xbf16> to vector<8x512xf32>
    %29 = arith.addf %24, %28 : vector<8x512xf32>
    %30 = arith.addf %29, %6 : vector<8x512xf32>
    %31 = vector.extract_strided_slice %30 {offsets = [0, 0], sizes = [8, 128], strides = [1, 1]} : vector<8x512xf32> to vector<8x128xf32>
    %cst_27 = arith.constant 5.000000e-01 : f32
    %32 = vector.broadcast %cst_27 : f32 to vector<8x128xf32>
    %33 = arith.mulf %32, %31 : vector<8x128xf32>
    %34 = math.tanh %33 : vector<8x128xf32>
    %cst_28 = arith.constant 5.000000e-01 : f32
    %35 = vector.broadcast %cst_28 : f32 to vector<8x128xf32>
    %36 = arith.mulf %35, %34 : vector<8x128xf32>
    %cst_29 = arith.constant 5.000000e-01 : f32
    %37 = vector.broadcast %cst_29 : f32 to vector<8x128xf32>
    %38 = arith.addf %36, %37 : vector<8x128xf32>
    %39 = vector.extract_strided_slice %30 {offsets = [0, 128], sizes = [8, 128], strides = [1, 1]} : vector<8x512xf32> to vector<8x128xf32>
    %cst_30 = arith.constant 5.000000e-01 : f32
    %40 = vector.broadcast %cst_30 : f32 to vector<8x128xf32>
    %41 = arith.mulf %40, %39 : vector<8x128xf32>
    %42 = math.tanh %41 : vector<8x128xf32>
    %cst_31 = arith.constant 5.000000e-01 : f32
    %43 = vector.broadcast %cst_31 : f32 to vector<8x128xf32>
    %44 = arith.mulf %43, %42 : vector<8x128xf32>
    %cst_32 = arith.constant 5.000000e-01 : f32
    %45 = vector.broadcast %cst_32 : f32 to vector<8x128xf32>
    %46 = arith.addf %44, %45 : vector<8x128xf32>
    %47 = vector.extract_strided_slice %30 {offsets = [0, 256], sizes = [8, 128], strides = [1, 1]} : vector<8x512xf32> to vector<8x128xf32>
    %48 = math.tanh %47 : vector<8x128xf32>
    %49 = vector.extract_strided_slice %30 {offsets = [0, 384], sizes = [8, 128], strides = [1, 1]} : vector<8x512xf32> to vector<8x128xf32>
    %cst_33 = arith.constant 5.000000e-01 : f32
    %50 = vector.broadcast %cst_33 : f32 to vector<8x128xf32>
    %51 = arith.mulf %50, %49 : vector<8x128xf32>
    %52 = math.tanh %51 : vector<8x128xf32>
    %cst_34 = arith.constant 5.000000e-01 : f32
    %53 = vector.broadcast %cst_34 : f32 to vector<8x128xf32>
    %54 = arith.mulf %53, %52 : vector<8x128xf32>
    %cst_35 = arith.constant 5.000000e-01 : f32
    %55 = vector.broadcast %cst_35 : f32 to vector<8x128xf32>
    %56 = arith.addf %54, %55 : vector<8x128xf32>
    %57 = arith.mulf %46, %20 : vector<8x128xf32>
    %58 = arith.mulf %38, %48 : vector<8x128xf32>
    %59 = arith.addf %57, %58 : vector<8x128xf32>
    %60 = math.tanh %59 : vector<8x128xf32>
    %61 = arith.mulf %56, %60 : vector<8x128xf32>
    %62 = arith.truncf %61 : vector<8x128xf32> to vector<8x128xbf16>
    %cst_36 = arith.constant dense<0.000000e+00> : vector<8x512xf32>
    %63 = tpu.matmul %62, %8, %cst_36 {dimension_numbers = #tpu.dot_dimension_numbers<[1], [0], [0], [1], [0, 0, 1, 1], [], []>} : vector<8x128xbf16>, vector<128x512xbf16>, vector<8x512xf32> -> vector<8x512xf32>
    %64 = arith.truncf %18 : vector<8x128xf32> to vector<8x128xbf16>
    %cst_37 = arith.constant dense<0.000000e+00> : vector<8x512xf32>
    %65 = tpu.matmul %64, %10, %cst_37 {dimension_numbers = #tpu.dot_dimension_numbers<[1], [0], [0], [1], [0, 0, 1, 1], [], []>} : vector<8x128xbf16>, vector<128x512xbf16>, vector<8x512xf32> -> vector<8x512xf32>
    %66 = arith.addf %63, %65 : vector<8x512xf32>
    %67 = arith.addf %66, %14 : vector<8x512xf32>
    %68 = vector.extract_strided_slice %67 {offsets = [0, 0], sizes = [8, 128], strides = [1, 1]} : vector<8x512xf32> to vector<8x128xf32>
    %cst_38 = arith.constant 5.000000e-01 : f32
    %69 = vector.broadcast %cst_38 : f32 to vector<8x128xf32>
    %70 = arith.mulf %69, %68 : vector<8x128xf32>
    %71 = math.tanh %70 : vector<8x128xf32>
    %cst_39 = arith.constant 5.000000e-01 : f32
    %72 = vector.broadcast %cst_39 : f32 to vector<8x128xf32>
    %73 = arith.mulf %72, %71 : vector<8x128xf32>
    %cst_40 = arith.constant 5.000000e-01 : f32
    %74 = vector.broadcast %cst_40 : f32 to vector<8x128xf32>
    %75 = arith.addf %73, %74 : vector<8x128xf32>
    %76 = vector.extract_strided_slice %67 {offsets = [0, 128], sizes = [8, 128], strides = [1, 1]} : vector<8x512xf32> to vector<8x128xf32>
    %cst_41 = arith.constant 5.000000e-01 : f32
    %77 = vector.broadcast %cst_41 : f32 to vector<8x128xf32>
    %78 = arith.mulf %77, %76 : vector<8x128xf32>
    %79 = math.tanh %78 : vector<8x128xf32>
    %cst_42 = arith.constant 5.000000e-01 : f32
    %80 = vector.broadcast %cst_42 : f32 to vector<8x128xf32>
    %81 = arith.mulf %80, %79 : vector<8x128xf32>
    %cst_43 = arith.constant 5.000000e-01 : f32
    %82 = vector.broadcast %cst_43 : f32 to vector<8x128xf32>
    %83 = arith.addf %81, %82 : vector<8x128xf32>
    %84 = vector.extract_strided_slice %67 {offsets = [0, 256], sizes = [8, 128], strides = [1, 1]} : vector<8x512xf32> to vector<8x128xf32>
    %85 = math.tanh %84 : vector<8x128xf32>
    %86 = vector.extract_strided_slice %67 {offsets = [0, 384], sizes = [8, 128], strides = [1, 1]} : vector<8x512xf32> to vector<8x128xf32>
    %cst_44 = arith.constant 5.000000e-01 : f32
    %87 = vector.broadcast %cst_44 : f32 to vector<8x128xf32>
    %88 = arith.mulf %87, %86 : vector<8x128xf32>
    %89 = math.tanh %88 : vector<8x128xf32>
    %cst_45 = arith.constant 5.000000e-01 : f32
    %90 = vector.broadcast %cst_45 : f32 to vector<8x128xf32>
    %91 = arith.mulf %90, %89 : vector<8x128xf32>
    %cst_46 = arith.constant 5.000000e-01 : f32
    %92 = vector.broadcast %cst_46 : f32 to vector<8x128xf32>
    %93 = arith.addf %91, %92 : vector<8x128xf32>
    %94 = arith.mulf %83, %22 : vector<8x128xf32>
    %95 = arith.mulf %75, %85 : vector<8x128xf32>
    %96 = arith.addf %94, %95 : vector<8x128xf32>
    %97 = math.tanh %96 : vector<8x128xf32>
    %98 = arith.mulf %93, %97 : vector<8x128xf32>
    %c1_i32 = arith.constant 1 : i32
    %99 = arith.truncf %61 : vector<8x128xf32> to vector<8x128xbf16>
    %cst_47 = arith.constant dense<0.000000e+00> : vector<8x512xf32>
    %100 = tpu.matmul %99, %3, %cst_47 {dimension_numbers = #tpu.dot_dimension_numbers<[1], [0], [0], [1], [0, 0, 1, 1], [], []>} : vector<8x128xbf16>, vector<128x512xbf16>, vector<8x512xf32> -> vector<8x512xf32>
    %101 = arith.index_cast %c1_i32 : i32 to index
    %c0_48 = arith.constant 0 : index
    %c0_49 = arith.constant 0 : index
    %102 = vector.load %arg1[%101, %c0_48, %c0_49] : memref<8x8x512xbf16, #tpu.memory_space<vmem>>, vector<1x8x512xbf16>
    %103 = vector.shape_cast %102 : vector<1x8x512xbf16> to vector<8x512xbf16>
    %104 = arith.extf %103 : vector<8x512xbf16> to vector<8x512xf32>
    %105 = arith.addf %100, %104 : vector<8x512xf32>
    %106 = arith.addf %105, %6 : vector<8x512xf32>
    %107 = vector.extract_strided_slice %106 {offsets = [0, 0], sizes = [8, 128], strides = [1, 1]} : vector<8x512xf32> to vector<8x128xf32>
    %cst_50 = arith.constant 5.000000e-01 : f32
    %108 = vector.broadcast %cst_50 : f32 to vector<8x128xf32>
    %109 = arith.mulf %108, %107 : vector<8x128xf32>
    %110 = math.tanh %109 : vector<8x128xf32>
    %cst_51 = arith.constant 5.000000e-01 : f32
    %111 = vector.broadcast %cst_51 : f32 to vector<8x128xf32>
    %112 = arith.mulf %111, %110 : vector<8x128xf32>
    %cst_52 = arith.constant 5.000000e-01 : f32
    %113 = vector.broadcast %cst_52 : f32 to vector<8x128xf32>
    %114 = arith.addf %112, %113 : vector<8x128xf32>
    %115 = vector.extract_strided_slice %106 {offsets = [0, 128], sizes = [8, 128], strides = [1, 1]} : vector<8x512xf32> to vector<8x128xf32>
    %cst_53 = arith.constant 5.000000e-01 : f32
    %116 = vector.broadcast %cst_53 : f32 to vector<8x128xf32>
    %117 = arith.mulf %116, %115 : vector<8x128xf32>
    %118 = math.tanh %117 : vector<8x128xf32>
    %cst_54 = arith.constant 5.000000e-01 : f32
    %119 = vector.broadcast %cst_54 : f32 to vector<8x128xf32>
    %120 = arith.mulf %119, %118 : vector<8x128xf32>
    %cst_55 = arith.constant 5.000000e-01 : f32
    %121 = vector.broadcast %cst_55 : f32 to vector<8x128xf32>
    %122 = arith.addf %120, %121 : vector<8x128xf32>
    %123 = vector.extract_strided_slice %106 {offsets = [0, 256], sizes = [8, 128], strides = [1, 1]} : vector<8x512xf32> to vector<8x128xf32>
    %124 = math.tanh %123 : vector<8x128xf32>
    %125 = vector.extract_strided_slice %106 {offsets = [0, 384], sizes = [8, 128], strides = [1, 1]} : vector<8x512xf32> to vector<8x128xf32>
    %cst_56 = arith.constant 5.000000e-01 : f32
    %126 = vector.broadcast %cst_56 : f32 to vector<8x128xf32>
    %127 = arith.mulf %126, %125 : vector<8x128xf32>
    %128 = math.tanh %127 : vector<8x128xf32>
    %cst_57 = arith.constant 5.000000e-01 : f32
    %129 = vector.broadcast %cst_57 : f32 to vector<8x128xf32>
    %130 = arith.mulf %129, %128 : vector<8x128xf32>
    %cst_58 = arith.constant 5.000000e-01 : f32
    %131 = vector.broadcast %cst_58 : f32 to vector<8x128xf32>
    %132 = arith.addf %130, %131 : vector<8x128xf32>
    %133 = arith.mulf %122, %59 : vector<8x128xf32>
    %134 = arith.mulf %114, %124 : vector<8x128xf32>
    %135 = arith.addf %133, %134 : vector<8x128xf32>
    %136 = math.tanh %135 : vector<8x128xf32>
    %137 = arith.mulf %132, %136 : vector<8x128xf32>
    %138 = arith.truncf %137 : vector<8x128xf32> to vector<8x128xbf16>
    %cst_59 = arith.constant dense<0.000000e+00> : vector<8x512xf32>
    %139 = tpu.matmul %138, %8, %cst_59 {dimension_numbers = #tpu.dot_dimension_numbers<[1], [0], [0], [1], [0, 0, 1, 1], [], []>} : vector<8x128xbf16>, vector<128x512xbf16>, vector<8x512xf32> -> vector<8x512xf32>
    %140 = arith.truncf %98 : vector<8x128xf32> to vector<8x128xbf16>
    %cst_60 = arith.constant dense<0.000000e+00> : vector<8x512xf32>
    %141 = tpu.matmul %140, %10, %cst_60 {dimension_numbers = #tpu.dot_dimension_numbers<[1], [0], [0], [1], [0, 0, 1, 1], [], []>} : vector<8x128xbf16>, vector<128x512xbf16>, vector<8x512xf32> -> vector<8x512xf32>
    %142 = arith.addf %139, %141 : vector<8x512xf32>
    %143 = arith.addf %142, %14 : vector<8x512xf32>
    %144 = vector.extract_strided_slice %143 {offsets = [0, 0], sizes = [8, 128], strides = [1, 1]} : vector<8x512xf32> to vector<8x128xf32>
    %cst_61 = arith.constant 5.000000e-01 : f32
    %145 = vector.broadcast %cst_61 : f32 to vector<8x128xf32>
    %146 = arith.mulf %145, %144 : vector<8x128xf32>
    %147 = math.tanh %146 : vector<8x128xf32>
    %cst_62 = arith.constant 5.000000e-01 : f32
    %148 = vector.broadcast %cst_62 : f32 to vector<8x128xf32>
    %149 = arith.mulf %148, %147 : vector<8x128xf32>
    %cst_63 = arith.constant 5.000000e-01 : f32
    %150 = vector.broadcast %cst_63 : f32 to vector<8x128xf32>
    %151 = arith.addf %149, %150 : vector<8x128xf32>
    %152 = vector.extract_strided_slice %143 {offsets = [0, 128], sizes = [8, 128], strides = [1, 1]} : vector<8x512xf32> to vector<8x128xf32>
    %cst_64 = arith.constant 5.000000e-01 : f32
    %153 = vector.broadcast %cst_64 : f32 to vector<8x128xf32>
    %154 = arith.mulf %153, %152 : vector<8x128xf32>
    %155 = math.tanh %154 : vector<8x128xf32>
    %cst_65 = arith.constant 5.000000e-01 : f32
    %156 = vector.broadcast %cst_65 : f32 to vector<8x128xf32>
    %157 = arith.mulf %156, %155 : vector<8x128xf32>
    %cst_66 = arith.constant 5.000000e-01 : f32
    %158 = vector.broadcast %cst_66 : f32 to vector<8x128xf32>
    %159 = arith.addf %157, %158 : vector<8x128xf32>
    %160 = vector.extract_strided_slice %143 {offsets = [0, 256], sizes = [8, 128], strides = [1, 1]} : vector<8x512xf32> to vector<8x128xf32>
    %161 = math.tanh %160 : vector<8x128xf32>
    %162 = vector.extract_strided_slice %143 {offsets = [0, 384], sizes = [8, 128], strides = [1, 1]} : vector<8x512xf32> to vector<8x128xf32>
    %cst_67 = arith.constant 5.000000e-01 : f32
    %163 = vector.broadcast %cst_67 : f32 to vector<8x128xf32>
    %164 = arith.mulf %163, %162 : vector<8x128xf32>
    %165 = math.tanh %164 : vector<8x128xf32>
    %cst_68 = arith.constant 5.000000e-01 : f32
    %166 = vector.broadcast %cst_68 : f32 to vector<8x128xf32>
    %167 = arith.mulf %166, %165 : vector<8x128xf32>
    %cst_69 = arith.constant 5.000000e-01 : f32
    %168 = vector.broadcast %cst_69 : f32 to vector<8x128xf32>
    %169 = arith.addf %167, %168 : vector<8x128xf32>
    %170 = arith.mulf %159, %96 : vector<8x128xf32>
    %171 = arith.mulf %151, %161 : vector<8x128xf32>
    %172 = arith.addf %170, %171 : vector<8x128xf32>
    %173 = math.tanh %172 : vector<8x128xf32>
    %174 = arith.mulf %169, %173 : vector<8x128xf32>
    %c2_i32 = arith.constant 2 : i32
    %175 = arith.truncf %137 : vector<8x128xf32> to vector<8x128xbf16>
    %cst_70 = arith.constant dense<0.000000e+00> : vector<8x512xf32>
    %176 = tpu.matmul %175, %3, %cst_70 {dimension_numbers = #tpu.dot_dimension_numbers<[1], [0], [0], [1], [0, 0, 1, 1], [], []>} : vector<8x128xbf16>, vector<128x512xbf16>, vector<8x512xf32> -> vector<8x512xf32>
    %177 = arith.index_cast %c2_i32 : i32 to index
    %c0_71 = arith.constant 0 : index
    %c0_72 = arith.constant 0 : index
    %178 = vector.load %arg1[%177, %c0_71, %c0_72] : memref<8x8x512xbf16, #tpu.memory_space<vmem>>, vector<1x8x512xbf16>
    %179 = vector.shape_cast %178 : vector<1x8x512xbf16> to vector<8x512xbf16>
    %180 = arith.extf %179 : vector<8x512xbf16> to vector<8x512xf32>
    %181 = arith.addf %176, %180 : vector<8x512xf32>
    %182 = arith.addf %181, %6 : vector<8x512xf32>
    %183 = vector.extract_strided_slice %182 {offsets = [0, 0], sizes = [8, 128], strides = [1, 1]} : vector<8x512xf32> to vector<8x128xf32>
    %cst_73 = arith.constant 5.000000e-01 : f32
    %184 = vector.broadcast %cst_73 : f32 to vector<8x128xf32>
    %185 = arith.mulf %184, %183 : vector<8x128xf32>
    %186 = math.tanh %185 : vector<8x128xf32>
    %cst_74 = arith.constant 5.000000e-01 : f32
    %187 = vector.broadcast %cst_74 : f32 to vector<8x128xf32>
    %188 = arith.mulf %187, %186 : vector<8x128xf32>
    %cst_75 = arith.constant 5.000000e-01 : f32
    %189 = vector.broadcast %cst_75 : f32 to vector<8x128xf32>
    %190 = arith.addf %188, %189 : vector<8x128xf32>
    %191 = vector.extract_strided_slice %182 {offsets = [0, 128], sizes = [8, 128], strides = [1, 1]} : vector<8x512xf32> to vector<8x128xf32>
    %cst_76 = arith.constant 5.000000e-01 : f32
    %192 = vector.broadcast %cst_76 : f32 to vector<8x128xf32>
    %193 = arith.mulf %192, %191 : vector<8x128xf32>
    %194 = math.tanh %193 : vector<8x128xf32>
    %cst_77 = arith.constant 5.000000e-01 : f32
    %195 = vector.broadcast %cst_77 : f32 to vector<8x128xf32>
    %196 = arith.mulf %195, %194 : vector<8x128xf32>
    %cst_78 = arith.constant 5.000000e-01 : f32
    %197 = vector.broadcast %cst_78 : f32 to vector<8x128xf32>
    %198 = arith.addf %196, %197 : vector<8x128xf32>
    %199 = vector.extract_strided_slice %182 {offsets = [0, 256], sizes = [8, 128], strides = [1, 1]} : vector<8x512xf32> to vector<8x128xf32>
    %200 = math.tanh %199 : vector<8x128xf32>
    %201 = vector.extract_strided_slice %182 {offsets = [0, 384], sizes = [8, 128], strides = [1, 1]} : vector<8x512xf32> to vector<8x128xf32>
    %cst_79 = arith.constant 5.000000e-01 : f32
    %202 = vector.broadcast %cst_79 : f32 to vector<8x128xf32>
    %203 = arith.mulf %202, %201 : vector<8x128xf32>
    %204 = math.tanh %203 : vector<8x128xf32>
    %cst_80 = arith.constant 5.000000e-01 : f32
    %205 = vector.broadcast %cst_80 : f32 to vector<8x128xf32>
    %206 = arith.mulf %205, %204 : vector<8x128xf32>
    %cst_81 = arith.constant 5.000000e-01 : f32
    %207 = vector.broadcast %cst_81 : f32 to vector<8x128xf32>
    %208 = arith.addf %206, %207 : vector<8x128xf32>
    %209 = arith.mulf %198, %135 : vector<8x128xf32>
    %210 = arith.mulf %190, %200 : vector<8x128xf32>
    %211 = arith.addf %209, %210 : vector<8x128xf32>
    %212 = math.tanh %211 : vector<8x128xf32>
    %213 = arith.mulf %208, %212 : vector<8x128xf32>
    %214 = arith.truncf %213 : vector<8x128xf32> to vector<8x128xbf16>
    %cst_82 = arith.constant dense<0.000000e+00> : vector<8x512xf32>
    %215 = tpu.matmul %214, %8, %cst_82 {dimension_numbers = #tpu.dot_dimension_numbers<[1], [0], [0], [1], [0, 0, 1, 1], [], []>} : vector<8x128xbf16>, vector<128x512xbf16>, vector<8x512xf32> -> vector<8x512xf32>
    %216 = arith.truncf %174 : vector<8x128xf32> to vector<8x128xbf16>
    %cst_83 = arith.constant dense<0.000000e+00> : vector<8x512xf32>
    %217 = tpu.matmul %216, %10, %cst_83 {dimension_numbers = #tpu.dot_dimension_numbers<[1], [0], [0], [1], [0, 0, 1, 1], [], []>} : vector<8x128xbf16>, vector<128x512xbf16>, vector<8x512xf32> -> vector<8x512xf32>
    %218 = arith.addf %215, %217 : vector<8x512xf32>
    %219 = arith.addf %218, %14 : vector<8x512xf32>
    %220 = vector.extract_strided_slice %219 {offsets = [0, 0], sizes = [8, 128], strides = [1, 1]} : vector<8x512xf32> to vector<8x128xf32>
    %cst_84 = arith.constant 5.000000e-01 : f32
    %221 = vector.broadcast %cst_84 : f32 to vector<8x128xf32>
    %222 = arith.mulf %221, %220 : vector<8x128xf32>
    %223 = math.tanh %222 : vector<8x128xf32>
    %cst_85 = arith.constant 5.000000e-01 : f32
    %224 = vector.broadcast %cst_85 : f32 to vector<8x128xf32>
    %225 = arith.mulf %224, %223 : vector<8x128xf32>
    %cst_86 = arith.constant 5.000000e-01 : f32
    %226 = vector.broadcast %cst_86 : f32 to vector<8x128xf32>
    %227 = arith.addf %225, %226 : vector<8x128xf32>
    %228 = vector.extract_strided_slice %219 {offsets = [0, 128], sizes = [8, 128], strides = [1, 1]} : vector<8x512xf32> to vector<8x128xf32>
    %cst_87 = arith.constant 5.000000e-01 : f32
    %229 = vector.broadcast %cst_87 : f32 to vector<8x128xf32>
    %230 = arith.mulf %229, %228 : vector<8x128xf32>
    %231 = math.tanh %230 : vector<8x128xf32>
    %cst_88 = arith.constant 5.000000e-01 : f32
    %232 = vector.broadcast %cst_88 : f32 to vector<8x128xf32>
    %233 = arith.mulf %232, %231 : vector<8x128xf32>
    %cst_89 = arith.constant 5.000000e-01 : f32
    %234 = vector.broadcast %cst_89 : f32 to vector<8x128xf32>
    %235 = arith.addf %233, %234 : vector<8x128xf32>
    %236 = vector.extract_strided_slice %219 {offsets = [0, 256], sizes = [8, 128], strides = [1, 1]} : vector<8x512xf32> to vector<8x128xf32>
    %237 = math.tanh %236 : vector<8x128xf32>
    %238 = vector.extract_strided_slice %219 {offsets = [0, 384], sizes = [8, 128], strides = [1, 1]} : vector<8x512xf32> to vector<8x128xf32>
    %cst_90 = arith.constant 5.000000e-01 : f32
    %239 = vector.broadcast %cst_90 : f32 to vector<8x128xf32>
    %240 = arith.mulf %239, %238 : vector<8x128xf32>
    %241 = math.tanh %240 : vector<8x128xf32>
    %cst_91 = arith.constant 5.000000e-01 : f32
    %242 = vector.broadcast %cst_91 : f32 to vector<8x128xf32>
    %243 = arith.mulf %242, %241 : vector<8x128xf32>
    %cst_92 = arith.constant 5.000000e-01 : f32
    %244 = vector.broadcast %cst_92 : f32 to vector<8x128xf32>
    %245 = arith.addf %243, %244 : vector<8x128xf32>
    %246 = arith.mulf %235, %172 : vector<8x128xf32>
    %247 = arith.mulf %227, %237 : vector<8x128xf32>
    %248 = arith.addf %246, %247 : vector<8x128xf32>
    %249 = math.tanh %248 : vector<8x128xf32>
    %250 = arith.mulf %245, %249 : vector<8x128xf32>
    %c3_i32 = arith.constant 3 : i32
    %251 = arith.truncf %213 : vector<8x128xf32> to vector<8x128xbf16>
    %cst_93 = arith.constant dense<0.000000e+00> : vector<8x512xf32>
    %252 = tpu.matmul %251, %3, %cst_93 {dimension_numbers = #tpu.dot_dimension_numbers<[1], [0], [0], [1], [0, 0, 1, 1], [], []>} : vector<8x128xbf16>, vector<128x512xbf16>, vector<8x512xf32> -> vector<8x512xf32>
    %253 = arith.index_cast %c3_i32 : i32 to index
    %c0_94 = arith.constant 0 : index
    %c0_95 = arith.constant 0 : index
    %254 = vector.load %arg1[%253, %c0_94, %c0_95] : memref<8x8x512xbf16, #tpu.memory_space<vmem>>, vector<1x8x512xbf16>
    %255 = vector.shape_cast %254 : vector<1x8x512xbf16> to vector<8x512xbf16>
    %256 = arith.extf %255 : vector<8x512xbf16> to vector<8x512xf32>
    %257 = arith.addf %252, %256 : vector<8x512xf32>
    %258 = arith.addf %257, %6 : vector<8x512xf32>
    %259 = vector.extract_strided_slice %258 {offsets = [0, 0], sizes = [8, 128], strides = [1, 1]} : vector<8x512xf32> to vector<8x128xf32>
    %cst_96 = arith.constant 5.000000e-01 : f32
    %260 = vector.broadcast %cst_96 : f32 to vector<8x128xf32>
    %261 = arith.mulf %260, %259 : vector<8x128xf32>
    %262 = math.tanh %261 : vector<8x128xf32>
    %cst_97 = arith.constant 5.000000e-01 : f32
    %263 = vector.broadcast %cst_97 : f32 to vector<8x128xf32>
    %264 = arith.mulf %263, %262 : vector<8x128xf32>
    %cst_98 = arith.constant 5.000000e-01 : f32
    %265 = vector.broadcast %cst_98 : f32 to vector<8x128xf32>
    %266 = arith.addf %264, %265 : vector<8x128xf32>
    %267 = vector.extract_strided_slice %258 {offsets = [0, 128], sizes = [8, 128], strides = [1, 1]} : vector<8x512xf32> to vector<8x128xf32>
    %cst_99 = arith.constant 5.000000e-01 : f32
    %268 = vector.broadcast %cst_99 : f32 to vector<8x128xf32>
    %269 = arith.mulf %268, %267 : vector<8x128xf32>
    %270 = math.tanh %269 : vector<8x128xf32>
    %cst_100 = arith.constant 5.000000e-01 : f32
    %271 = vector.broadcast %cst_100 : f32 to vector<8x128xf32>
    %272 = arith.mulf %271, %270 : vector<8x128xf32>
    %cst_101 = arith.constant 5.000000e-01 : f32
    %273 = vector.broadcast %cst_101 : f32 to vector<8x128xf32>
    %274 = arith.addf %272, %273 : vector<8x128xf32>
    %275 = vector.extract_strided_slice %258 {offsets = [0, 256], sizes = [8, 128], strides = [1, 1]} : vector<8x512xf32> to vector<8x128xf32>
    %276 = math.tanh %275 : vector<8x128xf32>
    %277 = vector.extract_strided_slice %258 {offsets = [0, 384], sizes = [8, 128], strides = [1, 1]} : vector<8x512xf32> to vector<8x128xf32>
    %cst_102 = arith.constant 5.000000e-01 : f32
    %278 = vector.broadcast %cst_102 : f32 to vector<8x128xf32>
    %279 = arith.mulf %278, %277 : vector<8x128xf32>
    %280 = math.tanh %279 : vector<8x128xf32>
    %cst_103 = arith.constant 5.000000e-01 : f32
    %281 = vector.broadcast %cst_103 : f32 to vector<8x128xf32>
    %282 = arith.mulf %281, %280 : vector<8x128xf32>
    %cst_104 = arith.constant 5.000000e-01 : f32
    %283 = vector.broadcast %cst_104 : f32 to vector<8x128xf32>
    %284 = arith.addf %282, %283 : vector<8x128xf32>
    %285 = arith.mulf %274, %211 : vector<8x128xf32>
    %286 = arith.mulf %266, %276 : vector<8x128xf32>
    %287 = arith.addf %285, %286 : vector<8x128xf32>
    %288 = math.tanh %287 : vector<8x128xf32>
    %289 = arith.mulf %284, %288 : vector<8x128xf32>
    %290 = arith.truncf %289 : vector<8x128xf32> to vector<8x128xbf16>
    %cst_105 = arith.constant dense<0.000000e+00> : vector<8x512xf32>
    %291 = tpu.matmul %290, %8, %cst_105 {dimension_numbers = #tpu.dot_dimension_numbers<[1], [0], [0], [1], [0, 0, 1, 1], [], []>} : vector<8x128xbf16>, vector<128x512xbf16>, vector<8x512xf32> -> vector<8x512xf32>
    %292 = arith.truncf %250 : vector<8x128xf32> to vector<8x128xbf16>
    %cst_106 = arith.constant dense<0.000000e+00> : vector<8x512xf32>
    %293 = tpu.matmul %292, %10, %cst_106 {dimension_numbers = #tpu.dot_dimension_numbers<[1], [0], [0], [1], [0, 0, 1, 1], [], []>} : vector<8x128xbf16>, vector<128x512xbf16>, vector<8x512xf32> -> vector<8x512xf32>
    %294 = arith.addf %291, %293 : vector<8x512xf32>
    %295 = arith.addf %294, %14 : vector<8x512xf32>
    %296 = vector.extract_strided_slice %295 {offsets = [0, 0], sizes = [8, 128], strides = [1, 1]} : vector<8x512xf32> to vector<8x128xf32>
    %cst_107 = arith.constant 5.000000e-01 : f32
    %297 = vector.broadcast %cst_107 : f32 to vector<8x128xf32>
    %298 = arith.mulf %297, %296 : vector<8x128xf32>
    %299 = math.tanh %298 : vector<8x128xf32>
    %cst_108 = arith.constant 5.000000e-01 : f32
    %300 = vector.broadcast %cst_108 : f32 to vector<8x128xf32>
    %301 = arith.mulf %300, %299 : vector<8x128xf32>
    %cst_109 = arith.constant 5.000000e-01 : f32
    %302 = vector.broadcast %cst_109 : f32 to vector<8x128xf32>
    %303 = arith.addf %301, %302 : vector<8x128xf32>
    %304 = vector.extract_strided_slice %295 {offsets = [0, 128], sizes = [8, 128], strides = [1, 1]} : vector<8x512xf32> to vector<8x128xf32>
    %cst_110 = arith.constant 5.000000e-01 : f32
    %305 = vector.broadcast %cst_110 : f32 to vector<8x128xf32>
    %306 = arith.mulf %305, %304 : vector<8x128xf32>
    %307 = math.tanh %306 : vector<8x128xf32>
    %cst_111 = arith.constant 5.000000e-01 : f32
    %308 = vector.broadcast %cst_111 : f32 to vector<8x128xf32>
    %309 = arith.mulf %308, %307 : vector<8x128xf32>
    %cst_112 = arith.constant 5.000000e-01 : f32
    %310 = vector.broadcast %cst_112 : f32 to vector<8x128xf32>
    %311 = arith.addf %309, %310 : vector<8x128xf32>
    %312 = vector.extract_strided_slice %295 {offsets = [0, 256], sizes = [8, 128], strides = [1, 1]} : vector<8x512xf32> to vector<8x128xf32>
    %313 = math.tanh %312 : vector<8x128xf32>
    %314 = vector.extract_strided_slice %295 {offsets = [0, 384], sizes = [8, 128], strides = [1, 1]} : vector<8x512xf32> to vector<8x128xf32>
    %cst_113 = arith.constant 5.000000e-01 : f32
    %315 = vector.broadcast %cst_113 : f32 to vector<8x128xf32>
    %316 = arith.mulf %315, %314 : vector<8x128xf32>
    %317 = math.tanh %316 : vector<8x128xf32>
    %cst_114 = arith.constant 5.000000e-01 : f32
    %318 = vector.broadcast %cst_114 : f32 to vector<8x128xf32>
    %319 = arith.mulf %318, %317 : vector<8x128xf32>
    %cst_115 = arith.constant 5.000000e-01 : f32
    %320 = vector.broadcast %cst_115 : f32 to vector<8x128xf32>
    %321 = arith.addf %319, %320 : vector<8x128xf32>
    %322 = arith.mulf %311, %248 : vector<8x128xf32>
    %323 = arith.mulf %303, %313 : vector<8x128xf32>
    %324 = arith.addf %322, %323 : vector<8x128xf32>
    %325 = math.tanh %324 : vector<8x128xf32>
    %326 = arith.mulf %321, %325 : vector<8x128xf32>
    %c4_i32 = arith.constant 4 : i32
    %327 = arith.truncf %289 : vector<8x128xf32> to vector<8x128xbf16>
    %cst_116 = arith.constant dense<0.000000e+00> : vector<8x512xf32>
    %328 = tpu.matmul %327, %3, %cst_116 {dimension_numbers = #tpu.dot_dimension_numbers<[1], [0], [0], [1], [0, 0, 1, 1], [], []>} : vector<8x128xbf16>, vector<128x512xbf16>, vector<8x512xf32> -> vector<8x512xf32>
    %329 = arith.index_cast %c4_i32 : i32 to index
    %c0_117 = arith.constant 0 : index
    %c0_118 = arith.constant 0 : index
    %330 = vector.load %arg1[%329, %c0_117, %c0_118] : memref<8x8x512xbf16, #tpu.memory_space<vmem>>, vector<1x8x512xbf16>
    %331 = vector.shape_cast %330 : vector<1x8x512xbf16> to vector<8x512xbf16>
    %332 = arith.extf %331 : vector<8x512xbf16> to vector<8x512xf32>
    %333 = arith.addf %328, %332 : vector<8x512xf32>
    %334 = arith.addf %333, %6 : vector<8x512xf32>
    %335 = vector.extract_strided_slice %334 {offsets = [0, 0], sizes = [8, 128], strides = [1, 1]} : vector<8x512xf32> to vector<8x128xf32>
    %cst_119 = arith.constant 5.000000e-01 : f32
    %336 = vector.broadcast %cst_119 : f32 to vector<8x128xf32>
    %337 = arith.mulf %336, %335 : vector<8x128xf32>
    %338 = math.tanh %337 : vector<8x128xf32>
    %cst_120 = arith.constant 5.000000e-01 : f32
    %339 = vector.broadcast %cst_120 : f32 to vector<8x128xf32>
    %340 = arith.mulf %339, %338 : vector<8x128xf32>
    %cst_121 = arith.constant 5.000000e-01 : f32
    %341 = vector.broadcast %cst_121 : f32 to vector<8x128xf32>
    %342 = arith.addf %340, %341 : vector<8x128xf32>
    %343 = vector.extract_strided_slice %334 {offsets = [0, 128], sizes = [8, 128], strides = [1, 1]} : vector<8x512xf32> to vector<8x128xf32>
    %cst_122 = arith.constant 5.000000e-01 : f32
    %344 = vector.broadcast %cst_122 : f32 to vector<8x128xf32>
    %345 = arith.mulf %344, %343 : vector<8x128xf32>
    %346 = math.tanh %345 : vector<8x128xf32>
    %cst_123 = arith.constant 5.000000e-01 : f32
    %347 = vector.broadcast %cst_123 : f32 to vector<8x128xf32>
    %348 = arith.mulf %347, %346 : vector<8x128xf32>
    %cst_124 = arith.constant 5.000000e-01 : f32
    %349 = vector.broadcast %cst_124 : f32 to vector<8x128xf32>
    %350 = arith.addf %348, %349 : vector<8x128xf32>
    %351 = vector.extract_strided_slice %334 {offsets = [0, 256], sizes = [8, 128], strides = [1, 1]} : vector<8x512xf32> to vector<8x128xf32>
    %352 = math.tanh %351 : vector<8x128xf32>
    %353 = vector.extract_strided_slice %334 {offsets = [0, 384], sizes = [8, 128], strides = [1, 1]} : vector<8x512xf32> to vector<8x128xf32>
    %cst_125 = arith.constant 5.000000e-01 : f32
    %354 = vector.broadcast %cst_125 : f32 to vector<8x128xf32>
    %355 = arith.mulf %354, %353 : vector<8x128xf32>
    %356 = math.tanh %355 : vector<8x128xf32>
    %cst_126 = arith.constant 5.000000e-01 : f32
    %357 = vector.broadcast %cst_126 : f32 to vector<8x128xf32>
    %358 = arith.mulf %357, %356 : vector<8x128xf32>
    %cst_127 = arith.constant 5.000000e-01 : f32
    %359 = vector.broadcast %cst_127 : f32 to vector<8x128xf32>
    %360 = arith.addf %358, %359 : vector<8x128xf32>
    %361 = arith.mulf %350, %287 : vector<8x128xf32>
    %362 = arith.mulf %342, %352 : vector<8x128xf32>
    %363 = arith.addf %361, %362 : vector<8x128xf32>
    %364 = math.tanh %363 : vector<8x128xf32>
    %365 = arith.mulf %360, %364 : vector<8x128xf32>
    %366 = arith.truncf %365 : vector<8x128xf32> to vector<8x128xbf16>
    %cst_128 = arith.constant dense<0.000000e+00> : vector<8x512xf32>
    %367 = tpu.matmul %366, %8, %cst_128 {dimension_numbers = #tpu.dot_dimension_numbers<[1], [0], [0], [1], [0, 0, 1, 1], [], []>} : vector<8x128xbf16>, vector<128x512xbf16>, vector<8x512xf32> -> vector<8x512xf32>
    %368 = arith.truncf %326 : vector<8x128xf32> to vector<8x128xbf16>
    %cst_129 = arith.constant dense<0.000000e+00> : vector<8x512xf32>
    %369 = tpu.matmul %368, %10, %cst_129 {dimension_numbers = #tpu.dot_dimension_numbers<[1], [0], [0], [1], [0, 0, 1, 1], [], []>} : vector<8x128xbf16>, vector<128x512xbf16>, vector<8x512xf32> -> vector<8x512xf32>
    %370 = arith.addf %367, %369 : vector<8x512xf32>
    %371 = arith.addf %370, %14 : vector<8x512xf32>
    %372 = vector.extract_strided_slice %371 {offsets = [0, 0], sizes = [8, 128], strides = [1, 1]} : vector<8x512xf32> to vector<8x128xf32>
    %cst_130 = arith.constant 5.000000e-01 : f32
    %373 = vector.broadcast %cst_130 : f32 to vector<8x128xf32>
    %374 = arith.mulf %373, %372 : vector<8x128xf32>
    %375 = math.tanh %374 : vector<8x128xf32>
    %cst_131 = arith.constant 5.000000e-01 : f32
    %376 = vector.broadcast %cst_131 : f32 to vector<8x128xf32>
    %377 = arith.mulf %376, %375 : vector<8x128xf32>
    %cst_132 = arith.constant 5.000000e-01 : f32
    %378 = vector.broadcast %cst_132 : f32 to vector<8x128xf32>
    %379 = arith.addf %377, %378 : vector<8x128xf32>
    %380 = vector.extract_strided_slice %371 {offsets = [0, 128], sizes = [8, 128], strides = [1, 1]} : vector<8x512xf32> to vector<8x128xf32>
    %cst_133 = arith.constant 5.000000e-01 : f32
    %381 = vector.broadcast %cst_133 : f32 to vector<8x128xf32>
    %382 = arith.mulf %381, %380 : vector<8x128xf32>
    %383 = math.tanh %382 : vector<8x128xf32>
    %cst_134 = arith.constant 5.000000e-01 : f32
    %384 = vector.broadcast %cst_134 : f32 to vector<8x128xf32>
    %385 = arith.mulf %384, %383 : vector<8x128xf32>
    %cst_135 = arith.constant 5.000000e-01 : f32
    %386 = vector.broadcast %cst_135 : f32 to vector<8x128xf32>
    %387 = arith.addf %385, %386 : vector<8x128xf32>
    %388 = vector.extract_strided_slice %371 {offsets = [0, 256], sizes = [8, 128], strides = [1, 1]} : vector<8x512xf32> to vector<8x128xf32>
    %389 = math.tanh %388 : vector<8x128xf32>
    %390 = vector.extract_strided_slice %371 {offsets = [0, 384], sizes = [8, 128], strides = [1, 1]} : vector<8x512xf32> to vector<8x128xf32>
    %cst_136 = arith.constant 5.000000e-01 : f32
    %391 = vector.broadcast %cst_136 : f32 to vector<8x128xf32>
    %392 = arith.mulf %391, %390 : vector<8x128xf32>
    %393 = math.tanh %392 : vector<8x128xf32>
    %cst_137 = arith.constant 5.000000e-01 : f32
    %394 = vector.broadcast %cst_137 : f32 to vector<8x128xf32>
    %395 = arith.mulf %394, %393 : vector<8x128xf32>
    %cst_138 = arith.constant 5.000000e-01 : f32
    %396 = vector.broadcast %cst_138 : f32 to vector<8x128xf32>
    %397 = arith.addf %395, %396 : vector<8x128xf32>
    %398 = arith.mulf %387, %324 : vector<8x128xf32>
    %399 = arith.mulf %379, %389 : vector<8x128xf32>
    %400 = arith.addf %398, %399 : vector<8x128xf32>
    %401 = math.tanh %400 : vector<8x128xf32>
    %402 = arith.mulf %397, %401 : vector<8x128xf32>
    %c5_i32 = arith.constant 5 : i32
    %403 = arith.truncf %365 : vector<8x128xf32> to vector<8x128xbf16>
    %cst_139 = arith.constant dense<0.000000e+00> : vector<8x512xf32>
    %404 = tpu.matmul %403, %3, %cst_139 {dimension_numbers = #tpu.dot_dimension_numbers<[1], [0], [0], [1], [0, 0, 1, 1], [], []>} : vector<8x128xbf16>, vector<128x512xbf16>, vector<8x512xf32> -> vector<8x512xf32>
    %405 = arith.index_cast %c5_i32 : i32 to index
    %c0_140 = arith.constant 0 : index
    %c0_141 = arith.constant 0 : index
    %406 = vector.load %arg1[%405, %c0_140, %c0_141] : memref<8x8x512xbf16, #tpu.memory_space<vmem>>, vector<1x8x512xbf16>
    %407 = vector.shape_cast %406 : vector<1x8x512xbf16> to vector<8x512xbf16>
    %408 = arith.extf %407 : vector<8x512xbf16> to vector<8x512xf32>
    %409 = arith.addf %404, %408 : vector<8x512xf32>
    %410 = arith.addf %409, %6 : vector<8x512xf32>
    %411 = vector.extract_strided_slice %410 {offsets = [0, 0], sizes = [8, 128], strides = [1, 1]} : vector<8x512xf32> to vector<8x128xf32>
    %cst_142 = arith.constant 5.000000e-01 : f32
    %412 = vector.broadcast %cst_142 : f32 to vector<8x128xf32>
    %413 = arith.mulf %412, %411 : vector<8x128xf32>
    %414 = math.tanh %413 : vector<8x128xf32>
    %cst_143 = arith.constant 5.000000e-01 : f32
    %415 = vector.broadcast %cst_143 : f32 to vector<8x128xf32>
    %416 = arith.mulf %415, %414 : vector<8x128xf32>
    %cst_144 = arith.constant 5.000000e-01 : f32
    %417 = vector.broadcast %cst_144 : f32 to vector<8x128xf32>
    %418 = arith.addf %416, %417 : vector<8x128xf32>
    %419 = vector.extract_strided_slice %410 {offsets = [0, 128], sizes = [8, 128], strides = [1, 1]} : vector<8x512xf32> to vector<8x128xf32>
    %cst_145 = arith.constant 5.000000e-01 : f32
    %420 = vector.broadcast %cst_145 : f32 to vector<8x128xf32>
    %421 = arith.mulf %420, %419 : vector<8x128xf32>
    %422 = math.tanh %421 : vector<8x128xf32>
    %cst_146 = arith.constant 5.000000e-01 : f32
    %423 = vector.broadcast %cst_146 : f32 to vector<8x128xf32>
    %424 = arith.mulf %423, %422 : vector<8x128xf32>
    %cst_147 = arith.constant 5.000000e-01 : f32
    %425 = vector.broadcast %cst_147 : f32 to vector<8x128xf32>
    %426 = arith.addf %424, %425 : vector<8x128xf32>
    %427 = vector.extract_strided_slice %410 {offsets = [0, 256], sizes = [8, 128], strides = [1, 1]} : vector<8x512xf32> to vector<8x128xf32>
    %428 = math.tanh %427 : vector<8x128xf32>
    %429 = vector.extract_strided_slice %410 {offsets = [0, 384], sizes = [8, 128], strides = [1, 1]} : vector<8x512xf32> to vector<8x128xf32>
    %cst_148 = arith.constant 5.000000e-01 : f32
    %430 = vector.broadcast %cst_148 : f32 to vector<8x128xf32>
    %431 = arith.mulf %430, %429 : vector<8x128xf32>
    %432 = math.tanh %431 : vector<8x128xf32>
    %cst_149 = arith.constant 5.000000e-01 : f32
    %433 = vector.broadcast %cst_149 : f32 to vector<8x128xf32>
    %434 = arith.mulf %433, %432 : vector<8x128xf32>
    %cst_150 = arith.constant 5.000000e-01 : f32
    %435 = vector.broadcast %cst_150 : f32 to vector<8x128xf32>
    %436 = arith.addf %434, %435 : vector<8x128xf32>
    %437 = arith.mulf %426, %363 : vector<8x128xf32>
    %438 = arith.mulf %418, %428 : vector<8x128xf32>
    %439 = arith.addf %437, %438 : vector<8x128xf32>
    %440 = math.tanh %439 : vector<8x128xf32>
    %441 = arith.mulf %436, %440 : vector<8x128xf32>
    %442 = arith.truncf %441 : vector<8x128xf32> to vector<8x128xbf16>
    %cst_151 = arith.constant dense<0.000000e+00> : vector<8x512xf32>
    %443 = tpu.matmul %442, %8, %cst_151 {dimension_numbers = #tpu.dot_dimension_numbers<[1], [0], [0], [1], [0, 0, 1, 1], [], []>} : vector<8x128xbf16>, vector<128x512xbf16>, vector<8x512xf32> -> vector<8x512xf32>
    %444 = arith.truncf %402 : vector<8x128xf32> to vector<8x128xbf16>
    %cst_152 = arith.constant dense<0.000000e+00> : vector<8x512xf32>
    %445 = tpu.matmul %444, %10, %cst_152 {dimension_numbers = #tpu.dot_dimension_numbers<[1], [0], [0], [1], [0, 0, 1, 1], [], []>} : vector<8x128xbf16>, vector<128x512xbf16>, vector<8x512xf32> -> vector<8x512xf32>
    %446 = arith.addf %443, %445 : vector<8x512xf32>
    %447 = arith.addf %446, %14 : vector<8x512xf32>
    %448 = vector.extract_strided_slice %447 {offsets = [0, 0], sizes = [8, 128], strides = [1, 1]} : vector<8x512xf32> to vector<8x128xf32>
    %cst_153 = arith.constant 5.000000e-01 : f32
    %449 = vector.broadcast %cst_153 : f32 to vector<8x128xf32>
    %450 = arith.mulf %449, %448 : vector<8x128xf32>
    %451 = math.tanh %450 : vector<8x128xf32>
    %cst_154 = arith.constant 5.000000e-01 : f32
    %452 = vector.broadcast %cst_154 : f32 to vector<8x128xf32>
    %453 = arith.mulf %452, %451 : vector<8x128xf32>
    %cst_155 = arith.constant 5.000000e-01 : f32
    %454 = vector.broadcast %cst_155 : f32 to vector<8x128xf32>
    %455 = arith.addf %453, %454 : vector<8x128xf32>
    %456 = vector.extract_strided_slice %447 {offsets = [0, 128], sizes = [8, 128], strides = [1, 1]} : vector<8x512xf32> to vector<8x128xf32>
    %cst_156 = arith.constant 5.000000e-01 : f32
    %457 = vector.broadcast %cst_156 : f32 to vector<8x128xf32>
    %458 = arith.mulf %457, %456 : vector<8x128xf32>
    %459 = math.tanh %458 : vector<8x128xf32>
    %cst_157 = arith.constant 5.000000e-01 : f32
    %460 = vector.broadcast %cst_157 : f32 to vector<8x128xf32>
    %461 = arith.mulf %460, %459 : vector<8x128xf32>
    %cst_158 = arith.constant 5.000000e-01 : f32
    %462 = vector.broadcast %cst_158 : f32 to vector<8x128xf32>
    %463 = arith.addf %461, %462 : vector<8x128xf32>
    %464 = vector.extract_strided_slice %447 {offsets = [0, 256], sizes = [8, 128], strides = [1, 1]} : vector<8x512xf32> to vector<8x128xf32>
    %465 = math.tanh %464 : vector<8x128xf32>
    %466 = vector.extract_strided_slice %447 {offsets = [0, 384], sizes = [8, 128], strides = [1, 1]} : vector<8x512xf32> to vector<8x128xf32>
    %cst_159 = arith.constant 5.000000e-01 : f32
    %467 = vector.broadcast %cst_159 : f32 to vector<8x128xf32>
    %468 = arith.mulf %467, %466 : vector<8x128xf32>
    %469 = math.tanh %468 : vector<8x128xf32>
    %cst_160 = arith.constant 5.000000e-01 : f32
    %470 = vector.broadcast %cst_160 : f32 to vector<8x128xf32>
    %471 = arith.mulf %470, %469 : vector<8x128xf32>
    %cst_161 = arith.constant 5.000000e-01 : f32
    %472 = vector.broadcast %cst_161 : f32 to vector<8x128xf32>
    %473 = arith.addf %471, %472 : vector<8x128xf32>
    %474 = arith.mulf %463, %400 : vector<8x128xf32>
    %475 = arith.mulf %455, %465 : vector<8x128xf32>
    %476 = arith.addf %474, %475 : vector<8x128xf32>
    %477 = math.tanh %476 : vector<8x128xf32>
    %478 = arith.mulf %473, %477 : vector<8x128xf32>
    %c6_i32 = arith.constant 6 : i32
    %479 = arith.truncf %441 : vector<8x128xf32> to vector<8x128xbf16>
    %cst_162 = arith.constant dense<0.000000e+00> : vector<8x512xf32>
    %480 = tpu.matmul %479, %3, %cst_162 {dimension_numbers = #tpu.dot_dimension_numbers<[1], [0], [0], [1], [0, 0, 1, 1], [], []>} : vector<8x128xbf16>, vector<128x512xbf16>, vector<8x512xf32> -> vector<8x512xf32>
    %481 = arith.index_cast %c6_i32 : i32 to index
    %c0_163 = arith.constant 0 : index
    %c0_164 = arith.constant 0 : index
    %482 = vector.load %arg1[%481, %c0_163, %c0_164] : memref<8x8x512xbf16, #tpu.memory_space<vmem>>, vector<1x8x512xbf16>
    %483 = vector.shape_cast %482 : vector<1x8x512xbf16> to vector<8x512xbf16>
    %484 = arith.extf %483 : vector<8x512xbf16> to vector<8x512xf32>
    %485 = arith.addf %480, %484 : vector<8x512xf32>
    %486 = arith.addf %485, %6 : vector<8x512xf32>
    %487 = vector.extract_strided_slice %486 {offsets = [0, 0], sizes = [8, 128], strides = [1, 1]} : vector<8x512xf32> to vector<8x128xf32>
    %cst_165 = arith.constant 5.000000e-01 : f32
    %488 = vector.broadcast %cst_165 : f32 to vector<8x128xf32>
    %489 = arith.mulf %488, %487 : vector<8x128xf32>
    %490 = math.tanh %489 : vector<8x128xf32>
    %cst_166 = arith.constant 5.000000e-01 : f32
    %491 = vector.broadcast %cst_166 : f32 to vector<8x128xf32>
    %492 = arith.mulf %491, %490 : vector<8x128xf32>
    %cst_167 = arith.constant 5.000000e-01 : f32
    %493 = vector.broadcast %cst_167 : f32 to vector<8x128xf32>
    %494 = arith.addf %492, %493 : vector<8x128xf32>
    %495 = vector.extract_strided_slice %486 {offsets = [0, 128], sizes = [8, 128], strides = [1, 1]} : vector<8x512xf32> to vector<8x128xf32>
    %cst_168 = arith.constant 5.000000e-01 : f32
    %496 = vector.broadcast %cst_168 : f32 to vector<8x128xf32>
    %497 = arith.mulf %496, %495 : vector<8x128xf32>
    %498 = math.tanh %497 : vector<8x128xf32>
    %cst_169 = arith.constant 5.000000e-01 : f32
    %499 = vector.broadcast %cst_169 : f32 to vector<8x128xf32>
    %500 = arith.mulf %499, %498 : vector<8x128xf32>
    %cst_170 = arith.constant 5.000000e-01 : f32
    %501 = vector.broadcast %cst_170 : f32 to vector<8x128xf32>
    %502 = arith.addf %500, %501 : vector<8x128xf32>
    %503 = vector.extract_strided_slice %486 {offsets = [0, 256], sizes = [8, 128], strides = [1, 1]} : vector<8x512xf32> to vector<8x128xf32>
    %504 = math.tanh %503 : vector<8x128xf32>
    %505 = vector.extract_strided_slice %486 {offsets = [0, 384], sizes = [8, 128], strides = [1, 1]} : vector<8x512xf32> to vector<8x128xf32>
    %cst_171 = arith.constant 5.000000e-01 : f32
    %506 = vector.broadcast %cst_171 : f32 to vector<8x128xf32>
    %507 = arith.mulf %506, %505 : vector<8x128xf32>
    %508 = math.tanh %507 : vector<8x128xf32>
    %cst_172 = arith.constant 5.000000e-01 : f32
    %509 = vector.broadcast %cst_172 : f32 to vector<8x128xf32>
    %510 = arith.mulf %509, %508 : vector<8x128xf32>
    %cst_173 = arith.constant 5.000000e-01 : f32
    %511 = vector.broadcast %cst_173 : f32 to vector<8x128xf32>
    %512 = arith.addf %510, %511 : vector<8x128xf32>
    %513 = arith.mulf %502, %439 : vector<8x128xf32>
    %514 = arith.mulf %494, %504 : vector<8x128xf32>
    %515 = arith.addf %513, %514 : vector<8x128xf32>
    %516 = math.tanh %515 : vector<8x128xf32>
    %517 = arith.mulf %512, %516 : vector<8x128xf32>
    %518 = arith.truncf %517 : vector<8x128xf32> to vector<8x128xbf16>
    %cst_174 = arith.constant dense<0.000000e+00> : vector<8x512xf32>
    %519 = tpu.matmul %518, %8, %cst_174 {dimension_numbers = #tpu.dot_dimension_numbers<[1], [0], [0], [1], [0, 0, 1, 1], [], []>} : vector<8x128xbf16>, vector<128x512xbf16>, vector<8x512xf32> -> vector<8x512xf32>
    %520 = arith.truncf %478 : vector<8x128xf32> to vector<8x128xbf16>
    %cst_175 = arith.constant dense<0.000000e+00> : vector<8x512xf32>
    %521 = tpu.matmul %520, %10, %cst_175 {dimension_numbers = #tpu.dot_dimension_numbers<[1], [0], [0], [1], [0, 0, 1, 1], [], []>} : vector<8x128xbf16>, vector<128x512xbf16>, vector<8x512xf32> -> vector<8x512xf32>
    %522 = arith.addf %519, %521 : vector<8x512xf32>
    %523 = arith.addf %522, %14 : vector<8x512xf32>
    %524 = vector.extract_strided_slice %523 {offsets = [0, 0], sizes = [8, 128], strides = [1, 1]} : vector<8x512xf32> to vector<8x128xf32>
    %cst_176 = arith.constant 5.000000e-01 : f32
    %525 = vector.broadcast %cst_176 : f32 to vector<8x128xf32>
    %526 = arith.mulf %525, %524 : vector<8x128xf32>
    %527 = math.tanh %526 : vector<8x128xf32>
    %cst_177 = arith.constant 5.000000e-01 : f32
    %528 = vector.broadcast %cst_177 : f32 to vector<8x128xf32>
    %529 = arith.mulf %528, %527 : vector<8x128xf32>
    %cst_178 = arith.constant 5.000000e-01 : f32
    %530 = vector.broadcast %cst_178 : f32 to vector<8x128xf32>
    %531 = arith.addf %529, %530 : vector<8x128xf32>
    %532 = vector.extract_strided_slice %523 {offsets = [0, 128], sizes = [8, 128], strides = [1, 1]} : vector<8x512xf32> to vector<8x128xf32>
    %cst_179 = arith.constant 5.000000e-01 : f32
    %533 = vector.broadcast %cst_179 : f32 to vector<8x128xf32>
    %534 = arith.mulf %533, %532 : vector<8x128xf32>
    %535 = math.tanh %534 : vector<8x128xf32>
    %cst_180 = arith.constant 5.000000e-01 : f32
    %536 = vector.broadcast %cst_180 : f32 to vector<8x128xf32>
    %537 = arith.mulf %536, %535 : vector<8x128xf32>
    %cst_181 = arith.constant 5.000000e-01 : f32
    %538 = vector.broadcast %cst_181 : f32 to vector<8x128xf32>
    %539 = arith.addf %537, %538 : vector<8x128xf32>
    %540 = vector.extract_strided_slice %523 {offsets = [0, 256], sizes = [8, 128], strides = [1, 1]} : vector<8x512xf32> to vector<8x128xf32>
    %541 = math.tanh %540 : vector<8x128xf32>
    %542 = vector.extract_strided_slice %523 {offsets = [0, 384], sizes = [8, 128], strides = [1, 1]} : vector<8x512xf32> to vector<8x128xf32>
    %cst_182 = arith.constant 5.000000e-01 : f32
    %543 = vector.broadcast %cst_182 : f32 to vector<8x128xf32>
    %544 = arith.mulf %543, %542 : vector<8x128xf32>
    %545 = math.tanh %544 : vector<8x128xf32>
    %cst_183 = arith.constant 5.000000e-01 : f32
    %546 = vector.broadcast %cst_183 : f32 to vector<8x128xf32>
    %547 = arith.mulf %546, %545 : vector<8x128xf32>
    %cst_184 = arith.constant 5.000000e-01 : f32
    %548 = vector.broadcast %cst_184 : f32 to vector<8x128xf32>
    %549 = arith.addf %547, %548 : vector<8x128xf32>
    %550 = arith.mulf %539, %476 : vector<8x128xf32>
    %551 = arith.mulf %531, %541 : vector<8x128xf32>
    %552 = arith.addf %550, %551 : vector<8x128xf32>
    %553 = math.tanh %552 : vector<8x128xf32>
    %554 = arith.mulf %549, %553 : vector<8x128xf32>
    %c7_i32 = arith.constant 7 : i32
    %555 = arith.truncf %517 : vector<8x128xf32> to vector<8x128xbf16>
    %cst_185 = arith.constant dense<0.000000e+00> : vector<8x512xf32>
    %556 = tpu.matmul %555, %3, %cst_185 {dimension_numbers = #tpu.dot_dimension_numbers<[1], [0], [0], [1], [0, 0, 1, 1], [], []>} : vector<8x128xbf16>, vector<128x512xbf16>, vector<8x512xf32> -> vector<8x512xf32>
    %557 = arith.index_cast %c7_i32 : i32 to index
    %c0_186 = arith.constant 0 : index
    %c0_187 = arith.constant 0 : index
    %558 = vector.load %arg1[%557, %c0_186, %c0_187] : memref<8x8x512xbf16, #tpu.memory_space<vmem>>, vector<1x8x512xbf16>
    %559 = vector.shape_cast %558 : vector<1x8x512xbf16> to vector<8x512xbf16>
    %560 = arith.extf %559 : vector<8x512xbf16> to vector<8x512xf32>
    %561 = arith.addf %556, %560 : vector<8x512xf32>
    %562 = arith.addf %561, %6 : vector<8x512xf32>
    %563 = vector.extract_strided_slice %562 {offsets = [0, 0], sizes = [8, 128], strides = [1, 1]} : vector<8x512xf32> to vector<8x128xf32>
    %cst_188 = arith.constant 5.000000e-01 : f32
    %564 = vector.broadcast %cst_188 : f32 to vector<8x128xf32>
    %565 = arith.mulf %564, %563 : vector<8x128xf32>
    %566 = math.tanh %565 : vector<8x128xf32>
    %cst_189 = arith.constant 5.000000e-01 : f32
    %567 = vector.broadcast %cst_189 : f32 to vector<8x128xf32>
    %568 = arith.mulf %567, %566 : vector<8x128xf32>
    %cst_190 = arith.constant 5.000000e-01 : f32
    %569 = vector.broadcast %cst_190 : f32 to vector<8x128xf32>
    %570 = arith.addf %568, %569 : vector<8x128xf32>
    %571 = vector.extract_strided_slice %562 {offsets = [0, 128], sizes = [8, 128], strides = [1, 1]} : vector<8x512xf32> to vector<8x128xf32>
    %cst_191 = arith.constant 5.000000e-01 : f32
    %572 = vector.broadcast %cst_191 : f32 to vector<8x128xf32>
    %573 = arith.mulf %572, %571 : vector<8x128xf32>
    %574 = math.tanh %573 : vector<8x128xf32>
    %cst_192 = arith.constant 5.000000e-01 : f32
    %575 = vector.broadcast %cst_192 : f32 to vector<8x128xf32>
    %576 = arith.mulf %575, %574 : vector<8x128xf32>
    %cst_193 = arith.constant 5.000000e-01 : f32
    %577 = vector.broadcast %cst_193 : f32 to vector<8x128xf32>
    %578 = arith.addf %576, %577 : vector<8x128xf32>
    %579 = vector.extract_strided_slice %562 {offsets = [0, 256], sizes = [8, 128], strides = [1, 1]} : vector<8x512xf32> to vector<8x128xf32>
    %580 = math.tanh %579 : vector<8x128xf32>
    %581 = vector.extract_strided_slice %562 {offsets = [0, 384], sizes = [8, 128], strides = [1, 1]} : vector<8x512xf32> to vector<8x128xf32>
    %cst_194 = arith.constant 5.000000e-01 : f32
    %582 = vector.broadcast %cst_194 : f32 to vector<8x128xf32>
    %583 = arith.mulf %582, %581 : vector<8x128xf32>
    %584 = math.tanh %583 : vector<8x128xf32>
    %cst_195 = arith.constant 5.000000e-01 : f32
    %585 = vector.broadcast %cst_195 : f32 to vector<8x128xf32>
    %586 = arith.mulf %585, %584 : vector<8x128xf32>
    %cst_196 = arith.constant 5.000000e-01 : f32
    %587 = vector.broadcast %cst_196 : f32 to vector<8x128xf32>
    %588 = arith.addf %586, %587 : vector<8x128xf32>
    %589 = arith.mulf %578, %515 : vector<8x128xf32>
    %590 = arith.mulf %570, %580 : vector<8x128xf32>
    %591 = arith.addf %589, %590 : vector<8x128xf32>
    %592 = math.tanh %591 : vector<8x128xf32>
    %593 = arith.mulf %588, %592 : vector<8x128xf32>
    %594 = arith.truncf %593 : vector<8x128xf32> to vector<8x128xbf16>
    %cst_197 = arith.constant dense<0.000000e+00> : vector<8x512xf32>
    %595 = tpu.matmul %594, %8, %cst_197 {dimension_numbers = #tpu.dot_dimension_numbers<[1], [0], [0], [1], [0, 0, 1, 1], [], []>} : vector<8x128xbf16>, vector<128x512xbf16>, vector<8x512xf32> -> vector<8x512xf32>
    %596 = arith.truncf %554 : vector<8x128xf32> to vector<8x128xbf16>
    %cst_198 = arith.constant dense<0.000000e+00> : vector<8x512xf32>
    %597 = tpu.matmul %596, %10, %cst_198 {dimension_numbers = #tpu.dot_dimension_numbers<[1], [0], [0], [1], [0, 0, 1, 1], [], []>} : vector<8x128xbf16>, vector<128x512xbf16>, vector<8x512xf32> -> vector<8x512xf32>
    %598 = arith.addf %595, %597 : vector<8x512xf32>
    %599 = arith.addf %598, %14 : vector<8x512xf32>
    %600 = vector.extract_strided_slice %599 {offsets = [0, 0], sizes = [8, 128], strides = [1, 1]} : vector<8x512xf32> to vector<8x128xf32>
    %cst_199 = arith.constant 5.000000e-01 : f32
    %601 = vector.broadcast %cst_199 : f32 to vector<8x128xf32>
    %602 = arith.mulf %601, %600 : vector<8x128xf32>
    %603 = math.tanh %602 : vector<8x128xf32>
    %cst_200 = arith.constant 5.000000e-01 : f32
    %604 = vector.broadcast %cst_200 : f32 to vector<8x128xf32>
    %605 = arith.mulf %604, %603 : vector<8x128xf32>
    %cst_201 = arith.constant 5.000000e-01 : f32
    %606 = vector.broadcast %cst_201 : f32 to vector<8x128xf32>
    %607 = arith.addf %605, %606 : vector<8x128xf32>
    %608 = vector.extract_strided_slice %599 {offsets = [0, 128], sizes = [8, 128], strides = [1, 1]} : vector<8x512xf32> to vector<8x128xf32>
    %cst_202 = arith.constant 5.000000e-01 : f32
    %609 = vector.broadcast %cst_202 : f32 to vector<8x128xf32>
    %610 = arith.mulf %609, %608 : vector<8x128xf32>
    %611 = math.tanh %610 : vector<8x128xf32>
    %cst_203 = arith.constant 5.000000e-01 : f32
    %612 = vector.broadcast %cst_203 : f32 to vector<8x128xf32>
    %613 = arith.mulf %612, %611 : vector<8x128xf32>
    %cst_204 = arith.constant 5.000000e-01 : f32
    %614 = vector.broadcast %cst_204 : f32 to vector<8x128xf32>
    %615 = arith.addf %613, %614 : vector<8x128xf32>
    %616 = vector.extract_strided_slice %599 {offsets = [0, 256], sizes = [8, 128], strides = [1, 1]} : vector<8x512xf32> to vector<8x128xf32>
    %617 = math.tanh %616 : vector<8x128xf32>
    %618 = vector.extract_strided_slice %599 {offsets = [0, 384], sizes = [8, 128], strides = [1, 1]} : vector<8x512xf32> to vector<8x128xf32>
    %cst_205 = arith.constant 5.000000e-01 : f32
    %619 = vector.broadcast %cst_205 : f32 to vector<8x128xf32>
    %620 = arith.mulf %619, %618 : vector<8x128xf32>
    %621 = math.tanh %620 : vector<8x128xf32>
    %cst_206 = arith.constant 5.000000e-01 : f32
    %622 = vector.broadcast %cst_206 : f32 to vector<8x128xf32>
    %623 = arith.mulf %622, %621 : vector<8x128xf32>
    %cst_207 = arith.constant 5.000000e-01 : f32
    %624 = vector.broadcast %cst_207 : f32 to vector<8x128xf32>
    %625 = arith.addf %623, %624 : vector<8x128xf32>
    %626 = arith.mulf %615, %552 : vector<8x128xf32>
    %627 = arith.mulf %607, %617 : vector<8x128xf32>
    %628 = arith.addf %626, %627 : vector<8x128xf32>
    %629 = math.tanh %628 : vector<8x128xf32>
    %630 = arith.mulf %625, %629 : vector<8x128xf32>
    %c8_i32 = arith.constant 8 : i32
    %c0_208 = arith.constant 0 : index
    %c0_209 = arith.constant 0 : index
    %c0_210 = arith.constant 0 : index
    %631 = vector.load %arg14[%c0_208, %c0_209, %c0_210] : memref<2x8x128xf32, #tpu.memory_space<vmem>>, vector<1x8x128xf32>
    %632 = vector.shape_cast %631 : vector<1x8x128xf32> to vector<8x128xf32>
    %633 = vector.shape_cast %593 : vector<8x128xf32> to vector<1x8x128xf32>
    tpu.vector_store %arg14[%c0_208, %c0_209, %c0_210], %633 {strides = array<i32>} : memref<2x8x128xf32, #tpu.memory_space<vmem>>, vector<1x8x128xf32>,
    %c0_211 = arith.constant 0 : index
    %c0_212 = arith.constant 0 : index
    %c0_213 = arith.constant 0 : index
    %634 = vector.load %arg15[%c0_211, %c0_212, %c0_213] : memref<2x8x128xf32, #tpu.memory_space<vmem>>, vector<1x8x128xf32>
    %635 = vector.shape_cast %634 : vector<1x8x128xf32> to vector<8x128xf32>
    %636 = vector.shape_cast %591 : vector<8x128xf32> to vector<1x8x128xf32>
    tpu.vector_store %arg15[%c0_211, %c0_212, %c0_213], %636 {strides = array<i32>} : memref<2x8x128xf32, #tpu.memory_space<vmem>>, vector<1x8x128xf32>,
    %c1_214 = arith.constant 1 : index
    %c0_215 = arith.constant 0 : index
    %c0_216 = arith.constant 0 : index
    %637 = vector.load %arg14[%c1_214, %c0_215, %c0_216] : memref<2x8x128xf32, #tpu.memory_space<vmem>>, vector<1x8x128xf32>
    %638 = vector.shape_cast %637 : vector<1x8x128xf32> to vector<8x128xf32>
    %639 = vector.shape_cast %630 : vector<8x128xf32> to vector<1x8x128xf32>
    tpu.vector_store %arg14[%c1_214, %c0_215, %c0_216], %639 {strides = array<i32>} : memref<2x8x128xf32, #tpu.memory_space<vmem>>, vector<1x8x128xf32>,
    %c1_217 = arith.constant 1 : index
    %c0_218 = arith.constant 0 : index
    %c0_219 = arith.constant 0 : index
    %640 = vector.load %arg15[%c1_217, %c0_218, %c0_219] : memref<2x8x128xf32, #tpu.memory_space<vmem>>, vector<1x8x128xf32>
    %641 = vector.shape_cast %640 : vector<1x8x128xf32> to vector<8x128xf32>
    %642 = vector.shape_cast %628 : vector<8x128xf32> to vector<1x8x128xf32>
    tpu.vector_store %arg15[%c1_217, %c0_218, %c0_219], %642 {strides = array<i32>} : memref<2x8x128xf32, #tpu.memory_space<vmem>>, vector<1x8x128xf32>,
    %c0_i32_220 = arith.constant 0 : i32
    %643 = arith.cmpi eq, %arg0, %c0_i32_220 : i32
    %644 = arith.extui %643 : i1 to i32
    %c0_i32_221 = arith.constant 0 : i32
    %645 = arith.cmpi ne, %644, %c0_i32_221 : i32
    scf.if %645 {
      %c0_222 = arith.constant 0 : index
      %c0_223 = arith.constant 0 : index
      %c0_224 = arith.constant 0 : index
      %646 = vector.load %arg11[%c0_222, %c0_223, %c0_224] : memref<2x8x128xf32, #tpu.memory_space<vmem>>, vector<1x8x128xf32>
      %647 = vector.shape_cast %646 : vector<1x8x128xf32> to vector<8x128xf32>
      %648 = vector.shape_cast %593 : vector<8x128xf32> to vector<1x8x128xf32>
      tpu.vector_store %arg11[%c0_222, %c0_223, %c0_224], %648 {strides = array<i32>} : memref<2x8x128xf32, #tpu.memory_space<vmem>>, vector<1x8x128xf32>,
      %c0_225 = arith.constant 0 : index
      %c0_226 = arith.constant 0 : index
      %c0_227 = arith.constant 0 : index
      %649 = vector.load %arg12[%c0_225, %c0_226, %c0_227] : memref<2x8x128xf32, #tpu.memory_space<vmem>>, vector<1x8x128xf32>
      %650 = vector.shape_cast %649 : vector<1x8x128xf32> to vector<8x128xf32>
      %651 = vector.shape_cast %591 : vector<8x128xf32> to vector<1x8x128xf32>
      tpu.vector_store %arg12[%c0_225, %c0_226, %c0_227], %651 {strides = array<i32>} : memref<2x8x128xf32, #tpu.memory_space<vmem>>, vector<1x8x128xf32>,
      %c1_228 = arith.constant 1 : index
      %c0_229 = arith.constant 0 : index
      %c0_230 = arith.constant 0 : index
      %652 = vector.load %arg11[%c1_228, %c0_229, %c0_230] : memref<2x8x128xf32, #tpu.memory_space<vmem>>, vector<1x8x128xf32>
      %653 = vector.shape_cast %652 : vector<1x8x128xf32> to vector<8x128xf32>
      %654 = vector.shape_cast %630 : vector<8x128xf32> to vector<1x8x128xf32>
      tpu.vector_store %arg11[%c1_228, %c0_229, %c0_230], %654 {strides = array<i32>} : memref<2x8x128xf32, #tpu.memory_space<vmem>>, vector<1x8x128xf32>,
      %c1_231 = arith.constant 1 : index
      %c0_232 = arith.constant 0 : index
      %c0_233 = arith.constant 0 : index
      %655 = vector.load %arg12[%c1_231, %c0_232, %c0_233] : memref<2x8x128xf32, #tpu.memory_space<vmem>>, vector<1x8x128xf32>
      %656 = vector.shape_cast %655 : vector<1x8x128xf32> to vector<8x128xf32>
      %657 = vector.shape_cast %628 : vector<8x128xf32> to vector<1x8x128xf32>
      tpu.vector_store %arg12[%c1_231, %c0_232, %c0_233], %657 {strides = array<i32>} : memref<2x8x128xf32, #tpu.memory_space<vmem>>, vector<1x8x128xf32>,
      %658 = arith.truncf %630 : vector<8x128xf32> to vector<8x128xbf16>
      %c0_234 = arith.constant 0 : index
      %c0_235 = arith.constant 0 : index
      %659 = vector.load %arg7[%c0_234, %c0_235] : memref<128x256xbf16, #tpu.memory_space<vmem>>, vector<128x256xbf16>
      %cst_236 = arith.constant dense<0.000000e+00> : vector<8x256xf32>
      %660 = tpu.matmul %658, %659, %cst_236 {dimension_numbers = #tpu.dot_dimension_numbers<[1], [0], [0], [1], [0, 0, 1, 1], [], []>} : vector<8x128xbf16>, vector<128x256xbf16>, vector<8x256xf32> -> vector<8x256xf32>
      %c0_237 = arith.constant 0 : index
      %c0_238 = arith.constant 0 : index
      %661 = vector.load %arg8[%c0_237, %c0_238] : memref<1x256xf32, #tpu.memory_space<vmem>>, vector<1x256xf32>
      %662 = vector.broadcast %661 : vector<1x256xf32> to vector<8x256xf32>
      %663 = arith.addf %660, %662 : vector<8x256xf32>
      %cst_239 = arith.constant 0.000000e+00 : f32
      %664 = vector.broadcast %cst_239 : f32 to vector<8x256xf32>
      %665 = arith.maximumf %663, %664 : vector<8x256xf32>
      %666 = arith.truncf %665 : vector<8x256xf32> to vector<8x256xbf16>
      %c0_240 = arith.constant 0 : index
      %c0_241 = arith.constant 0 : index
      %667 = vector.load %arg9[%c0_240, %c0_241] : memref<256x128xbf16, #tpu.memory_space<vmem>>, vector<256x128xbf16>
      %cst_242 = arith.constant dense<0.000000e+00> : vector<8x128xf32>
      %668 = tpu.matmul %666, %667, %cst_242 {dimension_numbers = #tpu.dot_dimension_numbers<[1], [0], [0], [1], [0, 0, 1, 1], [], []>} : vector<8x256xbf16>, vector<256x128xbf16>, vector<8x128xf32> -> vector<8x128xf32>
      %c0_243 = arith.constant 0 : index
      %c0_244 = arith.constant 0 : index
      %669 = vector.load %arg10[%c0_243, %c0_244] : memref<1x128xf32, #tpu.memory_space<vmem>>, vector<1x128xf32>
      %670 = vector.broadcast %669 : vector<1x128xf32> to vector<8x128xf32>
      %671 = arith.addf %668, %670 : vector<8x128xf32>
      %c0_245 = arith.constant 0 : index
      %c0_246 = arith.constant 0 : index
      %672 = vector.load %arg13[%c0_245, %c0_246] : memref<8x128xf32, #tpu.memory_space<vmem>>, vector<8x128xf32>
      tpu.vector_store %arg13[%c0_245, %c0_246], %671 {strides = array<i32>} : memref<8x128xf32, #tpu.memory_space<vmem>>, vector<8x128xf32>,
    } else {
    }
    return
  }
  func.func @transform_0(%arg0: i32) -> (i32, i32, i32) {
    %c0_i32 = arith.constant 0 : i32
    %c0_i32_0 = arith.constant 0 : i32
    %c0_i32_1 = arith.constant 0 : i32
    return %arg0, %c0_i32, %c0_i32_0 : i32, i32, i32
  }
  func.func @transform_1(%arg0: i32) -> (i32, i32) {
    %c0_i32 = arith.constant 0 : i32
    %c0_i32_0 = arith.constant 0 : i32
    %c0_i32_1 = arith.constant 0 : i32
    return %c0_i32, %c0_i32_0 : i32, i32
  }
  func.func @transform_2(%arg0: i32) -> (i32, i32) {
    %c0_i32 = arith.constant 0 : i32
    %c0_i32_0 = arith.constant 0 : i32
    %c0_i32_1 = arith.constant 0 : i32
    return %c0_i32, %c0_i32_0 : i32, i32
  }
  func.func @transform_3(%arg0: i32) -> (i32, i32, i32) {
    %c0_i32 = arith.constant 0 : i32
    %c0_i32_0 = arith.constant 0 : i32
    %c0_i32_1 = arith.constant 0 : i32
    %c0_i32_2 = arith.constant 0 : i32
    return %c0_i32, %c0_i32_0, %c0_i32_1 : i32, i32, i32
  }
  func.func @transform_4(%arg0: i32) -> (i32, i32, i32) {
    %c0_i32 = arith.constant 0 : i32
    %c0_i32_0 = arith.constant 0 : i32
    %c0_i32_1 = arith.constant 0 : i32
    %c0_i32_2 = arith.constant 0 : i32
    return %c0_i32, %c0_i32_0, %c0_i32_1 : i32, i32, i32
  }
  func.func @transform_5(%arg0: i32) -> (i32, i32, i32) {
    %c0_i32 = arith.constant 0 : i32
    %c0_i32_0 = arith.constant 0 : i32
    %c0_i32_1 = arith.constant 0 : i32
    %c0_i32_2 = arith.constant 0 : i32
    return %c0_i32, %c0_i32_0, %c0_i32_1 : i32, i32, i32
  }
  func.func @transform_6(%arg0: i32) -> (i32, i32) {
    %c0_i32 = arith.constant 0 : i32
    %c0_i32_0 = arith.constant 0 : i32
    %c0_i32_1 = arith.constant 0 : i32
    return %c0_i32, %c0_i32_0 : i32, i32
  }
  func.func @transform_7(%arg0: i32) -> (i32, i32) {
    %c0_i32 = arith.constant 0 : i32
    %c0_i32_0 = arith.constant 0 : i32
    %c0_i32_1 = arith.constant 0 : i32
    return %c0_i32, %c0_i32_0 : i32, i32
  }
  func.func @transform_8(%arg0: i32) -> (i32, i32) {
    %c0_i32 = arith.constant 0 : i32
    %c0_i32_0 = arith.constant 0 : i32
    %c0_i32_1 = arith.constant 0 : i32
    return %c0_i32, %c0_i32_0 : i32, i32
  }
  func.func @transform_9(%arg0: i32) -> (i32, i32) {
    %c0_i32 = arith.constant 0 : i32
    %c0_i32_0 = arith.constant 0 : i32
    %c0_i32_1 = arith.constant 0 : i32
    return %c0_i32, %c0_i32_0 : i32, i32
  }
  func.func @transform_10(%arg0: i32) -> (i32, i32, i32) {
    %c0_i32 = arith.constant 0 : i32
    %c0_i32_0 = arith.constant 0 : i32
    %c0_i32_1 = arith.constant 0 : i32
    %c0_i32_2 = arith.constant 0 : i32
    return %c0_i32, %c0_i32_0, %c0_i32_1 : i32, i32, i32
  }
  func.func @transform_11(%arg0: i32) -> (i32, i32, i32) {
    %c0_i32 = arith.constant 0 : i32
    %c0_i32_0 = arith.constant 0 : i32
    %c0_i32_1 = arith.constant 0 : i32
    %c0_i32_2 = arith.constant 0 : i32
    return %c0_i32, %c0_i32_0, %c0_i32_1 : i32, i32, i32
  }
  func.func @transform_12(%arg0: i32) -> (i32, i32) {
    %c0_i32 = arith.constant 0 : i32
    %c0_i32_0 = arith.constant 0 : i32
    %c0_i32_1 = arith.constant 0 : i32
    return %c0_i32, %c0_i32_0 : i32, i32
  }
}

</mosaic_0001>

<llo_original>
// kernel: tpu_custom_call.1
$region0: #{tpu_custom_call.1}
  #allocation0 [shape = 'u32[]', space=smem, size = 0x4, offset = 0x4, fixed_abs, tag = 'smem constant byte address 0x4 - core index']
  #allocation1 [shape = 'u32[144,128]{1,0:T(1,128)}', space=vmem, size = 0x12000, scoped, tag = 'internal scratch']
  #allocation2 [shape = 'f32[2,8,128]{2,1,0:T(8,128)}', space=vmem, size = 0x2000, scoped, tag = 'scratch operand']
  #allocation3 [shape = 'f32[2,8,128]{2,1,0:T(8,128)}', space=vmem, size = 0x2000, scoped, tag = 'scratch operand']
  %s0 = inlined_call_operand.hbm [shape: bf16[8,8,512], index: 0, kind: input, shape index: {}]
  %s1 = inlined_call_operand.hbm [shape: bf16[128,512], index: 1, kind: input, shape index: {}]
  %s2 = inlined_call_operand.vmem [shape: f32[1,512], index: 2, kind: input, shape index: {}]
  %s3 = inlined_call_operand.hbm [shape: bf16[1,128,512], index: 3, kind: input, shape index: {}]
  %s4 = inlined_call_operand.hbm [shape: bf16[1,128,512], index: 4, kind: input, shape index: {}]
  %s5 = inlined_call_operand.vmem [shape: f32[1,1,512], index: 5, kind: input, shape index: {}]
  %s6 = inlined_call_operand.hbm [shape: bf16[128,256], index: 6, kind: input, shape index: {}]
  %s7 = inlined_call_operand.vmem [shape: f32[1,256], index: 7, kind: input, shape index: {}]
  %s8 = inlined_call_operand.hbm [shape: bf16[256,128], index: 8, kind: input, shape index: {}]
  %s9 = inlined_call_operand.vmem [shape: f32[1,128], index: 9, kind: input, shape index: {}]
  %s10 = inlined_call_operand.hbm [shape: f32[2,8,128], index: 10, kind: output, shape index: {0}]
  %s11 = inlined_call_operand.hbm [shape: f32[2,8,128], index: 11, kind: output, shape index: {1}]
  %s12 = inlined_call_operand.hbm [shape: f32[8,128], index: 12, kind: output, shape index: {2}]
  %13 = xla_tuple %s10, %s11, %s12
  %s14 = sld [smem:[#allocation0]]
  $region98: #{tpu_custom_call.1} parent=0
    _
  %s16 = ssub.s32 1, %s14
  %s17 = scalar_select 0, %s16, %s14
  $region1: #{tpu_custom_call.1} parent=0
    #allocation4 [shape = 'u8[65536]{0}', space=vmem, size = 0x10000, scoped, tag = 'input window, operand 0, single buffered']
    #allocation5 [shape = 's32[1]{0}', space=sflag, size = 0x4, scoped, tag = 'scoped memory for tpu_custom_call.1']
    #allocation6 [shape = 's32[1]{0}', space=sflag, size = 0x4, scoped, tag = 'scoped memory for tpu_custom_call.1']
    #allocation7 [shape = 'u8[131072]{0}', space=vmem, size = 0x20000, scoped, tag = 'input window, operand 1, single buffered']
    #allocation8 [shape = 's32[1]{0}', space=sflag, size = 0x4, scoped, tag = 'scoped memory for tpu_custom_call.1']
    #allocation9 [shape = 'u8[131072]{0}', space=vmem, size = 0x20000, scoped, tag = 'input window, operand 3, single buffered']
    #allocation10 [shape = 'u8[131072]{0}', space=vmem, size = 0x20000, scoped, tag = 'input window, operand 4, single buffered']
    #allocation11 [shape = 's32[1]{0}', space=sflag, size = 0x4, scoped, tag = 'scoped memory for tpu_custom_call.1']
    #allocation12 [shape = 'u8[65536]{0}', space=vmem, size = 0x10000, scoped, tag = 'input window, operand 6, single buffered']
    #allocation13 [shape = 'u8[65536]{0}', space=vmem, size = 0x10000, scoped, tag = 'input window, operand 8, single buffered']
    #allocation14 [shape = 's32[1]{0}', space=sflag, size = 0x4, scoped, tag = 'scoped memory for tpu_custom_call.1']
    #allocation15 [shape = 'u8[8192]{0}', space=vmem, size = 0x2000, scoped, tag = 'output window, operand 0, single buffered']
    #allocation16 [shape = 'u8[8192]{0}', space=vmem, size = 0x2000, scoped, tag = 'output window, operand 1, single buffered']
    #allocation17 [shape = 's32[1]{0}', space=sflag, size = 0x4, scoped, tag = 'scoped memory for tpu_custom_call.1']
    #allocation18 [shape = 'u8[4096]{0}', space=vmem, size = 0x1000, scoped, tag = 'output window, operand 2, single buffered']
    %18 = vsyncpa [#allocation5], 0
    %19 = vsyncpa [#allocation8], 0
    %20 = vsyncpa [#allocation11], 0
    %21 = vsyncpa [#allocation14], 0
    %22 = vsyncpa [#allocation6], 0
    %23 = vsyncpa [#allocation17], 0
    // Predicated region
    $region2: #{tpu_custom_call.1} parent=1 // pred_check
      _
    $region3: #{tpu_custom_call.1} parent=1 // pred_check_branch
      %25 = sbr.rel (0) target = $region5
    $region4: #{tpu_custom_call.1} parent=1 // pred_region
      %s27 = ssub.s32 2048, 2048
      %28 = vsyncadd [#allocation5], %s27
      %s29 = sshll.u32 [#allocation4], 4
      %s30 = int_to_ptr.vmem [resolvable:$true] %s29
      %35 = dma.hbm_to_vmem [thread:$0]  %s0, 2048, %s30, [#allocation5], 256, 256, 16
    $region5: #{tpu_custom_call.1} parent=1 // pred_fallthru
      _
    // Predicated region
    $region6: #{tpu_custom_call.1} parent=1 // pred_check
      _
    $region7: #{tpu_custom_call.1} parent=1 // pred_check_branch
      %37 = sbr.rel (0) target = $region9
    $region8: #{tpu_custom_call.1} parent=1 // pred_region
      %s39 = ssub.s32 4096, 4096
      %40 = vsyncadd [#allocation8], %s39
      %s41 = sshll.u32 [#allocation7], 4
      %s42 = int_to_ptr.vmem [resolvable:$true] %s41
      %47 = dma.hbm_to_vmem [thread:$0]  %s1, 4096, %s42, [#allocation8], 256, 256, 16
    $region9: #{tpu_custom_call.1} parent=1 // pred_fallthru
      _
    // Predicated region
    $region10: #{tpu_custom_call.1} parent=1 // pred_check
      _
    $region11: #{tpu_custom_call.1} parent=1 // pred_check_branch
      %49 = sbr.rel (0) target = $region13
    $region12: #{tpu_custom_call.1} parent=1 // pred_region
      _
    $region13: #{tpu_custom_call.1} parent=1 // pred_fallthru
      _
    // Predicated region
    $region14: #{tpu_custom_call.1} parent=1 // pred_check
      _
    $region15: #{tpu_custom_call.1} parent=1 // pred_check_branch
      %51 = sbr.rel (0) target = $region17
    $region16: #{tpu_custom_call.1} parent=1 // pred_region
      %s53 = ssub.s32 4096, 4096
      %54 = vsyncadd [#allocation8], %s53
      %s55 = sshll.u32 [#allocation9], 4
      %s56 = int_to_ptr.vmem [resolvable:$true] %s55
      %61 = dma.hbm_to_vmem [thread:$0]  %s3, 4096, %s56, [#allocation8], 256, 256, 16
    $region17: #{tpu_custom_call.1} parent=1 // pred_fallthru
      _
    // Predicated region
    $region18: #{tpu_custom_call.1} parent=1 // pred_check
      _
    $region19: #{tpu_custom_call.1} parent=1 // pred_check_branch
      %63 = sbr.rel (0) target = $region21
    $region20: #{tpu_custom_call.1} parent=1 // pred_region
      %s65 = ssub.s32 4096, 4096
      %66 = vsyncadd [#allocation11], %s65
      %s67 = sshll.u32 [#allocation10], 4
      %s68 = int_to_ptr.vmem [resolvable:$true] %s67
      %73 = dma.hbm_to_vmem [thread:$0]  %s4, 4096, %s68, [#allocation11], 256, 256, 16
    $region21: #{tpu_custom_call.1} parent=1 // pred_fallthru
      _
    // Predicated region
    $region22: #{tpu_custom_call.1} parent=1 // pred_check
      _
    $region23: #{tpu_custom_call.1} parent=1 // pred_check_branch
      %75 = sbr.rel (0) target = $region25
    $region24: #{tpu_custom_call.1} parent=1 // pred_region
      _
    $region25: #{tpu_custom_call.1} parent=1 // pred_fallthru
      _
    // Predicated region
    $region26: #{tpu_custom_call.1} parent=1 // pred_check
      _
    $region27: #{tpu_custom_call.1} parent=1 // pred_check_branch
      %77 = sbr.rel (0) target = $region29
    $region28: #{tpu_custom_call.1} parent=1 // pred_region
      %s79 = ssub.s32 2048, 2048
      %80 = vsyncadd [#allocation11], %s79
      %s81 = sshll.u32 [#allocation12], 4
      %s82 = int_to_ptr.vmem [resolvable:$true] %s81
      %87 = dma.hbm_to_vmem [thread:$0]  %s6, 2048, %s82, [#allocation11], 128, 128, 8
    $region29: #{tpu_custom_call.1} parent=1 // pred_fallthru
      _
    // Predicated region
    $region30: #{tpu_custom_call.1} parent=1 // pred_check
      _
    $region31: #{tpu_custom_call.1} parent=1 // pred_check_branch
      %89 = sbr.rel (0) target = $region33
    $region32: #{tpu_custom_call.1} parent=1 // pred_region
      _
    $region33: #{tpu_custom_call.1} parent=1 // pred_fallthru
      _
    // Predicated region
    $region34: #{tpu_custom_call.1} parent=1 // pred_check
      _
    $region35: #{tpu_custom_call.1} parent=1 // pred_check_branch
      %91 = sbr.rel (0) target = $region37
    $region36: #{tpu_custom_call.1} parent=1 // pred_region
      %s93 = ssub.s32 2048, 2048
      %94 = vsyncadd [#allocation14], %s93
      %s95 = sshll.u32 [#allocation13], 4
      %s96 = int_to_ptr.vmem [resolvable:$true] %s95
      %101 = dma.hbm_to_vmem [thread:$0]  %s8, 2048, %s96, [#allocation14], 64, 64, 4
    $region37: #{tpu_custom_call.1} parent=1 // pred_fallthru
      _
    // Predicated region
    $region38: #{tpu_custom_call.1} parent=1 // pred_check
      _
    $region39: #{tpu_custom_call.1} parent=1 // pred_check_branch
      %103 = sbr.rel (0) target = $region41
    $region40: #{tpu_custom_call.1} parent=1 // pred_region
      _
    $region41: #{tpu_custom_call.1} parent=1 // pred_fallthru
      _
    // Predicated region
    $region42: #{tpu_custom_call.1} parent=1 // pred_check
      _
    $region43: #{tpu_custom_call.1} parent=1 // pred_check_branch
      %105 = sbr.rel (0) target = $region45
    $region44: #{tpu_custom_call.1} parent=1 // pred_region
      %106 = dma.done [#allocation5], 2048
    $region45: #{tpu_custom_call.1} parent=1 // pred_fallthru
      _
    // Predicated region
    $region46: #{tpu_custom_call.1} parent=1 // pred_check
      _
    $region47: #{tpu_custom_call.1} parent=1 // pred_check_branch
      %108 = sbr.rel (0) target = $region49
    $region48: #{tpu_custom_call.1} parent=1 // pred_region
      %109 = dma.done [#allocation8], 4096
    $region49: #{tpu_custom_call.1} parent=1 // pred_fallthru
      _
    // Predicated region
    $region50: #{tpu_custom_call.1} parent=1 // pred_check
      _
    $region51: #{tpu_custom_call.1} parent=1 // pred_check_branch
      %111 = sbr.rel (0) target = $region53
    $region52: #{tpu_custom_call.1} parent=1 // pred_region
      %112 = dma.done [#allocation8], 4096
    $region53: #{tpu_custom_call.1} parent=1 // pred_fallthru
      _
    // Predicated region
    $region54: #{tpu_custom_call.1} parent=1 // pred_check
      _
    $region55: #{tpu_custom_call.1} parent=1 // pred_check_branch
      %114 = sbr.rel (0) target = $region57
    $region56: #{tpu_custom_call.1} parent=1 // pred_region
      %115 = dma.done [#allocation11], 4096
    $region57: #{tpu_custom_call.1} parent=1 // pred_fallthru
      _
    // Predicated region
    $region58: #{tpu_custom_call.1} parent=1 // pred_check
      _
    $region59: #{tpu_custom_call.1} parent=1 // pred_check_branch
      %117 = sbr.rel (0) target = $region61
    $region60: #{tpu_custom_call.1} parent=1 // pred_region
      %118 = dma.done [#allocation11], 2048
    $region61: #{tpu_custom_call.1} parent=1 // pred_fallthru
      _
    // Predicated region
    $region62: #{tpu_custom_call.1} parent=1 // pred_check
      _
    $region63: #{tpu_custom_call.1} parent=1 // pred_check_branch
      %120 = sbr.rel (0) target = $region65
    $region64: #{tpu_custom_call.1} parent=1 // pred_region
      %121 = dma.done [#allocation14], 2048
    $region65: #{tpu_custom_call.1} parent=1 // pred_fallthru
      _
    %p123 = scmp.eq.s32.totalorder 0, 0
    // Predicated region
    $region66: #{tpu_custom_call.1} parent=1 // pred_check
      %p124 = pneg %p123
    $region67: #{tpu_custom_call.1} parent=1 // pred_check_branch
      %126 = sbr.rel (%p124) target = $region69
    $region68: #{tpu_custom_call.1} parent=1 // pred_region
      %127 = vst [vmem:[#allocation2] sm:$0xff] 0.0
      %128 = vst [vmem:[#allocation2 + $0x8] sm:$0xff] 0.0
      %129 = vst [vmem:[#allocation3] sm:$0xff] 0.0
      %130 = vst [vmem:[#allocation3 + $0x8] sm:$0xff] 0.0
    $region69: #{tpu_custom_call.1} parent=1 // pred_fallthru
      _
    %v131 = vld [vmem:[#allocation7] sm:$0xff]
    %v132 = vld [vmem:[#allocation7 + $0x8] sm:$0xff]
    %v133 = vld [vmem:[#allocation7 + $0x10] sm:$0xff]
    %v134 = vld [vmem:[#allocation7 + $0x18] sm:$0xff]
    %v135 = vld [vmem:[#allocation7 + $0x20] sm:$0xff]
    %v136 = vld [vmem:[#allocation7 + $0x28] sm:$0xff]
    %v137 = vld [vmem:[#allocation7 + $0x30] sm:$0xff]
    %v138 = vld [vmem:[#allocation7 + $0x38] sm:$0xff]
    %v139 = vld [vmem:[#allocation7 + $0x40] sm:$0xff]
    %v140 = vld [vmem:[#allocation7 + $0x48] sm:$0xff]
    %v141 = vld [vmem:[#allocation7 + $0x50] sm:$0xff]
    %v142 = vld [vmem:[#allocation7 + $0x58] sm:$0xff]
    %v143 = vld [vmem:[#allocation7 + $0x60] sm:$0xff]
    %v144 = vld [vmem:[#allocation7 + $0x68] sm:$0xff]
    %v145 = vld [vmem:[#allocation7 + $0x70] sm:$0xff]
    %v146 = vld [vmem:[#allocation7 + $0x78] sm:$0xff]
    %v147 = vld [vmem:[#allocation7 + $0x80] sm:$0xff]
    %v148 = vld [vmem:[#allocation7 + $0x88] sm:$0xff]
    %v149 = vld [vmem:[#allocation7 + $0x90] sm:$0xff]
    %v150 = vld [vmem:[#allocation7 + $0x98] sm:$0xff]
    %v151 = vld [vmem:[#allocation7 + $0xa0] sm:$0xff]
    %v152 = vld [vmem:[#allocation7 + $0xa8] sm:$0xff]
    %v153 = vld [vmem:[#allocation7 + $0xb0] sm:$0xff]
    %v154 = vld [vmem:[#allocation7 + $0xb8] sm:$0xff]
    %v155 = vld [vmem:[#allocation7 + $0xc0] sm:$0xff]
    %v156 = vld [vmem:[#allocation7 + $0xc8] sm:$0xff]
    %v157 = vld [vmem:[#allocation7 + $0xd0] sm:$0xff]
    %v158 = vld [vmem:[#allocation7 + $0xd8] sm:$0xff]
    %v159 = vld [vmem:[#allocation7 + $0xe0] sm:$0xff]
    %v160 = vld [vmem:[#allocation7 + $0xe8] sm:$0xff]
    %v161 = vld [vmem:[#allocation7 + $0xf0] sm:$0xff]
    %v162 = vld [vmem:[#allocation7 + $0xf8] sm:$0xff]
    %v163 = vld [vmem:[%s2] sm:$0xf]
    %v165 = vlaneseq
    %v166 = vshrl.u32 %v165, 7
    %v167 = vsub.s32 0, %v166
    %v168 = vrot.slane %v163, %v167
    %v169 = vlaneseq
    %v170 = vshrl.u32 %v169, 7
    %v171 = vsub.s32 1, %v170
    %v172 = vrot.slane %v163, %v171
    %v173 = vlaneseq
    %v174 = vshrl.u32 %v173, 7
    %v175 = vsub.s32 2, %v174
    %v176 = vrot.slane %v163, %v175
    %v177 = vlaneseq
    %v178 = vshrl.u32 %v177, 7
    %v179 = vsub.s32 3, %v178
    %v180 = vrot.slane %v163, %v179
    %v185 = vld [vmem:[#allocation9] sm:$0xff]
    %v186 = vld [vmem:[#allocation9 + $0x8] sm:$0xff]
    %v187 = vld [vmem:[#allocation9 + $0x10] sm:$0xff]
    %v188 = vld [vmem:[#allocation9 + $0x18] sm:$0xff]
    %v189 = vld [vmem:[#allocation9 + $0x20] sm:$0xff]
    %v190 = vld [vmem:[#allocation9 + $0x28] sm:$0xff]
    %v191 = vld [vmem:[#allocation9 + $0x30] sm:$0xff]
    %v192 = vld [vmem:[#allocation9 + $0x38] sm:$0xff]
    %v193 = vld [vmem:[#allocation9 + $0x40] sm:$0xff]
    %v194 = vld [vmem:[#allocation9 + $0x48] sm:$0xff]
    %v195 = vld [vmem:[#allocation9 + $0x50] sm:$0xff]
    %v196 = vld [vmem:[#allocation9 + $0x58] sm:$0xff]
    %v197 = vld [vmem:[#allocation9 + $0x60] sm:$0xff]
    %v198 = vld [vmem:[#allocation9 + $0x68] sm:$0xff]
    %v199 = vld [vmem:[#allocation9 + $0x70] sm:$0xff]
    %v200 = vld [vmem:[#allocation9 + $0x78] sm:$0xff]
    %v201 = vld [vmem:[#allocation9 + $0x80] sm:$0xff]
    %v202 = vld [vmem:[#allocation9 + $0x88] sm:$0xff]
    %v203 = vld [vmem:[#allocation9 + $0x90] sm:$0xff]
    %v204 = vld [vmem:[#allocation9 + $0x98] sm:$0xff]
    %v205 = vld [vmem:[#allocation9 + $0xa0] sm:$0xff]
    %v206 = vld [vmem:[#allocation9 + $0xa8] sm:$0xff]
    %v207 = vld [vmem:[#allocation9 + $0xb0] sm:$0xff]
    %v208 = vld [vmem:[#allocation9 + $0xb8] sm:$0xff]
    %v209 = vld [vmem:[#allocation9 + $0xc0] sm:$0xff]
    %v210 = vld [vmem:[#allocation9 + $0xc8] sm:$0xff]
    %v211 = vld [vmem:[#allocation9 + $0xd0] sm:$0xff]
    %v212 = vld [vmem:[#allocation9 + $0xd8] sm:$0xff]
    %v213 = vld [vmem:[#allocation9 + $0xe0] sm:$0xff]
    %v214 = vld [vmem:[#allocation9 + $0xe8] sm:$0xff]
    %v215 = vld [vmem:[#allocation9 + $0xf0] sm:$0xff]
    %v216 = vld [vmem:[#allocation9 + $0xf8] sm:$0xff]
    %v217 = vld [vmem:[#allocation10] sm:$0xff]
    %v218 = vld [vmem:[#allocation10 + $0x8] sm:$0xff]
    %v219 = vld [vmem:[#allocation10 + $0x10] sm:$0xff]
    %v220 = vld [vmem:[#allocation10 + $0x18] sm:$0xff]
    %v221 = vld [vmem:[#allocation10 + $0x20] sm:$0xff]
    %v222 = vld [vmem:[#allocation10 + $0x28] sm:$0xff]
    %v223 = vld [vmem:[#allocation10 + $0x30] sm:$0xff]
    %v224 = vld [vmem:[#allocation10 + $0x38] sm:$0xff]
    %v225 = vld [vmem:[#allocation10 + $0x40] sm:$0xff]
    %v226 = vld [vmem:[#allocation10 + $0x48] sm:$0xff]
    %v227 = vld [vmem:[#allocation10 + $0x50] sm:$0xff]
    %v228 = vld [vmem:[#allocation10 + $0x58] sm:$0xff]
    %v229 = vld [vmem:[#allocation10 + $0x60] sm:$0xff]
    %v230 = vld [vmem:[#allocation10 + $0x68] sm:$0xff]
    %v231 = vld [vmem:[#allocation10 + $0x70] sm:$0xff]
    %v232 = vld [vmem:[#allocation10 + $0x78] sm:$0xff]
    %v233 = vld [vmem:[#allocation10 + $0x80] sm:$0xff]
    %v234 = vld [vmem:[#allocation10 + $0x88] sm:$0xff]
    %v235 = vld [vmem:[#allocation10 + $0x90] sm:$0xff]
    %v236 = vld [vmem:[#allocation10 + $0x98] sm:$0xff]
    %v237 = vld [vmem:[#allocation10 + $0xa0] sm:$0xff]
    %v238 = vld [vmem:[#allocation10 + $0xa8] sm:$0xff]
    %v239 = vld [vmem:[#allocation10 + $0xb0] sm:$0xff]
    %v240 = vld [vmem:[#allocation10 + $0xb8] sm:$0xff]
    %v241 = vld [vmem:[#allocation10 + $0xc0] sm:$0xff]
    %v242 = vld [vmem:[#allocation10 + $0xc8] sm:$0xff]
    %v243 = vld [vmem:[#allocation10 + $0xd0] sm:$0xff]
    %v244 = vld [vmem:[#allocation10 + $0xd8] sm:$0xff]
    %v245 = vld [vmem:[#allocation10 + $0xe0] sm:$0xff]
    %v246 = vld [vmem:[#allocation10 + $0xe8] sm:$0xff]
    %v247 = vld [vmem:[#allocation10 + $0xf0] sm:$0xff]
    %v248 = vld [vmem:[#allocation10 + $0xf8] sm:$0xff]
    %v249 = vld [vmem:[%s5] sm:$0xf]
    %v251 = vlaneseq
    %v252 = vshrl.u32 %v251, 7
    %v253 = vsub.s32 0, %v252
    %v254 = vrot.slane %v249, %v253
    %v255 = vlaneseq
    %v256 = vshrl.u32 %v255, 7
    %v257 = vsub.s32 1, %v256
    %v258 = vrot.slane %v249, %v257
    %v259 = vlaneseq
    %v260 = vshrl.u32 %v259, 7
    %v261 = vsub.s32 2, %v260
    %v262 = vrot.slane %v249, %v261
    %v263 = vlaneseq
    %v264 = vshrl.u32 %v263, 7
    %v265 = vsub.s32 3, %v264
    %v266 = vrot.slane %v249, %v265
    %v271 = vld [vmem:[#allocation2] sm:$0xff]
    %s272 = scalar_lea.vmem [#allocation2], 8
    %v273 = vld [vmem:[%s272] sm:$0xff]
    %v274 = vld [vmem:[#allocation3] sm:$0xff]
    %s275 = scalar_lea.vmem [#allocation3], 8
    %v276 = vld [vmem:[%s275] sm:$0xff]
    %v277 = vpack.c.bf16 %v271, %v271
    %v278 = vld [vmem:[#allocation4] sm:$0xff]
    %v279 = vld [vmem:[#allocation4 + $0x8] sm:$0xff]
    %v280 = vunpack.c.l.bf16 %v278
    %v281 = vunpack.c.h.bf16 %v278
    %v282 = vunpack.c.l.bf16 %v279
    %v283 = vunpack.c.h.bf16 %v279
    %v316 = vunpack.c.l.b16 %v131
    %v317 = vunpack.c.h.b16 %v131
    %v318 = vunpack.c.l.b16 %v132
    %v319 = vunpack.c.h.b16 %v132
    %v320 = vunpack.c.l.b16 %v133
    %v321 = vunpack.c.h.b16 %v133
    %v322 = vunpack.c.l.b16 %v134
    %v323 = vunpack.c.h.b16 %v134
    %v324 = vunpack.c.l.b16 %v135
    %v325 = vunpack.c.h.b16 %v135
    %v326 = vunpack.c.l.b16 %v136
    %v327 = vunpack.c.h.b16 %v136
    %v328 = vunpack.c.l.b16 %v137
    %v329 = vunpack.c.h.b16 %v137
    %v330 = vunpack.c.l.b16 %v138
    %v331 = vunpack.c.h.b16 %v138
    %v332 = vunpack.c.l.b16 %v139
    %v333 = vunpack.c.h.b16 %v139
    %v334 = vunpack.c.l.b16 %v140
    %v335 = vunpack.c.h.b16 %v140
    %v336 = vunpack.c.l.b16 %v141
    %v337 = vunpack.c.h.b16 %v141
    %v338 = vunpack.c.l.b16 %v142
    %v339 = vunpack.c.h.b16 %v142
    %v340 = vunpack.c.l.b16 %v143
    %v341 = vunpack.c.h.b16 %v143
    %v342 = vunpack.c.l.b16 %v144
    %v343 = vunpack.c.h.b16 %v144
    %v344 = vunpack.c.l.b16 %v145
    %v345 = vunpack.c.h.b16 %v145
    %v346 = vunpack.c.l.b16 %v146
    %v347 = vunpack.c.h.b16 %v146
    %v348 = vunpack.c.l.b16 %v147
    %v349 = vunpack.c.h.b16 %v147
    %v350 = vunpack.c.l.b16 %v148
    %v351 = vunpack.c.h.b16 %v148
    %v352 = vunpack.c.l.b16 %v149
    %v353 = vunpack.c.h.b16 %v149
    %v354 = vunpack.c.l.b16 %v150
    %v355 = vunpack.c.h.b16 %v150
    %v356 = vunpack.c.l.b16 %v151
    %v357 = vunpack.c.h.b16 %v151
    %v358 = vunpack.c.l.b16 %v152
    %v359 = vunpack.c.h.b16 %v152
    %v360 = vunpack.c.l.b16 %v153
    %v361 = vunpack.c.h.b16 %v153
    %v362 = vunpack.c.l.b16 %v154
    %v363 = vunpack.c.h.b16 %v154
    %v364 = vunpack.c.l.b16 %v155
    %v365 = vunpack.c.h.b16 %v155
    %v366 = vunpack.c.l.b16 %v156
    %v367 = vunpack.c.h.b16 %v156
    %v368 = vunpack.c.l.b16 %v157
    %v369 = vunpack.c.h.b16 %v157
    %v370 = vunpack.c.l.b16 %v158
    %v371 = vunpack.c.h.b16 %v158
    %v372 = vunpack.c.l.b16 %v159
    %v373 = vunpack.c.h.b16 %v159
    %v374 = vunpack.c.l.b16 %v160
    %v375 = vunpack.c.h.b16 %v160
    %v376 = vunpack.c.l.b16 %v161
    %v377 = vunpack.c.h.b16 %v161
    %v378 = vunpack.c.l.b16 %v162
    %v379 = vunpack.c.h.b16 %v162
    %v380 = vpack.c.b16 %v320, %v316
    %v381 = vpack.c.b16 %v321, %v317
    %v382 = vpack.c.b16 %v322, %v318
    %v383 = vpack.c.b16 %v323, %v319
    %v384 = vpack.c.b16 %v328, %v324
    %v385 = vpack.c.b16 %v329, %v325
    %v386 = vpack.c.b16 %v330, %v326
    %v387 = vpack.c.b16 %v331, %v327
    %v388 = vpack.c.b16 %v336, %v332
    %v389 = vpack.c.b16 %v337, %v333
    %v390 = vpack.c.b16 %v338, %v334
    %v391 = vpack.c.b16 %v339, %v335
    %v392 = vpack.c.b16 %v344, %v340
    %v393 = vpack.c.b16 %v345, %v341
    %v394 = vpack.c.b16 %v346, %v342
    %v395 = vpack.c.b16 %v347, %v343
    %v396 = vpack.c.b16 %v352, %v348
    %v397 = vpack.c.b16 %v353, %v349
    %v398 = vpack.c.b16 %v354, %v350
    %v399 = vpack.c.b16 %v355, %v351
    %v400 = vpack.c.b16 %v360, %v356
    %v401 = vpack.c.b16 %v361, %v357
    %v402 = vpack.c.b16 %v362, %v358
    %v403 = vpack.c.b16 %v363, %v359
    %v404 = vpack.c.b16 %v368, %v364
    %v405 = vpack.c.b16 %v369, %v365
    %v406 = vpack.c.b16 %v370, %v366
    %v407 = vpack.c.b16 %v371, %v367
    %v408 = vpack.c.b16 %v376, %v372
    %v409 = vpack.c.b16 %v377, %v373
    %v410 = vpack.c.b16 %v378, %v374
    %v411 = vpack.c.b16 %v379, %v375
    %444 = vmatprep.subr.bf16.mxu0 %v381
    %445 = vmatpush1.bf16.msra.mxu0 %v380
    %446 = vmatprep.subr.bf16.mxu0 %v385
    %447 = vmatpush1.bf16.msra.mxu0 %v384
    %448 = vmatprep.subr.bf16.mxu0 %v389
    %449 = vmatpush1.bf16.msra.mxu0 %v388
    %450 = vmatprep.subr.bf16.mxu0 %v393
    %451 = vmatpush1.bf16.msra.mxu0 %v392
    %452 = vmatprep.subr.bf16.mxu0 %v397
    %453 = vmatpush1.bf16.msra.mxu0 %v396
    %454 = vmatprep.subr.bf16.mxu0 %v401
    %455 = vmatpush1.bf16.msra.mxu0 %v400
    %456 = vmatprep.subr.bf16.mxu0 %v405
    %457 = vmatpush1.bf16.msra.mxu0 %v404
    %458 = vmatprep.subr.bf16.mxu0 %v409
    %459 = vmatpush1.bf16.msra.mxu0 %v408
    %460 = vmatprep.subr.bf16.mxu0 0
    %461 = vmatpush1.bf16.msra.mxu0 0
    %462 = vmatprep.subr.bf16.mxu0 0
    %463 = vmatpush1.bf16.msra.mxu0 0
    %464 = vmatprep.subr.bf16.mxu0 0
    %465 = vmatpush1.bf16.msra.mxu0 0
    %466 = vmatprep.subr.bf16.mxu0 0
    %467 = vmatpush1.bf16.msra.mxu0 0
    %468 = vmatprep.subr.bf16.mxu0 0
    %469 = vmatpush1.bf16.msra.mxu0 0
    %470 = vmatprep.subr.bf16.mxu0 0
    %471 = vmatpush1.bf16.msra.mxu0 0
    %472 = vmatprep.subr.bf16.mxu0 0
    %473 = vmatpush1.bf16.msra.mxu0 0
    %474 = vmatprep.subr.bf16.mxu0 0
    %475 = vmatpush1.bf16.msra.mxu0 0
    %476 = vmatprep.mubr.bf16.mxu0 0
    %477 = vmatmul.mubr.bf16.gmra.mrb[0].mxu0 %v277
    %v478 = vpop.f32.mrb[0].mxu0
    %v479 = vadd.f32 %v280, %v478
    %v480 = vpop.f32.mrb[0].mxu0
    %v481 = vadd.f32 %v281, %v480
    %v482 = vpop.f32.mrb[0].mxu0
    %v483 = vpop.f32.mrb[0].mxu0
    %484 = vdwg.mxu0
    %485 = vmatprep.subr.bf16.mxu0 %v383
    %486 = vmatpush1.bf16.msra.mxu0 %v382
    %487 = vmatprep.subr.bf16.mxu0 %v387
    %488 = vmatpush1.bf16.msra.mxu0 %v386
    %489 = vmatprep.subr.bf16.mxu0 %v391
    %490 = vmatpush1.bf16.msra.mxu0 %v390
    %491 = vmatprep.subr.bf16.mxu0 %v395
    %492 = vmatpush1.bf16.msra.mxu0 %v394
    %493 = vmatprep.subr.bf16.mxu0 %v399
    %494 = vmatpush1.bf16.msra.mxu0 %v398
    %495 = vmatprep.subr.bf16.mxu0 %v403
    %496 = vmatpush1.bf16.msra.mxu0 %v402
    %497 = vmatprep.subr.bf16.mxu0 %v407
    %498 = vmatpush1.bf16.msra.mxu0 %v406
    %499 = vmatprep.subr.bf16.mxu0 %v411
    %500 = vmatpush1.bf16.msra.mxu0 %v410
    %501 = vmatprep.subr.bf16.mxu0 0
    %502 = vmatpush1.bf16.msra.mxu0 0
    %503 = vmatprep.subr.bf16.mxu0 0
    %504 = vmatpush1.bf16.msra.mxu0 0
    %505 = vmatprep.subr.bf16.mxu0 0
    %506 = vmatpush1.bf16.msra.mxu0 0
    %507 = vmatprep.subr.bf16.mxu0 0
    %508 = vmatpush1.bf16.msra.mxu0 0
    %509 = vmatprep.subr.bf16.mxu0 0
    %510 = vmatpush1.bf16.msra.mxu0 0
    %511 = vmatprep.subr.bf16.mxu0 0
    %512 = vmatpush1.bf16.msra.mxu0 0
    %513 = vmatprep.subr.bf16.mxu0 0
    %514 = vmatpush1.bf16.msra.mxu0 0
    %515 = vmatprep.subr.bf16.mxu0 0
    %516 = vmatpush1.bf16.msra.mxu0 0
    %517 = vmatprep.mubr.bf16.mxu0 0
    %518 = vmatmul.mubr.bf16.gmra.mrb[0].mxu0 %v277
    %v519 = vpop.f32.mrb[0].mxu0
    %v520 = vadd.f32 %v282, %v519
    %v521 = vpop.f32.mrb[0].mxu0
    %v522 = vadd.f32 %v283, %v521
    %v523 = vpop.f32.mrb[0].mxu0
    %v524 = vpop.f32.mrb[0].mxu0
    %525 = vdwg.mxu0
    %v526 = vadd.f32 %v479, %v168
    %v527 = vadd.f32 %v481, %v172
    %v528 = vadd.f32 %v520, %v176
    %v529 = vadd.f32 %v522, %v180
    %v530 = vmul.f32 %v526, 0.5
    %v531 = vtanh.pop %v530
    %v532 = vmul.f32 %v531, 0.5
    %v533 = vadd.f32 %v532, 0.5
    %v534 = vmul.f32 %v527, 0.5
    %v535 = vtanh.pop %v534
    %v536 = vmul.f32 %v535, 0.5
    %v537 = vadd.f32 %v536, 0.5
    %v538 = vtanh.pop %v528
    %v539 = vmul.f32 %v529, 0.5
    %v540 = vtanh.pop %v539
    %v541 = vmul.f32 %v540, 0.5
    %v542 = vadd.f32 %v541, 0.5
    %v543 = vmul.f32 %v537, %v274
    %v544 = vmul.f32 %v533, %v538
    %v545 = vadd.f32 %v543, %v544
    %v546 = vtanh.pop %v545
    %v547 = vmul.f32 %v542, %v546
    %v548 = vpack.c.bf16 %v547, %v547
    %v549 = vpack.c.bf16 %v273, %v273
    %v582 = vunpack.c.l.b16 %v217
    %v583 = vunpack.c.h.b16 %v217
    %v584 = vunpack.c.l.b16 %v218
    %v585 = vunpack.c.h.b16 %v218
    %v586 = vunpack.c.l.b16 %v219
    %v587 = vunpack.c.h.b16 %v219
    %v588 = vunpack.c.l.b16 %v220
    %v589 = vunpack.c.h.b16 %v220
    %v590 = vunpack.c.l.b16 %v221
    %v591 = vunpack.c.h.b16 %v221
    %v592 = vunpack.c.l.b16 %v222
    %v593 = vunpack.c.h.b16 %v222
    %v594 = vunpack.c.l.b16 %v223
    %v595 = vunpack.c.h.b16 %v223
    %v596 = vunpack.c.l.b16 %v224
    %v597 = vunpack.c.h.b16 %v224
    %v598 = vunpack.c.l.b16 %v225
    %v599 = vunpack.c.h.b16 %v225
    %v600 = vunpack.c.l.b16 %v226
    %v601 = vunpack.c.h.b16 %v226
    %v602 = vunpack.c.l.b16 %v227
    %v603 = vunpack.c.h.b16 %v227
    %v604 = vunpack.c.l.b16 %v228
    %v605 = vunpack.c.h.b16 %v228
    %v606 = vunpack.c.l.b16 %v229
    %v607 = vunpack.c.h.b16 %v229
    %v608 = vunpack.c.l.b16 %v230
    %v609 = vunpack.c.h.b16 %v230
    %v610 = vunpack.c.l.b16 %v231
    %v611 = vunpack.c.h.b16 %v231
    %v612 = vunpack.c.l.b16 %v232
    %v613 = vunpack.c.h.b16 %v232
    %v614 = vunpack.c.l.b16 %v233
    %v615 = vunpack.c.h.b16 %v233
    %v616 = vunpack.c.l.b16 %v234
    %v617 = vunpack.c.h.b16 %v234
    %v618 = vunpack.c.l.b16 %v235
    %v619 = vunpack.c.h.b16 %v235
    %v620 = vunpack.c.l.b16 %v236
    %v621 = vunpack.c.h.b16 %v236
    %v622 = vunpack.c.l.b16 %v237
    %v623 = vunpack.c.h.b16 %v237
    %v624 = vunpack.c.l.b16 %v238
    %v625 = vunpack.c.h.b16 %v238
    %v626 = vunpack.c.l.b16 %v239
    %v627 = vunpack.c.h.b16 %v239
    %v628 = vunpack.c.l.b16 %v240
    %v629 = vunpack.c.h.b16 %v240
    %v630 = vunpack.c.l.b16 %v241
    %v631 = vunpack.c.h.b16 %v241
    %v632 = vunpack.c.l.b16 %v242
    %v633 = vunpack.c.h.b16 %v242
    %v634 = vunpack.c.l.b16 %v243
    %v635 = vunpack.c.h.b16 %v243
    %v636 = vunpack.c.l.b16 %v244
    %v637 = vunpack.c.h.b16 %v244
    %v638 = vunpack.c.l.b16 %v245
    %v639 = vunpack.c.h.b16 %v245
    %v640 = vunpack.c.l.b16 %v246
    %v641 = vunpack.c.h.b16 %v246
    %v642 = vunpack.c.l.b16 %v247
    %v643 = vunpack.c.h.b16 %v247
    %v644 = vunpack.c.l.b16 %v248
    %v645 = vunpack.c.h.b16 %v248
    %v646 = vpack.c.b16 %v586, %v582
    %v647 = vpack.c.b16 %v587, %v583
    %v648 = vpack.c.b16 %v588, %v584
    %v649 = vpack.c.b16 %v589, %v585
    %v650 = vpack.c.b16 %v594, %v590
    %v651 = vpack.c.b16 %v595, %v591
    %v652 = vpack.c.b16 %v596, %v592
    %v653 = vpack.c.b16 %v597, %v593
    %v654 = vpack.c.b16 %v602, %v598
    %v655 = vpack.c.b16 %v603, %v599
    %v656 = vpack.c.b16 %v604, %v600
    %v657 = vpack.c.b16 %v605, %v601
    %v658 = vpack.c.b16 %v610, %v606
    %v659 = vpack.c.b16 %v611, %v607
    %v660 = vpack.c.b16 %v612, %v608
    %v661 = vpack.c.b16 %v613, %v609
    %v662 = vpack.c.b16 %v618, %v614
    %v663 = vpack.c.b16 %v619, %v615
    %v664 = vpack.c.b16 %v620, %v616
    %v665 = vpack.c.b16 %v621, %v617
    %v666 = vpack.c.b16 %v626, %v622
    %v667 = vpack.c.b16 %v627, %v623
    %v668 = vpack.c.b16 %v628, %v624
    %v669 = vpack.c.b16 %v629, %v625
    %v670 = vpack.c.b16 %v634, %v630
    %v671 = vpack.c.b16 %v635, %v631
    %v672 = vpack.c.b16 %v636, %v632
    %v673 = vpack.c.b16 %v637, %v633
    %v674 = vpack.c.b16 %v642, %v638
    %v675 = vpack.c.b16 %v643, %v639
    %v676 = vpack.c.b16 %v644, %v640
    %v677 = vpack.c.b16 %v645, %v641
    %710 = vmatprep.subr.bf16.mxu0 %v647
    %711 = vmatpush1.bf16.msra.mxu0 %v646
    %712 = vmatprep.subr.bf16.mxu0 %v651
    %713 = vmatpush1.bf16.msra.mxu0 %v650
    %714 = vmatprep.subr.bf16.mxu0 %v655
    %715 = vmatpush1.bf16.msra.mxu0 %v654
    %716 = vmatprep.subr.bf16.mxu0 %v659
    %717 = vmatpush1.bf16.msra.mxu0 %v658
    %718 = vmatprep.subr.bf16.mxu0 %v663
    %719 = vmatpush1.bf16.msra.mxu0 %v662
    %720 = vmatprep.subr.bf16.mxu0 %v667
    %721 = vmatpush1.bf16.msra.mxu0 %v666
    %722 = vmatprep.subr.bf16.mxu0 %v671
    %723 = vmatpush1.bf16.msra.mxu0 %v670
    %724 = vmatprep.subr.bf16.mxu0 %v675
    %725 = vmatpush1.bf16.msra.mxu0 %v674
    %726 = vmatprep.subr.bf16.mxu0 0
    %727 = vmatpush1.bf16.msra.mxu0 0
    %728 = vmatprep.subr.bf16.mxu0 0
    %729 = vmatpush1.bf16.msra.mxu0 0
    %730 = vmatprep.subr.bf16.mxu0 0
    %731 = vmatpush1.bf16.msra.mxu0 0
    %732 = vmatprep.subr.bf16.mxu0 0
    %733 = vmatpush1.bf16.msra.mxu0 0
    %734 = vmatprep.subr.bf16.mxu0 0
    %735 = vmatpush1.bf16.msra.mxu0 0
    %736 = vmatprep.subr.bf16.mxu0 0
    %737 = vmatpush1.bf16.msra.mxu0 0
    %738 = vmatprep.subr.bf16.mxu0 0
    %739 = vmatpush1.bf16.msra.mxu0 0
    %740 = vmatprep.subr.bf16.mxu0 0
    %741 = vmatpush1.bf16.msra.mxu0 0
    %742 = vmatprep.mubr.bf16.mxu0 0
    %743 = vmatmul.mubr.bf16.gmra.mrb[0].mxu0 %v549
    %v744 = vpop.f32.mrb[0].mxu0
    %v745 = vadd.f32 0.0, %v744
    %v746 = vpop.f32.mrb[0].mxu0
    %v747 = vadd.f32 0.0, %v746
    %v748 = vpop.f32.mrb[0].mxu0
    %v749 = vpop.f32.mrb[0].mxu0
    %750 = vdwg.mxu0
    %751 = vmatprep.subr.bf16.mxu0 %v649
    %752 = vmatpush1.bf16.msra.mxu0 %v648
    %753 = vmatprep.subr.bf16.mxu0 %v653
    %754 = vmatpush1.bf16.msra.mxu0 %v652
    %755 = vmatprep.subr.bf16.mxu0 %v657
    %756 = vmatpush1.bf16.msra.mxu0 %v656
    %757 = vmatprep.subr.bf16.mxu0 %v661
    %758 = vmatpush1.bf16.msra.mxu0 %v660
    %759 = vmatprep.subr.bf16.mxu0 %v665
    %760 = vmatpush1.bf16.msra.mxu0 %v664
    %761 = vmatprep.subr.bf16.mxu0 %v669
    %762 = vmatpush1.bf16.msra.mxu0 %v668
    %763 = vmatprep.subr.bf16.mxu0 %v673
    %764 = vmatpush1.bf16.msra.mxu0 %v672
    %765 = vmatprep.subr.bf16.mxu0 %v677
    %766 = vmatpush1.bf16.msra.mxu0 %v676
    %767 = vmatprep.subr.bf16.mxu0 0
    %768 = vmatpush1.bf16.msra.mxu0 0
    %769 = vmatprep.subr.bf16.mxu0 0
    %770 = vmatpush1.bf16.msra.mxu0 0
    %771 = vmatprep.subr.bf16.mxu0 0
    %772 = vmatpush1.bf16.msra.mxu0 0
    %773 = vmatprep.subr.bf16.mxu0 0
    %774 = vmatpush1.bf16.msra.mxu0 0
    %775 = vmatprep.subr.bf16.mxu0 0
    %776 = vmatpush1.bf16.msra.mxu0 0
    %777 = vmatprep.subr.bf16.mxu0 0
    %778 = vmatpush1.bf16.msra.mxu0 0
    %779 = vmatprep.subr.bf16.mxu0 0
    %780 = vmatpush1.bf16.msra.mxu0 0
    %781 = vmatprep.subr.bf16.mxu0 0
    %782 = vmatpush1.bf16.msra.mxu0 0
    %783 = vmatprep.mubr.bf16.mxu0 0
    %784 = vmatmul.mubr.bf16.gmra.mrb[0].mxu0 %v549
    %v785 = vpop.f32.mrb[0].mxu0
    %v786 = vadd.f32 0.0, %v785
    %v787 = vpop.f32.mrb[0].mxu0
    %v788 = vadd.f32 0.0, %v787
    %v789 = vpop.f32.mrb[0].mxu0
    %v790 = vpop.f32.mrb[0].mxu0
    %791 = vdwg.mxu0
    %v824 = vunpack.c.l.b16 %v185
    %v825 = vunpack.c.h.b16 %v185
    %v826 = vunpack.c.l.b16 %v186
    %v827 = vunpack.c.h.b16 %v186
    %v828 = vunpack.c.l.b16 %v187
    %v829 = vunpack.c.h.b16 %v187
    %v830 = vunpack.c.l.b16 %v188
    %v831 = vunpack.c.h.b16 %v188
    %v832 = vunpack.c.l.b16 %v189
    %v833 = vunpack.c.h.b16 %v189
    %v834 = vunpack.c.l.b16 %v190
    %v835 = vunpack.c.h.b16 %v190
    %v836 = vunpack.c.l.b16 %v191
    %v837 = vunpack.c.h.b16 %v191
    %v838 = vunpack.c.l.b16 %v192
    %v839 = vunpack.c.h.b16 %v192
    %v840 = vunpack.c.l.b16 %v193
    %v841 = vunpack.c.h.b16 %v193
    %v842 = vunpack.c.l.b16 %v194
    %v843 = vunpack.c.h.b16 %v194
    %v844 = vunpack.c.l.b16 %v195
    %v845 = vunpack.c.h.b16 %v195
    %v846 = vunpack.c.l.b16 %v196
    %v847 = vunpack.c.h.b16 %v196
    %v848 = vunpack.c.l.b16 %v197
    %v849 = vunpack.c.h.b16 %v197
    %v850 = vunpack.c.l.b16 %v198
    %v851 = vunpack.c.h.b16 %v198
    %v852 = vunpack.c.l.b16 %v199
    %v853 = vunpack.c.h.b16 %v199
    %v854 = vunpack.c.l.b16 %v200
    %v855 = vunpack.c.h.b16 %v200
    %v856 = vunpack.c.l.b16 %v201
    %v857 = vunpack.c.h.b16 %v201
    %v858 = vunpack.c.l.b16 %v202
    %v859 = vunpack.c.h.b16 %v202
    %v860 = vunpack.c.l.b16 %v203
    %v861 = vunpack.c.h.b16 %v203
    %v862 = vunpack.c.l.b16 %v204
    %v863 = vunpack.c.h.b16 %v204
    %v864 = vunpack.c.l.b16 %v205
    %v865 = vunpack.c.h.b16 %v205
    %v866 = vunpack.c.l.b16 %v206
    %v867 = vunpack.c.h.b16 %v206
    %v868 = vunpack.c.l.b16 %v207
    %v869 = vunpack.c.h.b16 %v207
    %v870 = vunpack.c.l.b16 %v208
    %v871 = vunpack.c.h.b16 %v208
    %v872 = vunpack.c.l.b16 %v209
    %v873 = vunpack.c.h.b16 %v209
    %v874 = vunpack.c.l.b16 %v210
    %v875 = vunpack.c.h.b16 %v210
    %v876 = vunpack.c.l.b16 %v211
    %v877 = vunpack.c.h.b16 %v211
    %v878 = vunpack.c.l.b16 %v212
    %v879 = vunpack.c.h.b16 %v212
    %v880 = vunpack.c.l.b16 %v213
    %v881 = vunpack.c.h.b16 %v213
    %v882 = vunpack.c.l.b16 %v214
    %v883 = vunpack.c.h.b16 %v214
    %v884 = vunpack.c.l.b16 %v215
    %v885 = vunpack.c.h.b16 %v215
    %v886 = vunpack.c.l.b16 %v216
    %v887 = vunpack.c.h.b16 %v216
    %v888 = vpack.c.b16 %v828, %v824
    %v889 = vpack.c.b16 %v829, %v825
    %v890 = vpack.c.b16 %v830, %v826
    %v891 = vpack.c.b16 %v831, %v827
    %v892 = vpack.c.b16 %v836, %v832
    %v893 = vpack.c.b16 %v837, %v833
    %v894 = vpack.c.b16 %v838, %v834
    %v895 = vpack.c.b16 %v839, %v835
    %v896 = vpack.c.b16 %v844, %v840
    %v897 = vpack.c.b16 %v845, %v841
    %v898 = vpack.c.b16 %v846, %v842
    %v899 = vpack.c.b16 %v847, %v843
    %v900 = vpack.c.b16 %v852, %v848
    %v901 = vpack.c.b16 %v853, %v849
    %v902 = vpack.c.b16 %v854, %v850
    %v903 = vpack.c.b16 %v855, %v851
    %v904 = vpack.c.b16 %v860, %v856
    %v905 = vpack.c.b16 %v861, %v857
    %v906 = vpack.c.b16 %v862, %v858
    %v907 = vpack.c.b16 %v863, %v859
    %v908 = vpack.c.b16 %v868, %v864
    %v909 = vpack.c.b16 %v869, %v865
    %v910 = vpack.c.b16 %v870, %v866
    %v911 = vpack.c.b16 %v871, %v867
    %v912 = vpack.c.b16 %v876, %v872
    %v913 = vpack.c.b16 %v877, %v873
    %v914 = vpack.c.b16 %v878, %v874
    %v915 = vpack.c.b16 %v879, %v875
    %v916 = vpack.c.b16 %v884, %v880
    %v917 = vpack.c.b16 %v885, %v881
    %v918 = vpack.c.b16 %v886, %v882
    %v919 = vpack.c.b16 %v887, %v883
    %952 = vmatprep.subr.bf16.mxu0 %v889
    %953 = vmatpush1.bf16.msra.mxu0 %v888
    %954 = vmatprep.subr.bf16.mxu0 %v893
    %955 = vmatpush1.bf16.msra.mxu0 %v892
    %956 = vmatprep.subr.bf16.mxu0 %v897
    %957 = vmatpush1.bf16.msra.mxu0 %v896
    %958 = vmatprep.subr.bf16.mxu0 %v901
    %959 = vmatpush1.bf16.msra.mxu0 %v900
    %960 = vmatprep.subr.bf16.mxu0 %v905
    %961 = vmatpush1.bf16.msra.mxu0 %v904
    %962 = vmatprep.subr.bf16.mxu0 %v909
    %963 = vmatpush1.bf16.msra.mxu0 %v908
    %964 = vmatprep.subr.bf16.mxu0 %v913
    %965 = vmatpush1.bf16.msra.mxu0 %v912
    %966 = vmatprep.subr.bf16.mxu0 %v917
    %967 = vmatpush1.bf16.msra.mxu0 %v916
    %968 = vmatprep.subr.bf16.mxu0 0
    %969 = vmatpush1.bf16.msra.mxu0 0
    %970 = vmatprep.subr.bf16.mxu0 0
    %971 = vmatpush1.bf16.msra.mxu0 0
    %972 = vmatprep.subr.bf16.mxu0 0
    %973 = vmatpush1.bf16.msra.mxu0 0
    %974 = vmatprep.subr.bf16.mxu0 0
    %975 = vmatpush1.bf16.msra.mxu0 0
    %976 = vmatprep.subr.bf16.mxu0 0
    %977 = vmatpush1.bf16.msra.mxu0 0
    %978 = vmatprep.subr.bf16.mxu0 0
    %979 = vmatpush1.bf16.msra.mxu0 0
    %980 = vmatprep.subr.bf16.mxu0 0
    %981 = vmatpush1.bf16.msra.mxu0 0
    %982 = vmatprep.subr.bf16.mxu0 0
    %983 = vmatpush1.bf16.msra.mxu0 0
    %984 = vmatprep.mubr.bf16.mxu0 0
    %985 = vmatmul.mubr.bf16.gmra.mrb[0].mxu0 %v548
    %v986 = vpop.f32.mrb[0].mxu0
    %v987 = vadd.f32 %v745, %v986
    %v988 = vpop.f32.mrb[0].mxu0
    %v989 = vadd.f32 %v747, %v988
    %v990 = vpop.f32.mrb[0].mxu0
    %v991 = vpop.f32.mrb[0].mxu0
    %992 = vdwg.mxu0
    %993 = vmatprep.subr.bf16.mxu0 %v891
    %994 = vmatpush1.bf16.msra.mxu0 %v890
    %995 = vmatprep.subr.bf16.mxu0 %v895
    %996 = vmatpush1.bf16.msra.mxu0 %v894
    %997 = vmatprep.subr.bf16.mxu0 %v899
    %998 = vmatpush1.bf16.msra.mxu0 %v898
    %999 = vmatprep.subr.bf16.mxu0 %v903
    %1000 = vmatpush1.bf16.msra.mxu0 %v902
    %1001 = vmatprep.subr.bf16.mxu0 %v907
    %1002 = vmatpush1.bf16.msra.mxu0 %v906
    %1003 = vmatprep.subr.bf16.mxu0 %v911
    %1004 = vmatpush1.bf16.msra.mxu0 %v910
    %1005 = vmatprep.subr.bf16.mxu0 %v915
    %1006 = vmatpush1.bf16.msra.mxu0 %v914
    %1007 = vmatprep.subr.bf16.mxu0 %v919
    %1008 = vmatpush1.bf16.msra.mxu0 %v918
    %1009 = vmatprep.subr.bf16.mxu0 0
    %1010 = vmatpush1.bf16.msra.mxu0 0
    %1011 = vmatprep.subr.bf16.mxu0 0
    %1012 = vmatpush1.bf16.msra.mxu0 0
    %1013 = vmatprep.subr.bf16.mxu0 0
    %1014 = vmatpush1.bf16.msra.mxu0 0
    %1015 = vmatprep.subr.bf16.mxu0 0
    %1016 = vmatpush1.bf16.msra.mxu0 0
    %1017 = vmatprep.subr.bf16.mxu0 0
    %1018 = vmatpush1.bf16.msra.mxu0 0
    %1019 = vmatprep.subr.bf16.mxu0 0
    %1020 = vmatpush1.bf16.msra.mxu0 0
    %1021 = vmatprep.subr.bf16.mxu0 0
    %1022 = vmatpush1.bf16.msra.mxu0 0
    %1023 = vmatprep.subr.bf16.mxu0 0
    %1024 = vmatpush1.bf16.msra.mxu0 0
    %1025 = vmatprep.mubr.bf16.mxu0 0
    %1026 = vmatmul.mubr.bf16.gmra.mrb[0].mxu0 %v548
    %v1027 = vpop.f32.mrb[0].mxu0
    %v1028 = vadd.f32 %v786, %v1027
    %v1029 = vpop.f32.mrb[0].mxu0
    %v1030 = vadd.f32 %v788, %v1029
    %v1031 = vpop.f32.mrb[0].mxu0
    %v1032 = vpop.f32.mrb[0].mxu0
    %1033 = vdwg.mxu0
    %v1034 = vadd.f32 %v987, %v254
    %v1035 = vadd.f32 %v989, %v258
    %v1036 = vadd.f32 %v1028, %v262
    %v1037 = vadd.f32 %v1030, %v266
    %v1038 = vmul.f32 %v1034, 0.5
    %v1039 = vtanh.pop %v1038
    %v1040 = vmul.f32 %v1039, 0.5
    %v1041 = vadd.f32 %v1040, 0.5
    %v1042 = vmul.f32 %v1035, 0.5
    %v1043 = vtanh.pop %v1042
    %v1044 = vmul.f32 %v1043, 0.5
    %v1045 = vadd.f32 %v1044, 0.5
    %v1046 = vtanh.pop %v1036
    %v1047 = vmul.f32 %v1037, 0.5
    %v1048 = vtanh.pop %v1047
    %v1049 = vmul.f32 %v1048, 0.5
    %v1050 = vadd.f32 %v1049, 0.5
    %v1051 = vmul.f32 %v1045, %v276
    %v1052 = vmul.f32 %v1041, %v1046
    %v1053 = vadd.f32 %v1051, %v1052
    %v1054 = vtanh.pop %v1053
    %v1055 = vmul.f32 %v1050, %v1054
    %s1056 = scalar_lea.vmem [#allocation4], 16
    %v1057 = vld [vmem:[%s1056] sm:$0xff]
    %v1058 = vld [vmem:[%s1056 + $0x8] sm:$0xff]
    %v1059 = vunpack.c.l.bf16 %v1057
    %v1060 = vunpack.c.h.bf16 %v1057
    %v1061 = vunpack.c.l.bf16 %v1058
    %v1062 = vunpack.c.h.bf16 %v1058
    %1063 = vmatprep.subr.bf16.mxu0 %v381
    %1064 = vmatpush1.bf16.msra.mxu0 %v380
    %1065 = vmatprep.subr.bf16.mxu0 %v385
    %1066 = vmatpush1.bf16.msra.mxu0 %v384
    %1067 = vmatprep.subr.bf16.mxu0 %v389
    %1068 = vmatpush1.bf16.msra.mxu0 %v388
    %1069 = vmatprep.subr.bf16.mxu0 %v393
    %1070 = vmatpush1.bf16.msra.mxu0 %v392
    %1071 = vmatprep.subr.bf16.mxu0 %v397
    %1072 = vmatpush1.bf16.msra.mxu0 %v396
    %1073 = vmatprep.subr.bf16.mxu0 %v401
    %1074 = vmatpush1.bf16.msra.mxu0 %v400
    %1075 = vmatprep.subr.bf16.mxu0 %v405
    %1076 = vmatpush1.bf16.msra.mxu0 %v404
    %1077 = vmatprep.subr.bf16.mxu0 %v409
    %1078 = vmatpush1.bf16.msra.mxu0 %v408
    %1079 = vmatprep.subr.bf16.mxu0 0
    %1080 = vmatpush1.bf16.msra.mxu0 0
    %1081 = vmatprep.subr.bf16.mxu0 0
    %1082 = vmatpush1.bf16.msra.mxu0 0
    %1083 = vmatprep.subr.bf16.mxu0 0
    %1084 = vmatpush1.bf16.msra.mxu0 0
    %1085 = vmatprep.subr.bf16.mxu0 0
    %1086 = vmatpush1.bf16.msra.mxu0 0
    %1087 = vmatprep.subr.bf16.mxu0 0
    %1088 = vmatpush1.bf16.msra.mxu0 0
    %1089 = vmatprep.subr.bf16.mxu0 0
    %1090 = vmatpush1.bf16.msra.mxu0 0
    %1091 = vmatprep.subr.bf16.mxu0 0
    %1092 = vmatpush1.bf16.msra.mxu0 0
    %1093 = vmatprep.subr.bf16.mxu0 0
    %1094 = vmatpush1.bf16.msra.mxu0 0
    %1095 = vmatprep.mubr.bf16.mxu0 0
    %1096 = vmatmul.mubr.bf16.gmra.mrb[0].mxu0 %v548
    %v1097 = vpop.f32.mrb[0].mxu0
    %v1098 = vadd.f32 %v1059, %v1097
    %v1099 = vpop.f32.mrb[0].mxu0
    %v1100 = vadd.f32 %v1060, %v1099
    %v1101 = vpop.f32.mrb[0].mxu0
    %v1102 = vpop.f32.mrb[0].mxu0
    %1103 = vdwg.mxu0
    %1104 = vmatprep.subr.bf16.mxu0 %v383
    %1105 = vmatpush1.bf16.msra.mxu0 %v382
    %1106 = vmatprep.subr.bf16.mxu0 %v387
    %1107 = vmatpush1.bf16.msra.mxu0 %v386
    %1108 = vmatprep.subr.bf16.mxu0 %v391
    %1109 = vmatpush1.bf16.msra.mxu0 %v390
    %1110 = vmatprep.subr.bf16.mxu0 %v395
    %1111 = vmatpush1.bf16.msra.mxu0 %v394
    %1112 = vmatprep.subr.bf16.mxu0 %v399
    %1113 = vmatpush1.bf16.msra.mxu0 %v398
    %1114 = vmatprep.subr.bf16.mxu0 %v403
    %1115 = vmatpush1.bf16.msra.mxu0 %v402
    %1116 = vmatprep.subr.bf16.mxu0 %v407
    %1117 = vmatpush1.bf16.msra.mxu0 %v406
    %1118 = vmatprep.subr.bf16.mxu0 %v411
    %1119 = vmatpush1.bf16.msra.mxu0 %v410
    %1120 = vmatprep.subr.bf16.mxu0 0
    %1121 = vmatpush1.bf16.msra.mxu0 0
    %1122 = vmatprep.subr.bf16.mxu0 0
    %1123 = vmatpush1.bf16.msra.mxu0 0
    %1124 = vmatprep.subr.bf16.mxu0 0
    %1125 = vmatpush1.bf16.msra.mxu0 0
    %1126 = vmatprep.subr.bf16.mxu0 0
    %1127 = vmatpush1.bf16.msra.mxu0 0
    %1128 = vmatprep.subr.bf16.mxu0 0
    %1129 = vmatpush1.bf16.msra.mxu0 0
    %1130 = vmatprep.subr.bf16.mxu0 0
    %1131 = vmatpush1.bf16.msra.mxu0 0
    %1132 = vmatprep.subr.bf16.mxu0 0
    %1133 = vmatpush1.bf16.msra.mxu0 0
    %1134 = vmatprep.subr.bf16.mxu0 0
    %1135 = vmatpush1.bf16.msra.mxu0 0
    %1136 = vmatprep.mubr.bf16.mxu0 0
    %1137 = vmatmul.mubr.bf16.gmra.mrb[0].mxu0 %v548
    %v1138 = vpop.f32.mrb[0].mxu0
    %v1139 = vadd.f32 %v1061, %v1138
    %v1140 = vpop.f32.mrb[0].mxu0
    %v1141 = vadd.f32 %v1062, %v1140
    %v1142 = vpop.f32.mrb[0].mxu0
    %v1143 = vpop.f32.mrb[0].mxu0
    %1144 = vdwg.mxu0
    %v1145 = vadd.f32 %v1098, %v168
    %v1146 = vadd.f32 %v1100, %v172
    %v1147 = vadd.f32 %v1139, %v176
    %v1148 = vadd.f32 %v1141, %v180
    %v1149 = vmul.f32 %v1145, 0.5
    %v1150 = vtanh.pop %v1149
    %v1151 = vmul.f32 %v1150, 0.5
    %v1152 = vadd.f32 %v1151, 0.5
    %v1153 = vmul.f32 %v1146, 0.5
    %v1154 = vtanh.pop %v1153
    %v1155 = vmul.f32 %v1154, 0.5
    %v1156 = vadd.f32 %v1155, 0.5
    %v1157 = vtanh.pop %v1147
    %v1158 = vmul.f32 %v1148, 0.5
    %v1159 = vtanh.pop %v1158
    %v1160 = vmul.f32 %v1159, 0.5
    %v1161 = vadd.f32 %v1160, 0.5
    %v1162 = vmul.f32 %v1156, %v545
    %v1163 = vmul.f32 %v1152, %v1157
    %v1164 = vadd.f32 %v1162, %v1163
    %v1165 = vtanh.pop %v1164
    %v1166 = vmul.f32 %v1161, %v1165
    %v1167 = vpack.c.bf16 %v1166, %v1166
    %v1168 = vpack.c.bf16 %v1055, %v1055
    %1169 = vmatprep.subr.bf16.mxu0 %v647
    %1170 = vmatpush1.bf16.msra.mxu0 %v646
    %1171 = vmatprep.subr.bf16.mxu0 %v651
    %1172 = vmatpush1.bf16.msra.mxu0 %v650
    %1173 = vmatprep.subr.bf16.mxu0 %v655
    %1174 = vmatpush1.bf16.msra.mxu0 %v654
    %1175 = vmatprep.subr.bf16.mxu0 %v659
    %1176 = vmatpush1.bf16.msra.mxu0 %v658
    %1177 = vmatprep.subr.bf16.mxu0 %v663
    %1178 = vmatpush1.bf16.msra.mxu0 %v662
    %1179 = vmatprep.subr.bf16.mxu0 %v667
    %1180 = vmatpush1.bf16.msra.mxu0 %v666
    %1181 = vmatprep.subr.bf16.mxu0 %v671
    %1182 = vmatpush1.bf16.msra.mxu0 %v670
    %1183 = vmatprep.subr.bf16.mxu0 %v675
    %1184 = vmatpush1.bf16.msra.mxu0 %v674
    %1185 = vmatprep.subr.bf16.mxu0 0
    %1186 = vmatpush1.bf16.msra.mxu0 0
    %1187 = vmatprep.subr.bf16.mxu0 0
    %1188 = vmatpush1.bf16.msra.mxu0 0
    %1189 = vmatprep.subr.bf16.mxu0 0
    %1190 = vmatpush1.bf16.msra.mxu0 0
    %1191 = vmatprep.subr.bf16.mxu0 0
    %1192 = vmatpush1.bf16.msra.mxu0 0
    %1193 = vmatprep.subr.bf16.mxu0 0
    %1194 = vmatpush1.bf16.msra.mxu0 0
    %1195 = vmatprep.subr.bf16.mxu0 0
    %1196 = vmatpush1.bf16.msra.mxu0 0
    %1197 = vmatprep.subr.bf16.mxu0 0
    %1198 = vmatpush1.bf16.msra.mxu0 0
    %1199 = vmatprep.subr.bf16.mxu0 0
    %1200 = vmatpush1.bf16.msra.mxu0 0
    %1201 = vmatprep.mubr.bf16.mxu0 0
    %1202 = vmatmul.mubr.bf16.gmra.mrb[0].mxu0 %v1168
    %v1203 = vpop.f32.mrb[0].mxu0
    %v1204 = vadd.f32 0.0, %v1203
    %v1205 = vpop.f32.mrb[0].mxu0
    %v1206 = vadd.f32 0.0, %v1205
    %v1207 = vpop.f32.mrb[0].mxu0
    %v1208 = vpop.f32.mrb[0].mxu0
    %1209 = vdwg.mxu0
    %1210 = vmatprep.subr.bf16.mxu0 %v649
    %1211 = vmatpush1.bf16.msra.mxu0 %v648
    %1212 = vmatprep.subr.bf16.mxu0 %v653
    %1213 = vmatpush1.bf16.msra.mxu0 %v652
    %1214 = vmatprep.subr.bf16.mxu0 %v657
    %1215 = vmatpush1.bf16.msra.mxu0 %v656
    %1216 = vmatprep.subr.bf16.mxu0 %v661
    %1217 = vmatpush1.bf16.msra.mxu0 %v660
    %1218 = vmatprep.subr.bf16.mxu0 %v665
    %1219 = vmatpush1.bf16.msra.mxu0 %v664
    %1220 = vmatprep.subr.bf16.mxu0 %v669
    %1221 = vmatpush1.bf16.msra.mxu0 %v668
    %1222 = vmatprep.subr.bf16.mxu0 %v673
    %1223 = vmatpush1.bf16.msra.mxu0 %v672
    %1224 = vmatprep.subr.bf16.mxu0 %v677
    %1225 = vmatpush1.bf16.msra.mxu0 %v676
    %1226 = vmatprep.subr.bf16.mxu0 0
    %1227 = vmatpush1.bf16.msra.mxu0 0
    %1228 = vmatprep.subr.bf16.mxu0 0
    %1229 = vmatpush1.bf16.msra.mxu0 0
    %1230 = vmatprep.subr.bf16.mxu0 0
    %1231 = vmatpush1.bf16.msra.mxu0 0
    %1232 = vmatprep.subr.bf16.mxu0 0
    %1233 = vmatpush1.bf16.msra.mxu0 0
    %1234 = vmatprep.subr.bf16.mxu0 0
    %1235 = vmatpush1.bf16.msra.mxu0 0
    %1236 = vmatprep.subr.bf16.mxu0 0
    %1237 = vmatpush1.bf16.msra.mxu0 0
    %1238 = vmatprep.subr.bf16.mxu0 0
    %1239 = vmatpush1.bf16.msra.mxu0 0
    %1240 = vmatprep.subr.bf16.mxu0 0
    %1241 = vmatpush1.bf16.msra.mxu0 0
    %1242 = vmatprep.mubr.bf16.mxu0 0
    %1243 = vmatmul.mubr.bf16.gmra.mrb[0].mxu0 %v1168
    %v1244 = vpop.f32.mrb[0].mxu0
    %v1245 = vadd.f32 0.0, %v1244
    %v1246 = vpop.f32.mrb[0].mxu0
    %v1247 = vadd.f32 0.0, %v1246
    %v1248 = vpop.f32.mrb[0].mxu0
    %v1249 = vpop.f32.mrb[0].mxu0
    %1250 = vdwg.mxu0
    %1251 = vmatprep.subr.bf16.mxu0 %v889
    %1252 = vmatpush1.bf16.msra.mxu0 %v888
    %1253 = vmatprep.subr.bf16.mxu0 %v893
    %1254 = vmatpush1.bf16.msra.mxu0 %v892
    %1255 = vmatprep.subr.bf16.mxu0 %v897
    %1256 = vmatpush1.bf16.msra.mxu0 %v896
    %1257 = vmatprep.subr.bf16.mxu0 %v901
    %1258 = vmatpush1.bf16.msra.mxu0 %v900
    %1259 = vmatprep.subr.bf16.mxu0 %v905
    %1260 = vmatpush1.bf16.msra.mxu0 %v904
    %1261 = vmatprep.subr.bf16.mxu0 %v909
    %1262 = vmatpush1.bf16.msra.mxu0 %v908
    %1263 = vmatprep.subr.bf16.mxu0 %v913
    %1264 = vmatpush1.bf16.msra.mxu0 %v912
    %1265 = vmatprep.subr.bf16.mxu0 %v917
    %1266 = vmatpush1.bf16.msra.mxu0 %v916
    %1267 = vmatprep.subr.bf16.mxu0 0
    %1268 = vmatpush1.bf16.msra.mxu0 0
    %1269 = vmatprep.subr.bf16.mxu0 0
    %1270 = vmatpush1.bf16.msra.mxu0 0
    %1271 = vmatprep.subr.bf16.mxu0 0
    %1272 = vmatpush1.bf16.msra.mxu0 0
    %1273 = vmatprep.subr.bf16.mxu0 0
    %1274 = vmatpush1.bf16.msra.mxu0 0
    %1275 = vmatprep.subr.bf16.mxu0 0
    %1276 = vmatpush1.bf16.msra.mxu0 0
    %1277 = vmatprep.subr.bf16.mxu0 0
    %1278 = vmatpush1.bf16.msra.mxu0 0
    %1279 = vmatprep.subr.bf16.mxu0 0
    %1280 = vmatpush1.bf16.msra.mxu0 0
    %1281 = vmatprep.subr.bf16.mxu0 0
    %1282 = vmatpush1.bf16.msra.mxu0 0
    %1283 = vmatprep.mubr.bf16.mxu0 0
    %1284 = vmatmul.mubr.bf16.gmra.mrb[0].mxu0 %v1167
    %v1285 = vpop.f32.mrb[0].mxu0
    %v1286 = vadd.f32 %v1204, %v1285
    %v1287 = vpop.f32.mrb[0].mxu0
    %v1288 = vadd.f32 %v1206, %v1287
    %v1289 = vpop.f32.mrb[0].mxu0
    %v1290 = vpop.f32.mrb[0].mxu0
    %1291 = vdwg.mxu0
    %1292 = vmatprep.subr.bf16.mxu0 %v891
    %1293 = vmatpush1.bf16.msra.mxu0 %v890
    %1294 = vmatprep.subr.bf16.mxu0 %v895
    %1295 = vmatpush1.bf16.msra.mxu0 %v894
    %1296 = vmatprep.subr.bf16.mxu0 %v899
    %1297 = vmatpush1.bf16.msra.mxu0 %v898
    %1298 = vmatprep.subr.bf16.mxu0 %v903
    %1299 = vmatpush1.bf16.msra.mxu0 %v902
    %1300 = vmatprep.subr.bf16.mxu0 %v907
    %1301 = vmatpush1.bf16.msra.mxu0 %v906
    %1302 = vmatprep.subr.bf16.mxu0 %v911
    %1303 = vmatpush1.bf16.msra.mxu0 %v910
    %1304 = vmatprep.subr.bf16.mxu0 %v915
    %1305 = vmatpush1.bf16.msra.mxu0 %v914
    %1306 = vmatprep.subr.bf16.mxu0 %v919
    %1307 = vmatpush1.bf16.msra.mxu0 %v918
    %1308 = vmatprep.subr.bf16.mxu0 0
    %1309 = vmatpush1.bf16.msra.mxu0 0
    %1310 = vmatprep.subr.bf16.mxu0 0
    %1311 = vmatpush1.bf16.msra.mxu0 0
    %1312 = vmatprep.subr.bf16.mxu0 0
    %1313 = vmatpush1.bf16.msra.mxu0 0
    %1314 = vmatprep.subr.bf16.mxu0 0
    %1315 = vmatpush1.bf16.msra.mxu0 0
    %1316 = vmatprep.subr.bf16.mxu0 0
    %1317 = vmatpush1.bf16.msra.mxu0 0
    %1318 = vmatprep.subr.bf16.mxu0 0
    %1319 = vmatpush1.bf16.msra.mxu0 0
    %1320 = vmatprep.subr.bf16.mxu0 0
    %1321 = vmatpush1.bf16.msra.mxu0 0
    %1322 = vmatprep.subr.bf16.mxu0 0
    %1323 = vmatpush1.bf16.msra.mxu0 0
    %1324 = vmatprep.mubr.bf16.mxu0 0
    %1325 = vmatmul.mubr.bf16.gmra.mrb[0].mxu0 %v1167
    %v1326 = vpop.f32.mrb[0].mxu0
    %v1327 = vadd.f32 %v1245, %v1326
    %v1328 = vpop.f32.mrb[0].mxu0
    %v1329 = vadd.f32 %v1247, %v1328
    %v1330 = vpop.f32.mrb[0].mxu0
    %v1331 = vpop.f32.mrb[0].mxu0
    %1332 = vdwg.mxu0
    %v1333 = vadd.f32 %v1286, %v254
    %v1334 = vadd.f32 %v1288, %v258
    %v1335 = vadd.f32 %v1327, %v262
    %v1336 = vadd.f32 %v1329, %v266
    %v1337 = vmul.f32 %v1333, 0.5
    %v1338 = vtanh.pop %v1337
    %v1339 = vmul.f32 %v1338, 0.5
    %v1340 = vadd.f32 %v1339, 0.5
    %v1341 = vmul.f32 %v1334, 0.5
    %v1342 = vtanh.pop %v1341
    %v1343 = vmul.f32 %v1342, 0.5
    %v1344 = vadd.f32 %v1343, 0.5
    %v1345 = vtanh.pop %v1335
    %v1346 = vmul.f32 %v1336, 0.5
    %v1347 = vtanh.pop %v1346
    %v1348 = vmul.f32 %v1347, 0.5
    %v1349 = vadd.f32 %v1348, 0.5
    %v1350 = vmul.f32 %v1344, %v1053
    %v1351 = vmul.f32 %v1340, %v1345
    %v1352 = vadd.f32 %v1350, %v1351
    %v1353 = vtanh.pop %v1352
    %v1354 = vmul.f32 %v1349, %v1353
    %s1355 = scalar_lea.vmem [#allocation4], 32
    %v1356 = vld [vmem:[%s1355] sm:$0xff]
    %v1357 = vld [vmem:[%s1355 + $0x8] sm:$0xff]
    %v1358 = vunpack.c.l.bf16 %v1356
    %v1359 = vunpack.c.h.bf16 %v1356
    %v1360 = vunpack.c.l.bf16 %v1357
    %v1361 = vunpack.c.h.bf16 %v1357
    %1362 = vmatprep.subr.bf16.mxu0 %v381
    %1363 = vmatpush1.bf16.msra.mxu0 %v380
    %1364 = vmatprep.subr.bf16.mxu0 %v385
    %1365 = vmatpush1.bf16.msra.mxu0 %v384
    %1366 = vmatprep.subr.bf16.mxu0 %v389
    %1367 = vmatpush1.bf16.msra.mxu0 %v388
    %1368 = vmatprep.subr.bf16.mxu0 %v393
    %1369 = vmatpush1.bf16.msra.mxu0 %v392
    %1370 = vmatprep.subr.bf16.mxu0 %v397
    %1371 = vmatpush1.bf16.msra.mxu0 %v396
    %1372 = vmatprep.subr.bf16.mxu0 %v401
    %1373 = vmatpush1.bf16.msra.mxu0 %v400
    %1374 = vmatprep.subr.bf16.mxu0 %v405
    %1375 = vmatpush1.bf16.msra.mxu0 %v404
    %1376 = vmatprep.subr.bf16.mxu0 %v409
    %1377 = vmatpush1.bf16.msra.mxu0 %v408
    %1378 = vmatprep.subr.bf16.mxu0 0
    %1379 = vmatpush1.bf16.msra.mxu0 0
    %1380 = vmatprep.subr.bf16.mxu0 0
    %1381 = vmatpush1.bf16.msra.mxu0 0
    %1382 = vmatprep.subr.bf16.mxu0 0
    %1383 = vmatpush1.bf16.msra.mxu0 0
    %1384 = vmatprep.subr.bf16.mxu0 0
    %1385 = vmatpush1.bf16.msra.mxu0 0
    %1386 = vmatprep.subr.bf16.mxu0 0
    %1387 = vmatpush1.bf16.msra.mxu0 0
    %1388 = vmatprep.subr.bf16.mxu0 0
    %1389 = vmatpush1.bf16.msra.mxu0 0
    %1390 = vmatprep.subr.bf16.mxu0 0
    %1391 = vmatpush1.bf16.msra.mxu0 0
    %1392 = vmatprep.subr.bf16.mxu0 0
    %1393 = vmatpush1.bf16.msra.mxu0 0
    %1394 = vmatprep.mubr.bf16.mxu0 0
    %1395 = vmatmul.mubr.bf16.gmra.mrb[0].mxu0 %v1167
    %v1396 = vpop.f32.mrb[0].mxu0
    %v1397 = vadd.f32 %v1358, %v1396
    %v1398 = vpop.f32.mrb[0].mxu0
    %v1399 = vadd.f32 %v1359, %v1398
    %v1400 = vpop.f32.mrb[0].mxu0
    %v1401 = vpop.f32.mrb[0].mxu0
    %1402 = vdwg.mxu0
    %1403 = vmatprep.subr.bf16.mxu0 %v383
    %1404 = vmatpush1.bf16.msra.mxu0 %v382
    %1405 = vmatprep.subr.bf16.mxu0 %v387
    %1406 = vmatpush1.bf16.msra.mxu0 %v386
    %1407 = vmatprep.subr.bf16.mxu0 %v391
    %1408 = vmatpush1.bf16.msra.mxu0 %v390
    %1409 = vmatprep.subr.bf16.mxu0 %v395
    %1410 = vmatpush1.bf16.msra.mxu0 %v394
    %1411 = vmatprep.subr.bf16.mxu0 %v399
    %1412 = vmatpush1.bf16.msra.mxu0 %v398
    %1413 = vmatprep.subr.bf16.mxu0 %v403
    %1414 = vmatpush1.bf16.msra.mxu0 %v402
    %1415 = vmatprep.subr.bf16.mxu0 %v407
    %1416 = vmatpush1.bf16.msra.mxu0 %v406
    %1417 = vmatprep.subr.bf16.mxu0 %v411
    %1418 = vmatpush1.bf16.msra.mxu0 %v410
    %1419 = vmatprep.subr.bf16.mxu0 0
    %1420 = vmatpush1.bf16.msra.mxu0 0
    %1421 = vmatprep.subr.bf16.mxu0 0
    %1422 = vmatpush1.bf16.msra.mxu0 0
    %1423 = vmatprep.subr.bf16.mxu0 0
    %1424 = vmatpush1.bf16.msra.mxu0 0
    %1425 = vmatprep.subr.bf16.mxu0 0
    %1426 = vmatpush1.bf16.msra.mxu0 0
    %1427 = vmatprep.subr.bf16.mxu0 0
    %1428 = vmatpush1.bf16.msra.mxu0 0
    %1429 = vmatprep.subr.bf16.mxu0 0
    %1430 = vmatpush1.bf16.msra.mxu0 0
    %1431 = vmatprep.subr.bf16.mxu0 0
    %1432 = vmatpush1.bf16.msra.mxu0 0
    %1433 = vmatprep.subr.bf16.mxu0 0
    %1434 = vmatpush1.bf16.msra.mxu0 0
    %1435 = vmatprep.mubr.bf16.mxu0 0
    %1436 = vmatmul.mubr.bf16.gmra.mrb[0].mxu0 %v1167
    %v1437 = vpop.f32.mrb[0].mxu0
    %v1438 = vadd.f32 %v1360, %v1437
    %v1439 = vpop.f32.mrb[0].mxu0
    %v1440 = vadd.f32 %v1361, %v1439
    %v1441 = vpop.f32.mrb[0].mxu0
    %v1442 = vpop.f32.mrb[0].mxu0
    %1443 = vdwg.mxu0
    %v1444 = vadd.f32 %v1397, %v168
    %v1445 = vadd.f32 %v1399, %v172
    %v1446 = vadd.f32 %v1438, %v176
    %v1447 = vadd.f32 %v1440, %v180
    %v1448 = vmul.f32 %v1444, 0.5
    %v1449 = vtanh.pop %v1448
    %v1450 = vmul.f32 %v1449, 0.5
    %v1451 = vadd.f32 %v1450, 0.5
    %v1452 = vmul.f32 %v1445, 0.5
    %v1453 = vtanh.pop %v1452
    %v1454 = vmul.f32 %v1453, 0.5
    %v1455 = vadd.f32 %v1454, 0.5
    %v1456 = vtanh.pop %v1446
    %v1457 = vmul.f32 %v1447, 0.5
    %v1458 = vtanh.pop %v1457
    %v1459 = vmul.f32 %v1458, 0.5
    %v1460 = vadd.f32 %v1459, 0.5
    %v1461 = vmul.f32 %v1455, %v1164
    %v1462 = vmul.f32 %v1451, %v1456
    %v1463 = vadd.f32 %v1461, %v1462
    %v1464 = vtanh.pop %v1463
    %v1465 = vmul.f32 %v1460, %v1464
    %v1466 = vpack.c.bf16 %v1465, %v1465
    %v1467 = vpack.c.bf16 %v1354, %v1354
    %1468 = vmatprep.subr.bf16.mxu0 %v647
    %1469 = vmatpush1.bf16.msra.mxu0 %v646
    %1470 = vmatprep.subr.bf16.mxu0 %v651
    %1471 = vmatpush1.bf16.msra.mxu0 %v650
    %1472 = vmatprep.subr.bf16.mxu0 %v655
    %1473 = vmatpush1.bf16.msra.mxu0 %v654
    %1474 = vmatprep.subr.bf16.mxu0 %v659
    %1475 = vmatpush1.bf16.msra.mxu0 %v658
    %1476 = vmatprep.subr.bf16.mxu0 %v663
    %1477 = vmatpush1.bf16.msra.mxu0 %v662
    %1478 = vmatprep.subr.bf16.mxu0 %v667
    %1479 = vmatpush1.bf16.msra.mxu0 %v666
    %1480 = vmatprep.subr.bf16.mxu0 %v671
    %1481 = vmatpush1.bf16.msra.mxu0 %v670
    %1482 = vmatprep.subr.bf16.mxu0 %v675
    %1483 = vmatpush1.bf16.msra.mxu0 %v674
    %1484 = vmatprep.subr.bf16.mxu0 0
    %1485 = vmatpush1.bf16.msra.mxu0 0
    %1486 = vmatprep.subr.bf16.mxu0 0
    %1487 = vmatpush1.bf16.msra.mxu0 0
    %1488 = vmatprep.subr.bf16.mxu0 0
    %1489 = vmatpush1.bf16.msra.mxu0 0
    %1490 = vmatprep.subr.bf16.mxu0 0
    %1491 = vmatpush1.bf16.msra.mxu0 0
    %1492 = vmatprep.subr.bf16.mxu0 0
    %1493 = vmatpush1.bf16.msra.mxu0 0
    %1494 = vmatprep.subr.bf16.mxu0 0
    %1495 = vmatpush1.bf16.msra.mxu0 0
    %1496 = vmatprep.subr.bf16.mxu0 0
    %1497 = vmatpush1.bf16.msra.mxu0 0
    %1498 = vmatprep.subr.bf16.mxu0 0
    %1499 = vmatpush1.bf16.msra.mxu0 0
    %1500 = vmatprep.mubr.bf16.mxu0 0
    %1501 = vmatmul.mubr.bf16.gmra.mrb[0].mxu0 %v1467
    %v1502 = vpop.f32.mrb[0].mxu0
    %v1503 = vadd.f32 0.0, %v1502
    %v1504 = vpop.f32.mrb[0].mxu0
    %v1505 = vadd.f32 0.0, %v1504
    %v1506 = vpop.f32.mrb[0].mxu0
    %v1507 = vpop.f32.mrb[0].mxu0
    %1508 = vdwg.mxu0
    %1509 = vmatprep.subr.bf16.mxu0 %v649
    %1510 = vmatpush1.bf16.msra.mxu0 %v648
    %1511 = vmatprep.subr.bf16.mxu0 %v653
    %1512 = vmatpush1.bf16.msra.mxu0 %v652
    %1513 = vmatprep.subr.bf16.mxu0 %v657
    %1514 = vmatpush1.bf16.msra.mxu0 %v656
    %1515 = vmatprep.subr.bf16.mxu0 %v661
    %1516 = vmatpush1.bf16.msra.mxu0 %v660
    %1517 = vmatprep.subr.bf16.mxu0 %v665
    %1518 = vmatpush1.bf16.msra.mxu0 %v664
    %1519 = vmatprep.subr.bf16.mxu0 %v669
    %1520 = vmatpush1.bf16.msra.mxu0 %v668
    %1521 = vmatprep.subr.bf16.mxu0 %v673
    %1522 = vmatpush1.bf16.msra.mxu0 %v672
    %1523 = vmatprep.subr.bf16.mxu0 %v677
    %1524 = vmatpush1.bf16.msra.mxu0 %v676
    %1525 = vmatprep.subr.bf16.mxu0 0
    %1526 = vmatpush1.bf16.msra.mxu0 0
    %1527 = vmatprep.subr.bf16.mxu0 0
    %1528 = vmatpush1.bf16.msra.mxu0 0
    %1529 = vmatprep.subr.bf16.mxu0 0
    %1530 = vmatpush1.bf16.msra.mxu0 0
    %1531 = vmatprep.subr.bf16.mxu0 0
    %1532 = vmatpush1.bf16.msra.mxu0 0
    %1533 = vmatprep.subr.bf16.mxu0 0
    %1534 = vmatpush1.bf16.msra.mxu0 0
    %1535 = vmatprep.subr.bf16.mxu0 0
    %1536 = vmatpush1.bf16.msra.mxu0 0
    %1537 = vmatprep.subr.bf16.mxu0 0
    %1538 = vmatpush1.bf16.msra.mxu0 0
    %1539 = vmatprep.subr.bf16.mxu0 0
    %1540 = vmatpush1.bf16.msra.mxu0 0
    %1541 = vmatprep.mubr.bf16.mxu0 0
    %1542 = vmatmul.mubr.bf16.gmra.mrb[0].mxu0 %v1467
    %v1543 = vpop.f32.mrb[0].mxu0
    %v1544 = vadd.f32 0.0, %v1543
    %v1545 = vpop.f32.mrb[0].mxu0
    %v1546 = vadd.f32 0.0, %v1545
    %v1547 = vpop.f32.mrb[0].mxu0
    %v1548 = vpop.f32.mrb[0].mxu0
    %1549 = vdwg.mxu0
    %1550 = vmatprep.subr.bf16.mxu0 %v889
    %1551 = vmatpush1.bf16.msra.mxu0 %v888
    %1552 = vmatprep.subr.bf16.mxu0 %v893
    %1553 = vmatpush1.bf16.msra.mxu0 %v892
    %1554 = vmatprep.subr.bf16.mxu0 %v897
    %1555 = vmatpush1.bf16.msra.mxu0 %v896
    %1556 = vmatprep.subr.bf16.mxu0 %v901
    %1557 = vmatpush1.bf16.msra.mxu0 %v900
    %1558 = vmatprep.subr.bf16.mxu0 %v905
    %1559 = vmatpush1.bf16.msra.mxu0 %v904
    %1560 = vmatprep.subr.bf16.mxu0 %v909
    %1561 = vmatpush1.bf16.msra.mxu0 %v908
    %1562 = vmatprep.subr.bf16.mxu0 %v913
    %1563 = vmatpush1.bf16.msra.mxu0 %v912
    %1564 = vmatprep.subr.bf16.mxu0 %v917
    %1565 = vmatpush1.bf16.msra.mxu0 %v916
    %1566 = vmatprep.subr.bf16.mxu0 0
    %1567 = vmatpush1.bf16.msra.mxu0 0
    %1568 = vmatprep.subr.bf16.mxu0 0
    %1569 = vmatpush1.bf16.msra.mxu0 0
    %1570 = vmatprep.subr.bf16.mxu0 0
    %1571 = vmatpush1.bf16.msra.mxu0 0
    %1572 = vmatprep.subr.bf16.mxu0 0
    %1573 = vmatpush1.bf16.msra.mxu0 0
    %1574 = vmatprep.subr.bf16.mxu0 0
    %1575 = vmatpush1.bf16.msra.mxu0 0
    %1576 = vmatprep.subr.bf16.mxu0 0
    %1577 = vmatpush1.bf16.msra.mxu0 0
    %1578 = vmatprep.subr.bf16.mxu0 0
    %1579 = vmatpush1.bf16.msra.mxu0 0
    %1580 = vmatprep.subr.bf16.mxu0 0
    %1581 = vmatpush1.bf16.msra.mxu0 0
    %1582 = vmatprep.mubr.bf16.mxu0 0
    %1583 = vmatmul.mubr.bf16.gmra.mrb[0].mxu0 %v1466
    %v1584 = vpop.f32.mrb[0].mxu0
    %v1585 = vadd.f32 %v1503, %v1584
    %v1586 = vpop.f32.mrb[0].mxu0
    %v1587 = vadd.f32 %v1505, %v1586
    %v1588 = vpop.f32.mrb[0].mxu0
    %v1589 = vpop.f32.mrb[0].mxu0
    %1590 = vdwg.mxu0
    %1591 = vmatprep.subr.bf16.mxu0 %v891
    %1592 = vmatpush1.bf16.msra.mxu0 %v890
    %1593 = vmatprep.subr.bf16.mxu0 %v895
    %1594 = vmatpush1.bf16.msra.mxu0 %v894
    %1595 = vmatprep.subr.bf16.mxu0 %v899
    %1596 = vmatpush1.bf16.msra.mxu0 %v898
    %1597 = vmatprep.subr.bf16.mxu0 %v903
    %1598 = vmatpush1.bf16.msra.mxu0 %v902
    %1599 = vmatprep.subr.bf16.mxu0 %v907
    %1600 = vmatpush1.bf16.msra.mxu0 %v906
    %1601 = vmatprep.subr.bf16.mxu0 %v911
    %1602 = vmatpush1.bf16.msra.mxu0 %v910
    %1603 = vmatprep.subr.bf16.mxu0 %v915
    %1604 = vmatpush1.bf16.msra.mxu0 %v914
    %1605 = vmatprep.subr.bf16.mxu0 %v919
    %1606 = vmatpush1.bf16.msra.mxu0 %v918
    %1607 = vmatprep.subr.bf16.mxu0 0
    %1608 = vmatpush1.bf16.msra.mxu0 0
    %1609 = vmatprep.subr.bf16.mxu0 0
    %1610 = vmatpush1.bf16.msra.mxu0 0
    %1611 = vmatprep.subr.bf16.mxu0 0
    %1612 = vmatpush1.bf16.msra.mxu0 0
    %1613 = vmatprep.subr.bf16.mxu0 0
    %1614 = vmatpush1.bf16.msra.mxu0 0
    %1615 = vmatprep.subr.bf16.mxu0 0
    %1616 = vmatpush1.bf16.msra.mxu0 0
    %1617 = vmatprep.subr.bf16.mxu0 0
    %1618 = vmatpush1.bf16.msra.mxu0 0
    %1619 = vmatprep.subr.bf16.mxu0 0
    %1620 = vmatpush1.bf16.msra.mxu0 0
    %1621 = vmatprep.subr.bf16.mxu0 0
    %1622 = vmatpush1.bf16.msra.mxu0 0
    %1623 = vmatprep.mubr.bf16.mxu0 0
    %1624 = vmatmul.mubr.bf16.gmra.mrb[0].mxu0 %v1466
    %v1625 = vpop.f32.mrb[0].mxu0
    %v1626 = vadd.f32 %v1544, %v1625
    %v1627 = vpop.f32.mrb[0].mxu0
    %v1628 = vadd.f32 %v1546, %v1627
    %v1629 = vpop.f32.mrb[0].mxu0
    %v1630 = vpop.f32.mrb[0].mxu0
    %1631 = vdwg.mxu0
    %v1632 = vadd.f32 %v1585, %v254
    %v1633 = vadd.f32 %v1587, %v258
    %v1634 = vadd.f32 %v1626, %v262
    %v1635 = vadd.f32 %v1628, %v266
    %v1636 = vmul.f32 %v1632, 0.5
    %v1637 = vtanh.pop %v1636
    %v1638 = vmul.f32 %v1637, 0.5
    %v1639 = vadd.f32 %v1638, 0.5
    %v1640 = vmul.f32 %v1633, 0.5
    %v1641 = vtanh.pop %v1640
    %v1642 = vmul.f32 %v1641, 0.5
    %v1643 = vadd.f32 %v1642, 0.5
    %v1644 = vtanh.pop %v1634
    %v1645 = vmul.f32 %v1635, 0.5
    %v1646 = vtanh.pop %v1645
    %v1647 = vmul.f32 %v1646, 0.5
    %v1648 = vadd.f32 %v1647, 0.5
    %v1649 = vmul.f32 %v1643, %v1352
    %v1650 = vmul.f32 %v1639, %v1644
    %v1651 = vadd.f32 %v1649, %v1650
    %v1652 = vtanh.pop %v1651
    %v1653 = vmul.f32 %v1648, %v1652
    %s1654 = scalar_lea.vmem [#allocation4], 48
    %v1655 = vld [vmem:[%s1654] sm:$0xff]
    %v1656 = vld [vmem:[%s1654 + $0x8] sm:$0xff]
    %v1657 = vunpack.c.l.bf16 %v1655
    %v1658 = vunpack.c.h.bf16 %v1655
    %v1659 = vunpack.c.l.bf16 %v1656
    %v1660 = vunpack.c.h.bf16 %v1656
    %1661 = vmatprep.subr.bf16.mxu0 %v381
    %1662 = vmatpush1.bf16.msra.mxu0 %v380
    %1663 = vmatprep.subr.bf16.mxu0 %v385
    %1664 = vmatpush1.bf16.msra.mxu0 %v384
    %1665 = vmatprep.subr.bf16.mxu0 %v389
    %1666 = vmatpush1.bf16.msra.mxu0 %v388
    %1667 = vmatprep.subr.bf16.mxu0 %v393
    %1668 = vmatpush1.bf16.msra.mxu0 %v392
    %1669 = vmatprep.subr.bf16.mxu0 %v397
    %1670 = vmatpush1.bf16.msra.mxu0 %v396
    %1671 = vmatprep.subr.bf16.mxu0 %v401
    %1672 = vmatpush1.bf16.msra.mxu0 %v400
    %1673 = vmatprep.subr.bf16.mxu0 %v405
    %1674 = vmatpush1.bf16.msra.mxu0 %v404
    %1675 = vmatprep.subr.bf16.mxu0 %v409
    %1676 = vmatpush1.bf16.msra.mxu0 %v408
    %1677 = vmatprep.subr.bf16.mxu0 0
    %1678 = vmatpush1.bf16.msra.mxu0 0
    %1679 = vmatprep.subr.bf16.mxu0 0
    %1680 = vmatpush1.bf16.msra.mxu0 0
    %1681 = vmatprep.subr.bf16.mxu0 0
    %1682 = vmatpush1.bf16.msra.mxu0 0
    %1683 = vmatprep.subr.bf16.mxu0 0
    %1684 = vmatpush1.bf16.msra.mxu0 0
    %1685 = vmatprep.subr.bf16.mxu0 0
    %1686 = vmatpush1.bf16.msra.mxu0 0
    %1687 = vmatprep.subr.bf16.mxu0 0
    %1688 = vmatpush1.bf16.msra.mxu0 0
    %1689 = vmatprep.subr.bf16.mxu0 0
    %1690 = vmatpush1.bf16.msra.mxu0 0
    %1691 = vmatprep.subr.bf16.mxu0 0
    %1692 = vmatpush1.bf16.msra.mxu0 0
    %1693 = vmatprep.mubr.bf16.mxu0 0
    %1694 = vmatmul.mubr.bf16.gmra.mrb[0].mxu0 %v1466
    %v1695 = vpop.f32.mrb[0].mxu0
    %v1696 = vadd.f32 %v1657, %v1695
    %v1697 = vpop.f32.mrb[0].mxu0
    %v1698 = vadd.f32 %v1658, %v1697
    %v1699 = vpop.f32.mrb[0].mxu0
    %v1700 = vpop.f32.mrb[0].mxu0
    %1701 = vdwg.mxu0
    %1702 = vmatprep.subr.bf16.mxu0 %v383
    %1703 = vmatpush1.bf16.msra.mxu0 %v382
    %1704 = vmatprep.subr.bf16.mxu0 %v387
    %1705 = vmatpush1.bf16.msra.mxu0 %v386
    %1706 = vmatprep.subr.bf16.mxu0 %v391
    %1707 = vmatpush1.bf16.msra.mxu0 %v390
    %1708 = vmatprep.subr.bf16.mxu0 %v395
    %1709 = vmatpush1.bf16.msra.mxu0 %v394
    %1710 = vmatprep.subr.bf16.mxu0 %v399
    %1711 = vmatpush1.bf16.msra.mxu0 %v398
    %1712 = vmatprep.subr.bf16.mxu0 %v403
    %1713 = vmatpush1.bf16.msra.mxu0 %v402
    %1714 = vmatprep.subr.bf16.mxu0 %v407
    %1715 = vmatpush1.bf16.msra.mxu0 %v406
    %1716 = vmatprep.subr.bf16.mxu0 %v411
    %1717 = vmatpush1.bf16.msra.mxu0 %v410
    %1718 = vmatprep.subr.bf16.mxu0 0
    %1719 = vmatpush1.bf16.msra.mxu0 0
    %1720 = vmatprep.subr.bf16.mxu0 0
    %1721 = vmatpush1.bf16.msra.mxu0 0
    %1722 = vmatprep.subr.bf16.mxu0 0
    %1723 = vmatpush1.bf16.msra.mxu0 0
    %1724 = vmatprep.subr.bf16.mxu0 0
    %1725 = vmatpush1.bf16.msra.mxu0 0
    %1726 = vmatprep.subr.bf16.mxu0 0
    %1727 = vmatpush1.bf16.msra.mxu0 0
    %1728 = vmatprep.subr.bf16.mxu0 0
    %1729 = vmatpush1.bf16.msra.mxu0 0
    %1730 = vmatprep.subr.bf16.mxu0 0
    %1731 = vmatpush1.bf16.msra.mxu0 0
    %1732 = vmatprep.subr.bf16.mxu0 0
    %1733 = vmatpush1.bf16.msra.mxu0 0
    %1734 = vmatprep.mubr.bf16.mxu0 0
    %1735 = vmatmul.mubr.bf16.gmra.mrb[0].mxu0 %v1466
    %v1736 = vpop.f32.mrb[0].mxu0
    %v1737 = vadd.f32 %v1659, %v1736
    %v1738 = vpop.f32.mrb[0].mxu0
    %v1739 = vadd.f32 %v1660, %v1738
    %v1740 = vpop.f32.mrb[0].mxu0
    %v1741 = vpop.f32.mrb[0].mxu0
    %1742 = vdwg.mxu0
    %v1743 = vadd.f32 %v1696, %v168
    %v1744 = vadd.f32 %v1698, %v172
    %v1745 = vadd.f32 %v1737, %v176
    %v1746 = vadd.f32 %v1739, %v180
    %v1747 = vmul.f32 %v1743, 0.5
    %v1748 = vtanh.pop %v1747
    %v1749 = vmul.f32 %v1748, 0.5
    %v1750 = vadd.f32 %v1749, 0.5
    %v1751 = vmul.f32 %v1744, 0.5
    %v1752 = vtanh.pop %v1751
    %v1753 = vmul.f32 %v1752, 0.5
    %v1754 = vadd.f32 %v1753, 0.5
    %v1755 = vtanh.pop %v1745
    %v1756 = vmul.f32 %v1746, 0.5
    %v1757 = vtanh.pop %v1756
    %v1758 = vmul.f32 %v1757, 0.5
    %v1759 = vadd.f32 %v1758, 0.5
    %v1760 = vmul.f32 %v1754, %v1463
    %v1761 = vmul.f32 %v1750, %v1755
    %v1762 = vadd.f32 %v1760, %v1761
    %v1763 = vtanh.pop %v1762
    %v1764 = vmul.f32 %v1759, %v1763
    %v1765 = vpack.c.bf16 %v1764, %v1764
    %v1766 = vpack.c.bf16 %v1653, %v1653
    %1767 = vmatprep.subr.bf16.mxu0 %v647
    %1768 = vmatpush1.bf16.msra.mxu0 %v646
    %1769 = vmatprep.subr.bf16.mxu0 %v651
    %1770 = vmatpush1.bf16.msra.mxu0 %v650
    %1771 = vmatprep.subr.bf16.mxu0 %v655
    %1772 = vmatpush1.bf16.msra.mxu0 %v654
    %1773 = vmatprep.subr.bf16.mxu0 %v659
    %1774 = vmatpush1.bf16.msra.mxu0 %v658
    %1775 = vmatprep.subr.bf16.mxu0 %v663
    %1776 = vmatpush1.bf16.msra.mxu0 %v662
    %1777 = vmatprep.subr.bf16.mxu0 %v667
    %1778 = vmatpush1.bf16.msra.mxu0 %v666
    %1779 = vmatprep.subr.bf16.mxu0 %v671
    %1780 = vmatpush1.bf16.msra.mxu0 %v670
    %1781 = vmatprep.subr.bf16.mxu0 %v675
    %1782 = vmatpush1.bf16.msra.mxu0 %v674
    %1783 = vmatprep.subr.bf16.mxu0 0
    %1784 = vmatpush1.bf16.msra.mxu0 0
    %1785 = vmatprep.subr.bf16.mxu0 0
    %1786 = vmatpush1.bf16.msra.mxu0 0
    %1787 = vmatprep.subr.bf16.mxu0 0
    %1788 = vmatpush1.bf16.msra.mxu0 0
    %1789 = vmatprep.subr.bf16.mxu0 0
    %1790 = vmatpush1.bf16.msra.mxu0 0
    %1791 = vmatprep.subr.bf16.mxu0 0
    %1792 = vmatpush1.bf16.msra.mxu0 0
    %1793 = vmatprep.subr.bf16.mxu0 0
    %1794 = vmatpush1.bf16.msra.mxu0 0
    %1795 = vmatprep.subr.bf16.mxu0 0
    %1796 = vmatpush1.bf16.msra.mxu0 0
    %1797 = vmatprep.subr.bf16.mxu0 0
    %1798 = vmatpush1.bf16.msra.mxu0 0
    %1799 = vmatprep.mubr.bf16.mxu0 0
    %1800 = vmatmul.mubr.bf16.gmra.mrb[0].mxu0 %v1766
    %v1801 = vpop.f32.mrb[0].mxu0
    %v1802 = vadd.f32 0.0, %v1801
    %v1803 = vpop.f32.mrb[0].mxu0
    %v1804 = vadd.f32 0.0, %v1803
    %v1805 = vpop.f32.mrb[0].mxu0
    %v1806 = vpop.f32.mrb[0].mxu0
    %1807 = vdwg.mxu0
    %1808 = vmatprep.subr.bf16.mxu0 %v649
    %1809 = vmatpush1.bf16.msra.mxu0 %v648
    %1810 = vmatprep.subr.bf16.mxu0 %v653
    %1811 = vmatpush1.bf16.msra.mxu0 %v652
    %1812 = vmatprep.subr.bf16.mxu0 %v657
    %1813 = vmatpush1.bf16.msra.mxu0 %v656
    %1814 = vmatprep.subr.bf16.mxu0 %v661
    %1815 = vmatpush1.bf16.msra.mxu0 %v660
    %1816 = vmatprep.subr.bf16.mxu0 %v665
    %1817 = vmatpush1.bf16.msra.mxu0 %v664
    %1818 = vmatprep.subr.bf16.mxu0 %v669
    %1819 = vmatpush1.bf16.msra.mxu0 %v668
    %1820 = vmatprep.subr.bf16.mxu0 %v673
    %1821 = vmatpush1.bf16.msra.mxu0 %v672
    %1822 = vmatprep.subr.bf16.mxu0 %v677
    %1823 = vmatpush1.bf16.msra.mxu0 %v676
    %1824 = vmatprep.subr.bf16.mxu0 0
    %1825 = vmatpush1.bf16.msra.mxu0 0
    %1826 = vmatprep.subr.bf16.mxu0 0
    %1827 = vmatpush1.bf16.msra.mxu0 0
    %1828 = vmatprep.subr.bf16.mxu0 0
    %1829 = vmatpush1.bf16.msra.mxu0 0
    %1830 = vmatprep.subr.bf16.mxu0 0
    %1831 = vmatpush1.bf16.msra.mxu0 0
    %1832 = vmatprep.subr.bf16.mxu0 0
    %1833 = vmatpush1.bf16.msra.mxu0 0
    %1834 = vmatprep.subr.bf16.mxu0 0
    %1835 = vmatpush1.bf16.msra.mxu0 0
    %1836 = vmatprep.subr.bf16.mxu0 0
    %1837 = vmatpush1.bf16.msra.mxu0 0
    %1838 = vmatprep.subr.bf16.mxu0 0
    %1839 = vmatpush1.bf16.msra.mxu0 0
    %1840 = vmatprep.mubr.bf16.mxu0 0
    %1841 = vmatmul.mubr.bf16.gmra.mrb[0].mxu0 %v1766
    %v1842 = vpop.f32.mrb[0].mxu0
    %v1843 = vadd.f32 0.0, %v1842
    %v1844 = vpop.f32.mrb[0].mxu0
    %v1845 = vadd.f32 0.0, %v1844
    %v1846 = vpop.f32.mrb[0].mxu0
    %v1847 = vpop.f32.mrb[0].mxu0
    %1848 = vdwg.mxu0
    %1849 = vmatprep.subr.bf16.mxu0 %v889
    %1850 = vmatpush1.bf16.msra.mxu0 %v888
    %1851 = vmatprep.subr.bf16.mxu0 %v893
    %1852 = vmatpush1.bf16.msra.mxu0 %v892
    %1853 = vmatprep.subr.bf16.mxu0 %v897
    %1854 = vmatpush1.bf16.msra.mxu0 %v896
    %1855 = vmatprep.subr.bf16.mxu0 %v901
    %1856 = vmatpush1.bf16.msra.mxu0 %v900
    %1857 = vmatprep.subr.bf16.mxu0 %v905
    %1858 = vmatpush1.bf16.msra.mxu0 %v904
    %1859 = vmatprep.subr.bf16.mxu0 %v909
    %1860 = vmatpush1.bf16.msra.mxu0 %v908
    %1861 = vmatprep.subr.bf16.mxu0 %v913
    %1862 = vmatpush1.bf16.msra.mxu0 %v912
    %1863 = vmatprep.subr.bf16.mxu0 %v917
    %1864 = vmatpush1.bf16.msra.mxu0 %v916
    %1865 = vmatprep.subr.bf16.mxu0 0
    %1866 = vmatpush1.bf16.msra.mxu0 0
    %1867 = vmatprep.subr.bf16.mxu0 0
    %1868 = vmatpush1.bf16.msra.mxu0 0
    %1869 = vmatprep.subr.bf16.mxu0 0
    %1870 = vmatpush1.bf16.msra.mxu0 0
    %1871 = vmatprep.subr.bf16.mxu0 0
    %1872 = vmatpush1.bf16.msra.mxu0 0
    %1873 = vmatprep.subr.bf16.mxu0 0
    %1874 = vmatpush1.bf16.msra.mxu0 0
    %1875 = vmatprep.subr.bf16.mxu0 0
    %1876 = vmatpush1.bf16.msra.mxu0 0
    %1877 = vmatprep.subr.bf16.mxu0 0
    %1878 = vmatpush1.bf16.msra.mxu0 0
    %1879 = vmatprep.subr.bf16.mxu0 0
    %1880 = vmatpush1.bf16.msra.mxu0 0
    %1881 = vmatprep.mubr.bf16.mxu0 0
    %1882 = vmatmul.mubr.bf16.gmra.mrb[0].mxu0 %v1765
    %v1883 = vpop.f32.mrb[0].mxu0
    %v1884 = vadd.f32 %v1802, %v1883
    %v1885 = vpop.f32.mrb[0].mxu0
    %v1886 = vadd.f32 %v1804, %v1885
    %v1887 = vpop.f32.mrb[0].mxu0
    %v1888 = vpop.f32.mrb[0].mxu0
    %1889 = vdwg.mxu0
    %1890 = vmatprep.subr.bf16.mxu0 %v891
    %1891 = vmatpush1.bf16.msra.mxu0 %v890
    %1892 = vmatprep.subr.bf16.mxu0 %v895
    %1893 = vmatpush1.bf16.msra.mxu0 %v894
    %1894 = vmatprep.subr.bf16.mxu0 %v899
    %1895 = vmatpush1.bf16.msra.mxu0 %v898
    %1896 = vmatprep.subr.bf16.mxu0 %v903
    %1897 = vmatpush1.bf16.msra.mxu0 %v902
    %1898 = vmatprep.subr.bf16.mxu0 %v907
    %1899 = vmatpush1.bf16.msra.mxu0 %v906
    %1900 = vmatprep.subr.bf16.mxu0 %v911
    %1901 = vmatpush1.bf16.msra.mxu0 %v910
    %1902 = vmatprep.subr.bf16.mxu0 %v915
    %1903 = vmatpush1.bf16.msra.mxu0 %v914
    %1904 = vmatprep.subr.bf16.mxu0 %v919
    %1905 = vmatpush1.bf16.msra.mxu0 %v918
    %1906 = vmatprep.subr.bf16.mxu0 0
    %1907 = vmatpush1.bf16.msra.mxu0 0
    %1908 = vmatprep.subr.bf16.mxu0 0
    %1909 = vmatpush1.bf16.msra.mxu0 0
    %1910 = vmatprep.subr.bf16.mxu0 0
    %1911 = vmatpush1.bf16.msra.mxu0 0
    %1912 = vmatprep.subr.bf16.mxu0 0
    %1913 = vmatpush1.bf16.msra.mxu0 0
    %1914 = vmatprep.subr.bf16.mxu0 0
    %1915 = vmatpush1.bf16.msra.mxu0 0
    %1916 = vmatprep.subr.bf16.mxu0 0
    %1917 = vmatpush1.bf16.msra.mxu0 0
    %1918 = vmatprep.subr.bf16.mxu0 0
    %1919 = vmatpush1.bf16.msra.mxu0 0
    %1920 = vmatprep.subr.bf16.mxu0 0
    %1921 = vmatpush1.bf16.msra.mxu0 0
    %1922 = vmatprep.mubr.bf16.mxu0 0
    %1923 = vmatmul.mubr.bf16.gmra.mrb[0].mxu0 %v1765
    %v1924 = vpop.f32.mrb[0].mxu0
    %v1925 = vadd.f32 %v1843, %v1924
    %v1926 = vpop.f32.mrb[0].mxu0
    %v1927 = vadd.f32 %v1845, %v1926
    %v1928 = vpop.f32.mrb[0].mxu0
    %v1929 = vpop.f32.mrb[0].mxu0
    %1930 = vdwg.mxu0
    %v1931 = vadd.f32 %v1884, %v254
    %v1932 = vadd.f32 %v1886, %v258
    %v1933 = vadd.f32 %v1925, %v262
    %v1934 = vadd.f32 %v1927, %v266
    %v1935 = vmul.f32 %v1931, 0.5
    %v1936 = vtanh.pop %v1935
    %v1937 = vmul.f32 %v1936, 0.5
    %v1938 = vadd.f32 %v1937, 0.5
    %v1939 = vmul.f32 %v1932, 0.5
    %v1940 = vtanh.pop %v1939
    %v1941 = vmul.f32 %v1940, 0.5
    %v1942 = vadd.f32 %v1941, 0.5
    %v1943 = vtanh.pop %v1933
    %v1944 = vmul.f32 %v1934, 0.5
    %v1945 = vtanh.pop %v1944
    %v1946 = vmul.f32 %v1945, 0.5
    %v1947 = vadd.f32 %v1946, 0.5
    %v1948 = vmul.f32 %v1942, %v1651
    %v1949 = vmul.f32 %v1938, %v1943
    %v1950 = vadd.f32 %v1948, %v1949
    %v1951 = vtanh.pop %v1950
    %v1952 = vmul.f32 %v1947, %v1951
    %s1953 = scalar_lea.vmem [#allocation4], 64
    %v1954 = vld [vmem:[%s1953] sm:$0xff]
    %v1955 = vld [vmem:[%s1953 + $0x8] sm:$0xff]
    %v1956 = vunpack.c.l.bf16 %v1954
    %v1957 = vunpack.c.h.bf16 %v1954
    %v1958 = vunpack.c.l.bf16 %v1955
    %v1959 = vunpack.c.h.bf16 %v1955
    %1960 = vmatprep.subr.bf16.mxu0 %v381
    %1961 = vmatpush1.bf16.msra.mxu0 %v380
    %1962 = vmatprep.subr.bf16.mxu0 %v385
    %1963 = vmatpush1.bf16.msra.mxu0 %v384
    %1964 = vmatprep.subr.bf16.mxu0 %v389
    %1965 = vmatpush1.bf16.msra.mxu0 %v388
    %1966 = vmatprep.subr.bf16.mxu0 %v393
    %1967 = vmatpush1.bf16.msra.mxu0 %v392
    %1968 = vmatprep.subr.bf16.mxu0 %v397
    %1969 = vmatpush1.bf16.msra.mxu0 %v396
    %1970 = vmatprep.subr.bf16.mxu0 %v401
    %1971 = vmatpush1.bf16.msra.mxu0 %v400
    %1972 = vmatprep.subr.bf16.mxu0 %v405
    %1973 = vmatpush1.bf16.msra.mxu0 %v404
    %1974 = vmatprep.subr.bf16.mxu0 %v409
    %1975 = vmatpush1.bf16.msra.mxu0 %v408
    %1976 = vmatprep.subr.bf16.mxu0 0
    %1977 = vmatpush1.bf16.msra.mxu0 0
    %1978 = vmatprep.subr.bf16.mxu0 0
    %1979 = vmatpush1.bf16.msra.mxu0 0
    %1980 = vmatprep.subr.bf16.mxu0 0
    %1981 = vmatpush1.bf16.msra.mxu0 0
    %1982 = vmatprep.subr.bf16.mxu0 0
    %1983 = vmatpush1.bf16.msra.mxu0 0
    %1984 = vmatprep.subr.bf16.mxu0 0
    %1985 = vmatpush1.bf16.msra.mxu0 0
    %1986 = vmatprep.subr.bf16.mxu0 0
    %1987 = vmatpush1.bf16.msra.mxu0 0
    %1988 = vmatprep.subr.bf16.mxu0 0
    %1989 = vmatpush1.bf16.msra.mxu0 0
    %1990 = vmatprep.subr.bf16.mxu0 0
    %1991 = vmatpush1.bf16.msra.mxu0 0
    %1992 = vmatprep.mubr.bf16.mxu0 0
    %1993 = vmatmul.mubr.bf16.gmra.mrb[0].mxu0 %v1765
    %v1994 = vpop.f32.mrb[0].mxu0
    %v1995 = vadd.f32 %v1956, %v1994
    %v1996 = vpop.f32.mrb[0].mxu0
    %v1997 = vadd.f32 %v1957, %v1996
    %v1998 = vpop.f32.mrb[0].mxu0
    %v1999 = vpop.f32.mrb[0].mxu0
    %2000 = vdwg.mxu0
    %2001 = vmatprep.subr.bf16.mxu0 %v383
    %2002 = vmatpush1.bf16.msra.mxu0 %v382
    %2003 = vmatprep.subr.bf16.mxu0 %v387
    %2004 = vmatpush1.bf16.msra.mxu0 %v386
    %2005 = vmatprep.subr.bf16.mxu0 %v391
    %2006 = vmatpush1.bf16.msra.mxu0 %v390
    %2007 = vmatprep.subr.bf16.mxu0 %v395
    %2008 = vmatpush1.bf16.msra.mxu0 %v394
    %2009 = vmatprep.subr.bf16.mxu0 %v399
    %2010 = vmatpush1.bf16.msra.mxu0 %v398
    %2011 = vmatprep.subr.bf16.mxu0 %v403
    %2012 = vmatpush1.bf16.msra.mxu0 %v402
    %2013 = vmatprep.subr.bf16.mxu0 %v407
    %2014 = vmatpush1.bf16.msra.mxu0 %v406
    %2015 = vmatprep.subr.bf16.mxu0 %v411
    %2016 = vmatpush1.bf16.msra.mxu0 %v410
    %2017 = vmatprep.subr.bf16.mxu0 0
    %2018 = vmatpush1.bf16.msra.mxu0 0
    %2019 = vmatprep.subr.bf16.mxu0 0
    %2020 = vmatpush1.bf16.msra.mxu0 0
    %2021 = vmatprep.subr.bf16.mxu0 0
    %2022 = vmatpush1.bf16.msra.mxu0 0
    %2023 = vmatprep.subr.bf16.mxu0 0
    %2024 = vmatpush1.bf16.msra.mxu0 0
    %2025 = vmatprep.subr.bf16.mxu0 0
    %2026 = vmatpush1.bf16.msra.mxu0 0
    %2027 = vmatprep.subr.bf16.mxu0 0
    %2028 = vmatpush1.bf16.msra.mxu0 0
    %2029 = vmatprep.subr.bf16.mxu0 0
    %2030 = vmatpush1.bf16.msra.mxu0 0
    %2031 = vmatprep.subr.bf16.mxu0 0
    %2032 = vmatpush1.bf16.msra.mxu0 0
    %2033 = vmatprep.mubr.bf16.mxu0 0
    %2034 = vmatmul.mubr.bf16.gmra.mrb[0].mxu0 %v1765
    %v2035 = vpop.f32.mrb[0].mxu0
    %v2036 = vadd.f32 %v1958, %v2035
    %v2037 = vpop.f32.mrb[0].mxu0
    %v2038 = vadd.f32 %v1959, %v2037
    %v2039 = vpop.f32.mrb[0].mxu0
    %v2040 = vpop.f32.mrb[0].mxu0
    %2041 = vdwg.mxu0
    %v2042 = vadd.f32 %v1995, %v168
    %v2043 = vadd.f32 %v1997, %v172
    %v2044 = vadd.f32 %v2036, %v176
    %v2045 = vadd.f32 %v2038, %v180
    %v2046 = vmul.f32 %v2042, 0.5
    %v2047 = vtanh.pop %v2046
    %v2048 = vmul.f32 %v2047, 0.5
    %v2049 = vadd.f32 %v2048, 0.5
    %v2050 = vmul.f32 %v2043, 0.5
    %v2051 = vtanh.pop %v2050
    %v2052 = vmul.f32 %v2051, 0.5
    %v2053 = vadd.f32 %v2052, 0.5
    %v2054 = vtanh.pop %v2044
    %v2055 = vmul.f32 %v2045, 0.5
    %v2056 = vtanh.pop %v2055
    %v2057 = vmul.f32 %v2056, 0.5
    %v2058 = vadd.f32 %v2057, 0.5
    %v2059 = vmul.f32 %v2053, %v1762
    %v2060 = vmul.f32 %v2049, %v2054
    %v2061 = vadd.f32 %v2059, %v2060
    %v2062 = vtanh.pop %v2061
    %v2063 = vmul.f32 %v2058, %v2062
    %v2064 = vpack.c.bf16 %v2063, %v2063
    %v2065 = vpack.c.bf16 %v1952, %v1952
    %2066 = vmatprep.subr.bf16.mxu0 %v647
    %2067 = vmatpush1.bf16.msra.mxu0 %v646
    %2068 = vmatprep.subr.bf16.mxu0 %v651
    %2069 = vmatpush1.bf16.msra.mxu0 %v650
    %2070 = vmatprep.subr.bf16.mxu0 %v655
    %2071 = vmatpush1.bf16.msra.mxu0 %v654
    %2072 = vmatprep.subr.bf16.mxu0 %v659
    %2073 = vmatpush1.bf16.msra.mxu0 %v658
    %2074 = vmatprep.subr.bf16.mxu0 %v663
    %2075 = vmatpush1.bf16.msra.mxu0 %v662
    %2076 = vmatprep.subr.bf16.mxu0 %v667
    %2077 = vmatpush1.bf16.msra.mxu0 %v666
    %2078 = vmatprep.subr.bf16.mxu0 %v671
    %2079 = vmatpush1.bf16.msra.mxu0 %v670
    %2080 = vmatprep.subr.bf16.mxu0 %v675
    %2081 = vmatpush1.bf16.msra.mxu0 %v674
    %2082 = vmatprep.subr.bf16.mxu0 0
    %2083 = vmatpush1.bf16.msra.mxu0 0
    %2084 = vmatprep.subr.bf16.mxu0 0
    %2085 = vmatpush1.bf16.msra.mxu0 0
    %2086 = vmatprep.subr.bf16.mxu0 0
    %2087 = vmatpush1.bf16.msra.mxu0 0
    %2088 = vmatprep.subr.bf16.mxu0 0
    %2089 = vmatpush1.bf16.msra.mxu0 0
    %2090 = vmatprep.subr.bf16.mxu0 0
    %2091 = vmatpush1.bf16.msra.mxu0 0
    %2092 = vmatprep.subr.bf16.mxu0 0
    %2093 = vmatpush1.bf16.msra.mxu0 0
    %2094 = vmatprep.subr.bf16.mxu0 0
    %2095 = vmatpush1.bf16.msra.mxu0 0
    %2096 = vmatprep.subr.bf16.mxu0 0
    %2097 = vmatpush1.bf16.msra.mxu0 0
    %2098 = vmatprep.mubr.bf16.mxu0 0
    %2099 = vmatmul.mubr.bf16.gmra.mrb[0].mxu0 %v2065
    %v2100 = vpop.f32.mrb[0].mxu0
    %v2101 = vadd.f32 0.0, %v2100
    %v2102 = vpop.f32.mrb[0].mxu0
    %v2103 = vadd.f32 0.0, %v2102
    %v2104 = vpop.f32.mrb[0].mxu0
    %v2105 = vpop.f32.mrb[0].mxu0
    %2106 = vdwg.mxu0
    %2107 = vmatprep.subr.bf16.mxu0 %v649
    %2108 = vmatpush1.bf16.msra.mxu0 %v648
    %2109 = vmatprep.subr.bf16.mxu0 %v653
    %2110 = vmatpush1.bf16.msra.mxu0 %v652
    %2111 = vmatprep.subr.bf16.mxu0 %v657
    %2112 = vmatpush1.bf16.msra.mxu0 %v656
    %2113 = vmatprep.subr.bf16.mxu0 %v661
    %2114 = vmatpush1.bf16.msra.mxu0 %v660
    %2115 = vmatprep.subr.bf16.mxu0 %v665
    %2116 = vmatpush1.bf16.msra.mxu0 %v664
    %2117 = vmatprep.subr.bf16.mxu0 %v669
    %2118 = vmatpush1.bf16.msra.mxu0 %v668
    %2119 = vmatprep.subr.bf16.mxu0 %v673
    %2120 = vmatpush1.bf16.msra.mxu0 %v672
    %2121 = vmatprep.subr.bf16.mxu0 %v677
    %2122 = vmatpush1.bf16.msra.mxu0 %v676
    %2123 = vmatprep.subr.bf16.mxu0 0
    %2124 = vmatpush1.bf16.msra.mxu0 0
    %2125 = vmatprep.subr.bf16.mxu0 0
    %2126 = vmatpush1.bf16.msra.mxu0 0
    %2127 = vmatprep.subr.bf16.mxu0 0
    %2128 = vmatpush1.bf16.msra.mxu0 0
    %2129 = vmatprep.subr.bf16.mxu0 0
    %2130 = vmatpush1.bf16.msra.mxu0 0
    %2131 = vmatprep.subr.bf16.mxu0 0
    %2132 = vmatpush1.bf16.msra.mxu0 0
    %2133 = vmatprep.subr.bf16.mxu0 0
    %2134 = vmatpush1.bf16.msra.mxu0 0
    %2135 = vmatprep.subr.bf16.mxu0 0
    %2136 = vmatpush1.bf16.msra.mxu0 0
    %2137 = vmatprep.subr.bf16.mxu0 0
    %2138 = vmatpush1.bf16.msra.mxu0 0
    %2139 = vmatprep.mubr.bf16.mxu0 0
    %2140 = vmatmul.mubr.bf16.gmra.mrb[0].mxu0 %v2065
    %v2141 = vpop.f32.mrb[0].mxu0
    %v2142 = vadd.f32 0.0, %v2141
    %v2143 = vpop.f32.mrb[0].mxu0
    %v2144 = vadd.f32 0.0, %v2143
    %v2145 = vpop.f32.mrb[0].mxu0
    %v2146 = vpop.f32.mrb[0].mxu0
    %2147 = vdwg.mxu0
    %2148 = vmatprep.subr.bf16.mxu0 %v889
    %2149 = vmatpush1.bf16.msra.mxu0 %v888
    %2150 = vmatprep.subr.bf16.mxu0 %v893
    %2151 = vmatpush1.bf16.msra.mxu0 %v892
    %2152 = vmatprep.subr.bf16.mxu0 %v897
    %2153 = vmatpush1.bf16.msra.mxu0 %v896
    %2154 = vmatprep.subr.bf16.mxu0 %v901
    %2155 = vmatpush1.bf16.msra.mxu0 %v900
    %2156 = vmatprep.subr.bf16.mxu0 %v905
    %2157 = vmatpush1.bf16.msra.mxu0 %v904
    %2158 = vmatprep.subr.bf16.mxu0 %v909
    %2159 = vmatpush1.bf16.msra.mxu0 %v908
    %2160 = vmatprep.subr.bf16.mxu0 %v913
    %2161 = vmatpush1.bf16.msra.mxu0 %v912
    %2162 = vmatprep.subr.bf16.mxu0 %v917
    %2163 = vmatpush1.bf16.msra.mxu0 %v916
    %2164 = vmatprep.subr.bf16.mxu0 0
    %2165 = vmatpush1.bf16.msra.mxu0 0
    %2166 = vmatprep.subr.bf16.mxu0 0
    %2167 = vmatpush1.bf16.msra.mxu0 0
    %2168 = vmatprep.subr.bf16.mxu0 0
    %2169 = vmatpush1.bf16.msra.mxu0 0
    %2170 = vmatprep.subr.bf16.mxu0 0
    %2171 = vmatpush1.bf16.msra.mxu0 0
    %2172 = vmatprep.subr.bf16.mxu0 0
    %2173 = vmatpush1.bf16.msra.mxu0 0
    %2174 = vmatprep.subr.bf16.mxu0 0
    %2175 = vmatpush1.bf16.msra.mxu0 0
    %2176 = vmatprep.subr.bf16.mxu0 0
    %2177 = vmatpush1.bf16.msra.mxu0 0
    %2178 = vmatprep.subr.bf16.mxu0 0
    %2179 = vmatpush1.bf16.msra.mxu0 0
    %2180 = vmatprep.mubr.bf16.mxu0 0
    %2181 = vmatmul.mubr.bf16.gmra.mrb[0].mxu0 %v2064
    %v2182 = vpop.f32.mrb[0].mxu0
    %v2183 = vadd.f32 %v2101, %v2182
    %v2184 = vpop.f32.mrb[0].mxu0
    %v2185 = vadd.f32 %v2103, %v2184
    %v2186 = vpop.f32.mrb[0].mxu0
    %v2187 = vpop.f32.mrb[0].mxu0
    %2188 = vdwg.mxu0
    %2189 = vmatprep.subr.bf16.mxu0 %v891
    %2190 = vmatpush1.bf16.msra.mxu0 %v890
    %2191 = vmatprep.subr.bf16.mxu0 %v895
    %2192 = vmatpush1.bf16.msra.mxu0 %v894
    %2193 = vmatprep.subr.bf16.mxu0 %v899
    %2194 = vmatpush1.bf16.msra.mxu0 %v898
    %2195 = vmatprep.subr.bf16.mxu0 %v903
    %2196 = vmatpush1.bf16.msra.mxu0 %v902
    %2197 = vmatprep.subr.bf16.mxu0 %v907
    %2198 = vmatpush1.bf16.msra.mxu0 %v906
    %2199 = vmatprep.subr.bf16.mxu0 %v911
    %2200 = vmatpush1.bf16.msra.mxu0 %v910
    %2201 = vmatprep.subr.bf16.mxu0 %v915
    %2202 = vmatpush1.bf16.msra.mxu0 %v914
    %2203 = vmatprep.subr.bf16.mxu0 %v919
    %2204 = vmatpush1.bf16.msra.mxu0 %v918
    %2205 = vmatprep.subr.bf16.mxu0 0
    %2206 = vmatpush1.bf16.msra.mxu0 0
    %2207 = vmatprep.subr.bf16.mxu0 0
    %2208 = vmatpush1.bf16.msra.mxu0 0
    %2209 = vmatprep.subr.bf16.mxu0 0
    %2210 = vmatpush1.bf16.msra.mxu0 0
    %2211 = vmatprep.subr.bf16.mxu0 0
    %2212 = vmatpush1.bf16.msra.mxu0 0
    %2213 = vmatprep.subr.bf16.mxu0 0
    %2214 = vmatpush1.bf16.msra.mxu0 0
    %2215 = vmatprep.subr.bf16.mxu0 0
    %2216 = vmatpush1.bf16.msra.mxu0 0
    %2217 = vmatprep.subr.bf16.mxu0 0
    %2218 = vmatpush1.bf16.msra.mxu0 0
    %2219 = vmatprep.subr.bf16.mxu0 0
    %2220 = vmatpush1.bf16.msra.mxu0 0
    %2221 = vmatprep.mubr.bf16.mxu0 0
    %2222 = vmatmul.mubr.bf16.gmra.mrb[0].mxu0 %v2064
    %v2223 = vpop.f32.mrb[0].mxu0
    %v2224 = vadd.f32 %v2142, %v2223
    %v2225 = vpop.f32.mrb[0].mxu0
    %v2226 = vadd.f32 %v2144, %v2225
    %v2227 = vpop.f32.mrb[0].mxu0
    %v2228 = vpop.f32.mrb[0].mxu0
    %2229 = vdwg.mxu0
    %v2230 = vadd.f32 %v2183, %v254
    %v2231 = vadd.f32 %v2185, %v258
    %v2232 = vadd.f32 %v2224, %v262
    %v2233 = vadd.f32 %v2226, %v266
    %v2234 = vmul.f32 %v2230, 0.5
    %v2235 = vtanh.pop %v2234
    %v2236 = vmul.f32 %v2235, 0.5
    %v2237 = vadd.f32 %v2236, 0.5
    %v2238 = vmul.f32 %v2231, 0.5
    %v2239 = vtanh.pop %v2238
    %v2240 = vmul.f32 %v2239, 0.5
    %v2241 = vadd.f32 %v2240, 0.5
    %v2242 = vtanh.pop %v2232
    %v2243 = vmul.f32 %v2233, 0.5
    %v2244 = vtanh.pop %v2243
    %v2245 = vmul.f32 %v2244, 0.5
    %v2246 = vadd.f32 %v2245, 0.5
    %v2247 = vmul.f32 %v2241, %v1950
    %v2248 = vmul.f32 %v2237, %v2242
    %v2249 = vadd.f32 %v2247, %v2248
    %v2250 = vtanh.pop %v2249
    %v2251 = vmul.f32 %v2246, %v2250
    %s2252 = scalar_lea.vmem [#allocation4], 80
    %v2253 = vld [vmem:[%s2252] sm:$0xff]
    %v2254 = vld [vmem:[%s2252 + $0x8] sm:$0xff]
    %v2255 = vunpack.c.l.bf16 %v2253
    %v2256 = vunpack.c.h.bf16 %v2253
    %v2257 = vunpack.c.l.bf16 %v2254
    %v2258 = vunpack.c.h.bf16 %v2254
    %2259 = vmatprep.subr.bf16.mxu0 %v381
    %2260 = vmatpush1.bf16.msra.mxu0 %v380
    %2261 = vmatprep.subr.bf16.mxu0 %v385
    %2262 = vmatpush1.bf16.msra.mxu0 %v384
    %2263 = vmatprep.subr.bf16.mxu0 %v389
    %2264 = vmatpush1.bf16.msra.mxu0 %v388
    %2265 = vmatprep.subr.bf16.mxu0 %v393
    %2266 = vmatpush1.bf16.msra.mxu0 %v392
    %2267 = vmatprep.subr.bf16.mxu0 %v397
    %2268 = vmatpush1.bf16.msra.mxu0 %v396
    %2269 = vmatprep.subr.bf16.mxu0 %v401
    %2270 = vmatpush1.bf16.msra.mxu0 %v400
    %2271 = vmatprep.subr.bf16.mxu0 %v405
    %2272 = vmatpush1.bf16.msra.mxu0 %v404
    %2273 = vmatprep.subr.bf16.mxu0 %v409
    %2274 = vmatpush1.bf16.msra.mxu0 %v408
    %2275 = vmatprep.subr.bf16.mxu0 0
    %2276 = vmatpush1.bf16.msra.mxu0 0
    %2277 = vmatprep.subr.bf16.mxu0 0
    %2278 = vmatpush1.bf16.msra.mxu0 0
    %2279 = vmatprep.subr.bf16.mxu0 0
    %2280 = vmatpush1.bf16.msra.mxu0 0
    %2281 = vmatprep.subr.bf16.mxu0 0
    %2282 = vmatpush1.bf16.msra.mxu0 0
    %2283 = vmatprep.subr.bf16.mxu0 0
    %2284 = vmatpush1.bf16.msra.mxu0 0
    %2285 = vmatprep.subr.bf16.mxu0 0
    %2286 = vmatpush1.bf16.msra.mxu0 0
    %2287 = vmatprep.subr.bf16.mxu0 0
    %2288 = vmatpush1.bf16.msra.mxu0 0
    %2289 = vmatprep.subr.bf16.mxu0 0
    %2290 = vmatpush1.bf16.msra.mxu0 0
    %2291 = vmatprep.mubr.bf16.mxu0 0
    %2292 = vmatmul.mubr.bf16.gmra.mrb[0].mxu0 %v2064
    %v2293 = vpop.f32.mrb[0].mxu0
    %v2294 = vadd.f32 %v2255, %v2293
    %v2295 = vpop.f32.mrb[0].mxu0
    %v2296 = vadd.f32 %v2256, %v2295
    %v2297 = vpop.f32.mrb[0].mxu0
    %v2298 = vpop.f32.mrb[0].mxu0
    %2299 = vdwg.mxu0
    %2300 = vmatprep.subr.bf16.mxu0 %v383
    %2301 = vmatpush1.bf16.msra.mxu0 %v382
    %2302 = vmatprep.subr.bf16.mxu0 %v387
    %2303 = vmatpush1.bf16.msra.mxu0 %v386
    %2304 = vmatprep.subr.bf16.mxu0 %v391
    %2305 = vmatpush1.bf16.msra.mxu0 %v390
    %2306 = vmatprep.subr.bf16.mxu0 %v395
    %2307 = vmatpush1.bf16.msra.mxu0 %v394
    %2308 = vmatprep.subr.bf16.mxu0 %v399
    %2309 = vmatpush1.bf16.msra.mxu0 %v398
    %2310 = vmatprep.subr.bf16.mxu0 %v403
    %2311 = vmatpush1.bf16.msra.mxu0 %v402
    %2312 = vmatprep.subr.bf16.mxu0 %v407
    %2313 = vmatpush1.bf16.msra.mxu0 %v406
    %2314 = vmatprep.subr.bf16.mxu0 %v411
    %2315 = vmatpush1.bf16.msra.mxu0 %v410
    %2316 = vmatprep.subr.bf16.mxu0 0
    %2317 = vmatpush1.bf16.msra.mxu0 0
    %2318 = vmatprep.subr.bf16.mxu0 0
    %2319 = vmatpush1.bf16.msra.mxu0 0
    %2320 = vmatprep.subr.bf16.mxu0 0
    %2321 = vmatpush1.bf16.msra.mxu0 0
    %2322 = vmatprep.subr.bf16.mxu0 0
    %2323 = vmatpush1.bf16.msra.mxu0 0
    %2324 = vmatprep.subr.bf16.mxu0 0
    %2325 = vmatpush1.bf16.msra.mxu0 0
    %2326 = vmatprep.subr.bf16.mxu0 0
    %2327 = vmatpush1.bf16.msra.mxu0 0
    %2328 = vmatprep.subr.bf16.mxu0 0
    %2329 = vmatpush1.bf16.msra.mxu0 0
    %2330 = vmatprep.subr.bf16.mxu0 0
    %2331 = vmatpush1.bf16.msra.mxu0 0
    %2332 = vmatprep.mubr.bf16.mxu0 0
    %2333 = vmatmul.mubr.bf16.gmra.mrb[0].mxu0 %v2064
    %v2334 = vpop.f32.mrb[0].mxu0
    %v2335 = vadd.f32 %v2257, %v2334
    %v2336 = vpop.f32.mrb[0].mxu0
    %v2337 = vadd.f32 %v2258, %v2336
    %v2338 = vpop.f32.mrb[0].mxu0
    %v2339 = vpop.f32.mrb[0].mxu0
    %2340 = vdwg.mxu0
    %v2341 = vadd.f32 %v2294, %v168
    %v2342 = vadd.f32 %v2296, %v172
    %v2343 = vadd.f32 %v2335, %v176
    %v2344 = vadd.f32 %v2337, %v180
    %v2345 = vmul.f32 %v2341, 0.5
    %v2346 = vtanh.pop %v2345
    %v2347 = vmul.f32 %v2346, 0.5
    %v2348 = vadd.f32 %v2347, 0.5
    %v2349 = vmul.f32 %v2342, 0.5
    %v2350 = vtanh.pop %v2349
    %v2351 = vmul.f32 %v2350, 0.5
    %v2352 = vadd.f32 %v2351, 0.5
    %v2353 = vtanh.pop %v2343
    %v2354 = vmul.f32 %v2344, 0.5
    %v2355 = vtanh.pop %v2354
    %v2356 = vmul.f32 %v2355, 0.5
    %v2357 = vadd.f32 %v2356, 0.5
    %v2358 = vmul.f32 %v2352, %v2061
    %v2359 = vmul.f32 %v2348, %v2353
    %v2360 = vadd.f32 %v2358, %v2359
    %v2361 = vtanh.pop %v2360
    %v2362 = vmul.f32 %v2357, %v2361
    %v2363 = vpack.c.bf16 %v2362, %v2362
    %v2364 = vpack.c.bf16 %v2251, %v2251
    %2365 = vmatprep.subr.bf16.mxu0 %v647
    %2366 = vmatpush1.bf16.msra.mxu0 %v646
    %2367 = vmatprep.subr.bf16.mxu0 %v651
    %2368 = vmatpush1.bf16.msra.mxu0 %v650
    %2369 = vmatprep.subr.bf16.mxu0 %v655
    %2370 = vmatpush1.bf16.msra.mxu0 %v654
    %2371 = vmatprep.subr.bf16.mxu0 %v659
    %2372 = vmatpush1.bf16.msra.mxu0 %v658
    %2373 = vmatprep.subr.bf16.mxu0 %v663
    %2374 = vmatpush1.bf16.msra.mxu0 %v662
    %2375 = vmatprep.subr.bf16.mxu0 %v667
    %2376 = vmatpush1.bf16.msra.mxu0 %v666
    %2377 = vmatprep.subr.bf16.mxu0 %v671
    %2378 = vmatpush1.bf16.msra.mxu0 %v670
    %2379 = vmatprep.subr.bf16.mxu0 %v675
    %2380 = vmatpush1.bf16.msra.mxu0 %v674
    %2381 = vmatprep.subr.bf16.mxu0 0
    %2382 = vmatpush1.bf16.msra.mxu0 0
    %2383 = vmatprep.subr.bf16.mxu0 0
    %2384 = vmatpush1.bf16.msra.mxu0 0
    %2385 = vmatprep.subr.bf16.mxu0 0
    %2386 = vmatpush1.bf16.msra.mxu0 0
    %2387 = vmatprep.subr.bf16.mxu0 0
    %2388 = vmatpush1.bf16.msra.mxu0 0
    %2389 = vmatprep.subr.bf16.mxu0 0
    %2390 = vmatpush1.bf16.msra.mxu0 0
    %2391 = vmatprep.subr.bf16.mxu0 0
    %2392 = vmatpush1.bf16.msra.mxu0 0
    %2393 = vmatprep.subr.bf16.mxu0 0
    %2394 = vmatpush1.bf16.msra.mxu0 0
    %2395 = vmatprep.subr.bf16.mxu0 0
    %2396 = vmatpush1.bf16.msra.mxu0 0
    %2397 = vmatprep.mubr.bf16.mxu0 0
    %2398 = vmatmul.mubr.bf16.gmra.mrb[0].mxu0 %v2364
    %v2399 = vpop.f32.mrb[0].mxu0
    %v2400 = vadd.f32 0.0, %v2399
    %v2401 = vpop.f32.mrb[0].mxu0
    %v2402 = vadd.f32 0.0, %v2401
    %v2403 = vpop.f32.mrb[0].mxu0
    %v2404 = vpop.f32.mrb[0].mxu0
    %2405 = vdwg.mxu0
    %2406 = vmatprep.subr.bf16.mxu0 %v649
    %2407 = vmatpush1.bf16.msra.mxu0 %v648
    %2408 = vmatprep.subr.bf16.mxu0 %v653
    %2409 = vmatpush1.bf16.msra.mxu0 %v652
    %2410 = vmatprep.subr.bf16.mxu0 %v657
    %2411 = vmatpush1.bf16.msra.mxu0 %v656
    %2412 = vmatprep.subr.bf16.mxu0 %v661
    %2413 = vmatpush1.bf16.msra.mxu0 %v660
    %2414 = vmatprep.subr.bf16.mxu0 %v665
    %2415 = vmatpush1.bf16.msra.mxu0 %v664
    %2416 = vmatprep.subr.bf16.mxu0 %v669
    %2417 = vmatpush1.bf16.msra.mxu0 %v668
    %2418 = vmatprep.subr.bf16.mxu0 %v673
    %2419 = vmatpush1.bf16.msra.mxu0 %v672
    %2420 = vmatprep.subr.bf16.mxu0 %v677
    %2421 = vmatpush1.bf16.msra.mxu0 %v676
    %2422 = vmatprep.subr.bf16.mxu0 0
    %2423 = vmatpush1.bf16.msra.mxu0 0
    %2424 = vmatprep.subr.bf16.mxu0 0
    %2425 = vmatpush1.bf16.msra.mxu0 0
    %2426 = vmatprep.subr.bf16.mxu0 0
    %2427 = vmatpush1.bf16.msra.mxu0 0
    %2428 = vmatprep.subr.bf16.mxu0 0
    %2429 = vmatpush1.bf16.msra.mxu0 0
    %2430 = vmatprep.subr.bf16.mxu0 0
    %2431 = vmatpush1.bf16.msra.mxu0 0
    %2432 = vmatprep.subr.bf16.mxu0 0
    %2433 = vmatpush1.bf16.msra.mxu0 0
    %2434 = vmatprep.subr.bf16.mxu0 0
    %2435 = vmatpush1.bf16.msra.mxu0 0
    %2436 = vmatprep.subr.bf16.mxu0 0
    %2437 = vmatpush1.bf16.msra.mxu0 0
    %2438 = vmatprep.mubr.bf16.mxu0 0
    %2439 = vmatmul.mubr.bf16.gmra.mrb[0].mxu0 %v2364
    %v2440 = vpop.f32.mrb[0].mxu0
    %v2441 = vadd.f32 0.0, %v2440
    %v2442 = vpop.f32.mrb[0].mxu0
    %v2443 = vadd.f32 0.0, %v2442
    %v2444 = vpop.f32.mrb[0].mxu0
    %v2445 = vpop.f32.mrb[0].mxu0
    %2446 = vdwg.mxu0
    %2447 = vmatprep.subr.bf16.mxu0 %v889
    %2448 = vmatpush1.bf16.msra.mxu0 %v888
    %2449 = vmatprep.subr.bf16.mxu0 %v893
    %2450 = vmatpush1.bf16.msra.mxu0 %v892
    %2451 = vmatprep.subr.bf16.mxu0 %v897
    %2452 = vmatpush1.bf16.msra.mxu0 %v896
    %2453 = vmatprep.subr.bf16.mxu0 %v901
    %2454 = vmatpush1.bf16.msra.mxu0 %v900
    %2455 = vmatprep.subr.bf16.mxu0 %v905
    %2456 = vmatpush1.bf16.msra.mxu0 %v904
    %2457 = vmatprep.subr.bf16.mxu0 %v909
    %2458 = vmatpush1.bf16.msra.mxu0 %v908
    %2459 = vmatprep.subr.bf16.mxu0 %v913
    %2460 = vmatpush1.bf16.msra.mxu0 %v912
    %2461 = vmatprep.subr.bf16.mxu0 %v917
    %2462 = vmatpush1.bf16.msra.mxu0 %v916
    %2463 = vmatprep.subr.bf16.mxu0 0
    %2464 = vmatpush1.bf16.msra.mxu0 0
    %2465 = vmatprep.subr.bf16.mxu0 0
    %2466 = vmatpush1.bf16.msra.mxu0 0
    %2467 = vmatprep.subr.bf16.mxu0 0
    %2468 = vmatpush1.bf16.msra.mxu0 0
    %2469 = vmatprep.subr.bf16.mxu0 0
    %2470 = vmatpush1.bf16.msra.mxu0 0
    %2471 = vmatprep.subr.bf16.mxu0 0
    %2472 = vmatpush1.bf16.msra.mxu0 0
    %2473 = vmatprep.subr.bf16.mxu0 0
    %2474 = vmatpush1.bf16.msra.mxu0 0
    %2475 = vmatprep.subr.bf16.mxu0 0
    %2476 = vmatpush1.bf16.msra.mxu0 0
    %2477 = vmatprep.subr.bf16.mxu0 0
    %2478 = vmatpush1.bf16.msra.mxu0 0
    %2479 = vmatprep.mubr.bf16.mxu0 0
    %2480 = vmatmul.mubr.bf16.gmra.mrb[0].mxu0 %v2363
    %v2481 = vpop.f32.mrb[0].mxu0
    %v2482 = vadd.f32 %v2400, %v2481
    %v2483 = vpop.f32.mrb[0].mxu0
    %v2484 = vadd.f32 %v2402, %v2483
    %v2485 = vpop.f32.mrb[0].mxu0
    %v2486 = vpop.f32.mrb[0].mxu0
    %2487 = vdwg.mxu0
    %2488 = vmatprep.subr.bf16.mxu0 %v891
    %2489 = vmatpush1.bf16.msra.mxu0 %v890
    %2490 = vmatprep.subr.bf16.mxu0 %v895
    %2491 = vmatpush1.bf16.msra.mxu0 %v894
    %2492 = vmatprep.subr.bf16.mxu0 %v899
    %2493 = vmatpush1.bf16.msra.mxu0 %v898
    %2494 = vmatprep.subr.bf16.mxu0 %v903
    %2495 = vmatpush1.bf16.msra.mxu0 %v902
    %2496 = vmatprep.subr.bf16.mxu0 %v907
    %2497 = vmatpush1.bf16.msra.mxu0 %v906
    %2498 = vmatprep.subr.bf16.mxu0 %v911
    %2499 = vmatpush1.bf16.msra.mxu0 %v910
    %2500 = vmatprep.subr.bf16.mxu0 %v915
    %2501 = vmatpush1.bf16.msra.mxu0 %v914
    %2502 = vmatprep.subr.bf16.mxu0 %v919
    %2503 = vmatpush1.bf16.msra.mxu0 %v918
    %2504 = vmatprep.subr.bf16.mxu0 0
    %2505 = vmatpush1.bf16.msra.mxu0 0
    %2506 = vmatprep.subr.bf16.mxu0 0
    %2507 = vmatpush1.bf16.msra.mxu0 0
    %2508 = vmatprep.subr.bf16.mxu0 0
    %2509 = vmatpush1.bf16.msra.mxu0 0
    %2510 = vmatprep.subr.bf16.mxu0 0
    %2511 = vmatpush1.bf16.msra.mxu0 0
    %2512 = vmatprep.subr.bf16.mxu0 0
    %2513 = vmatpush1.bf16.msra.mxu0 0
    %2514 = vmatprep.subr.bf16.mxu0 0
    %2515 = vmatpush1.bf16.msra.mxu0 0
    %2516 = vmatprep.subr.bf16.mxu0 0
    %2517 = vmatpush1.bf16.msra.mxu0 0
    %2518 = vmatprep.subr.bf16.mxu0 0
    %2519 = vmatpush1.bf16.msra.mxu0 0
    %2520 = vmatprep.mubr.bf16.mxu0 0
    %2521 = vmatmul.mubr.bf16.gmra.mrb[0].mxu0 %v2363
    %v2522 = vpop.f32.mrb[0].mxu0
    %v2523 = vadd.f32 %v2441, %v2522
    %v2524 = vpop.f32.mrb[0].mxu0
    %v2525 = vadd.f32 %v2443, %v2524
    %v2526 = vpop.f32.mrb[0].mxu0
    %v2527 = vpop.f32.mrb[0].mxu0
    %2528 = vdwg.mxu0
    %v2529 = vadd.f32 %v2482, %v254
    %v2530 = vadd.f32 %v2484, %v258
    %v2531 = vadd.f32 %v2523, %v262
    %v2532 = vadd.f32 %v2525, %v266
    %v2533 = vmul.f32 %v2529, 0.5
    %v2534 = vtanh.pop %v2533
    %v2535 = vmul.f32 %v2534, 0.5
    %v2536 = vadd.f32 %v2535, 0.5
    %v2537 = vmul.f32 %v2530, 0.5
    %v2538 = vtanh.pop %v2537
    %v2539 = vmul.f32 %v2538, 0.5
    %v2540 = vadd.f32 %v2539, 0.5
    %v2541 = vtanh.pop %v2531
    %v2542 = vmul.f32 %v2532, 0.5
    %v2543 = vtanh.pop %v2542
    %v2544 = vmul.f32 %v2543, 0.5
    %v2545 = vadd.f32 %v2544, 0.5
    %v2546 = vmul.f32 %v2540, %v2249
    %v2547 = vmul.f32 %v2536, %v2541
    %v2548 = vadd.f32 %v2546, %v2547
    %v2549 = vtanh.pop %v2548
    %v2550 = vmul.f32 %v2545, %v2549
    %s2551 = scalar_lea.vmem [#allocation4], 96
    %v2552 = vld [vmem:[%s2551] sm:$0xff]
    %v2553 = vld [vmem:[%s2551 + $0x8] sm:$0xff]
    %v2554 = vunpack.c.l.bf16 %v2552
    %v2555 = vunpack.c.h.bf16 %v2552
    %v2556 = vunpack.c.l.bf16 %v2553
    %v2557 = vunpack.c.h.bf16 %v2553
    %2558 = vmatprep.subr.bf16.mxu0 %v381
    %2559 = vmatpush1.bf16.msra.mxu0 %v380
    %2560 = vmatprep.subr.bf16.mxu0 %v385
    %2561 = vmatpush1.bf16.msra.mxu0 %v384
    %2562 = vmatprep.subr.bf16.mxu0 %v389
    %2563 = vmatpush1.bf16.msra.mxu0 %v388
    %2564 = vmatprep.subr.bf16.mxu0 %v393
    %2565 = vmatpush1.bf16.msra.mxu0 %v392
    %2566 = vmatprep.subr.bf16.mxu0 %v397
    %2567 = vmatpush1.bf16.msra.mxu0 %v396
    %2568 = vmatprep.subr.bf16.mxu0 %v401
    %2569 = vmatpush1.bf16.msra.mxu0 %v400
    %2570 = vmatprep.subr.bf16.mxu0 %v405
    %2571 = vmatpush1.bf16.msra.mxu0 %v404
    %2572 = vmatprep.subr.bf16.mxu0 %v409
    %2573 = vmatpush1.bf16.msra.mxu0 %v408
    %2574 = vmatprep.subr.bf16.mxu0 0
    %2575 = vmatpush1.bf16.msra.mxu0 0
    %2576 = vmatprep.subr.bf16.mxu0 0
    %2577 = vmatpush1.bf16.msra.mxu0 0
    %2578 = vmatprep.subr.bf16.mxu0 0
    %2579 = vmatpush1.bf16.msra.mxu0 0
    %2580 = vmatprep.subr.bf16.mxu0 0
    %2581 = vmatpush1.bf16.msra.mxu0 0
    %2582 = vmatprep.subr.bf16.mxu0 0
    %2583 = vmatpush1.bf16.msra.mxu0 0
    %2584 = vmatprep.subr.bf16.mxu0 0
    %2585 = vmatpush1.bf16.msra.mxu0 0
    %2586 = vmatprep.subr.bf16.mxu0 0
    %2587 = vmatpush1.bf16.msra.mxu0 0
    %2588 = vmatprep.subr.bf16.mxu0 0
    %2589 = vmatpush1.bf16.msra.mxu0 0
    %2590 = vmatprep.mubr.bf16.mxu0 0
    %2591 = vmatmul.mubr.bf16.gmra.mrb[0].mxu0 %v2363
    %v2592 = vpop.f32.mrb[0].mxu0
    %v2593 = vadd.f32 %v2554, %v2592
    %v2594 = vpop.f32.mrb[0].mxu0
    %v2595 = vadd.f32 %v2555, %v2594
    %v2596 = vpop.f32.mrb[0].mxu0
    %v2597 = vpop.f32.mrb[0].mxu0
    %2598 = vdwg.mxu0
    %2599 = vmatprep.subr.bf16.mxu0 %v383
    %2600 = vmatpush1.bf16.msra.mxu0 %v382
    %2601 = vmatprep.subr.bf16.mxu0 %v387
    %2602 = vmatpush1.bf16.msra.mxu0 %v386
    %2603 = vmatprep.subr.bf16.mxu0 %v391
    %2604 = vmatpush1.bf16.msra.mxu0 %v390
    %2605 = vmatprep.subr.bf16.mxu0 %v395
    %2606 = vmatpush1.bf16.msra.mxu0 %v394
    %2607 = vmatprep.subr.bf16.mxu0 %v399
    %2608 = vmatpush1.bf16.msra.mxu0 %v398
    %2609 = vmatprep.subr.bf16.mxu0 %v403
    %2610 = vmatpush1.bf16.msra.mxu0 %v402
    %2611 = vmatprep.subr.bf16.mxu0 %v407
    %2612 = vmatpush1.bf16.msra.mxu0 %v406
    %2613 = vmatprep.subr.bf16.mxu0 %v411
    %2614 = vmatpush1.bf16.msra.mxu0 %v410
    %2615 = vmatprep.subr.bf16.mxu0 0
    %2616 = vmatpush1.bf16.msra.mxu0 0
    %2617 = vmatprep.subr.bf16.mxu0 0
    %2618 = vmatpush1.bf16.msra.mxu0 0
    %2619 = vmatprep.subr.bf16.mxu0 0
    %2620 = vmatpush1.bf16.msra.mxu0 0
    %2621 = vmatprep.subr.bf16.mxu0 0
    %2622 = vmatpush1.bf16.msra.mxu0 0
    %2623 = vmatprep.subr.bf16.mxu0 0
    %2624 = vmatpush1.bf16.msra.mxu0 0
    %2625 = vmatprep.subr.bf16.mxu0 0
    %2626 = vmatpush1.bf16.msra.mxu0 0
    %2627 = vmatprep.subr.bf16.mxu0 0
    %2628 = vmatpush1.bf16.msra.mxu0 0
    %2629 = vmatprep.subr.bf16.mxu0 0
    %2630 = vmatpush1.bf16.msra.mxu0 0
    %2631 = vmatprep.mubr.bf16.mxu0 0
    %2632 = vmatmul.mubr.bf16.gmra.mrb[0].mxu0 %v2363
    %v2633 = vpop.f32.mrb[0].mxu0
    %v2634 = vadd.f32 %v2556, %v2633
    %v2635 = vpop.f32.mrb[0].mxu0
    %v2636 = vadd.f32 %v2557, %v2635
    %v2637 = vpop.f32.mrb[0].mxu0
    %v2638 = vpop.f32.mrb[0].mxu0
    %2639 = vdwg.mxu0
    %v2640 = vadd.f32 %v2593, %v168
    %v2641 = vadd.f32 %v2595, %v172
    %v2642 = vadd.f32 %v2634, %v176
    %v2643 = vadd.f32 %v2636, %v180
    %v2644 = vmul.f32 %v2640, 0.5
    %v2645 = vtanh.pop %v2644
    %v2646 = vmul.f32 %v2645, 0.5
    %v2647 = vadd.f32 %v2646, 0.5
    %v2648 = vmul.f32 %v2641, 0.5
    %v2649 = vtanh.pop %v2648
    %v2650 = vmul.f32 %v2649, 0.5
    %v2651 = vadd.f32 %v2650, 0.5
    %v2652 = vtanh.pop %v2642
    %v2653 = vmul.f32 %v2643, 0.5
    %v2654 = vtanh.pop %v2653
    %v2655 = vmul.f32 %v2654, 0.5
    %v2656 = vadd.f32 %v2655, 0.5
    %v2657 = vmul.f32 %v2651, %v2360
    %v2658 = vmul.f32 %v2647, %v2652
    %v2659 = vadd.f32 %v2657, %v2658
    %v2660 = vtanh.pop %v2659
    %v2661 = vmul.f32 %v2656, %v2660
    %v2662 = vpack.c.bf16 %v2661, %v2661
    %v2663 = vpack.c.bf16 %v2550, %v2550
    %2664 = vmatprep.subr.bf16.mxu0 %v647
    %2665 = vmatpush1.bf16.msra.mxu0 %v646
    %2666 = vmatprep.subr.bf16.mxu0 %v651
    %2667 = vmatpush1.bf16.msra.mxu0 %v650
    %2668 = vmatprep.subr.bf16.mxu0 %v655
    %2669 = vmatpush1.bf16.msra.mxu0 %v654
    %2670 = vmatprep.subr.bf16.mxu0 %v659
    %2671 = vmatpush1.bf16.msra.mxu0 %v658
    %2672 = vmatprep.subr.bf16.mxu0 %v663
    %2673 = vmatpush1.bf16.msra.mxu0 %v662
    %2674 = vmatprep.subr.bf16.mxu0 %v667
    %2675 = vmatpush1.bf16.msra.mxu0 %v666
    %2676 = vmatprep.subr.bf16.mxu0 %v671
    %2677 = vmatpush1.bf16.msra.mxu0 %v670
    %2678 = vmatprep.subr.bf16.mxu0 %v675
    %2679 = vmatpush1.bf16.msra.mxu0 %v674
    %2680 = vmatprep.subr.bf16.mxu0 0
    %2681 = vmatpush1.bf16.msra.mxu0 0
    %2682 = vmatprep.subr.bf16.mxu0 0
    %2683 = vmatpush1.bf16.msra.mxu0 0
    %2684 = vmatprep.subr.bf16.mxu0 0
    %2685 = vmatpush1.bf16.msra.mxu0 0
    %2686 = vmatprep.subr.bf16.mxu0 0
    %2687 = vmatpush1.bf16.msra.mxu0 0
    %2688 = vmatprep.subr.bf16.mxu0 0
    %2689 = vmatpush1.bf16.msra.mxu0 0
    %2690 = vmatprep.subr.bf16.mxu0 0
    %2691 = vmatpush1.bf16.msra.mxu0 0
    %2692 = vmatprep.subr.bf16.mxu0 0
    %2693 = vmatpush1.bf16.msra.mxu0 0
    %2694 = vmatprep.subr.bf16.mxu0 0
    %2695 = vmatpush1.bf16.msra.mxu0 0
    %2696 = vmatprep.mubr.bf16.mxu0 0
    %2697 = vmatmul.mubr.bf16.gmra.mrb[0].mxu0 %v2663
    %v2698 = vpop.f32.mrb[0].mxu0
    %v2699 = vadd.f32 0.0, %v2698
    %v2700 = vpop.f32.mrb[0].mxu0
    %v2701 = vadd.f32 0.0, %v2700
    %v2702 = vpop.f32.mrb[0].mxu0
    %v2703 = vpop.f32.mrb[0].mxu0
    %2704 = vdwg.mxu0
    %2705 = vmatprep.subr.bf16.mxu0 %v649
    %2706 = vmatpush1.bf16.msra.mxu0 %v648
    %2707 = vmatprep.subr.bf16.mxu0 %v653
    %2708 = vmatpush1.bf16.msra.mxu0 %v652
    %2709 = vmatprep.subr.bf16.mxu0 %v657
    %2710 = vmatpush1.bf16.msra.mxu0 %v656
    %2711 = vmatprep.subr.bf16.mxu0 %v661
    %2712 = vmatpush1.bf16.msra.mxu0 %v660
    %2713 = vmatprep.subr.bf16.mxu0 %v665
    %2714 = vmatpush1.bf16.msra.mxu0 %v664
    %2715 = vmatprep.subr.bf16.mxu0 %v669
    %2716 = vmatpush1.bf16.msra.mxu0 %v668
    %2717 = vmatprep.subr.bf16.mxu0 %v673
    %2718 = vmatpush1.bf16.msra.mxu0 %v672
    %2719 = vmatprep.subr.bf16.mxu0 %v677
    %2720 = vmatpush1.bf16.msra.mxu0 %v676
    %2721 = vmatprep.subr.bf16.mxu0 0
    %2722 = vmatpush1.bf16.msra.mxu0 0
    %2723 = vmatprep.subr.bf16.mxu0 0
    %2724 = vmatpush1.bf16.msra.mxu0 0
    %2725 = vmatprep.subr.bf16.mxu0 0
    %2726 = vmatpush1.bf16.msra.mxu0 0
    %2727 = vmatprep.subr.bf16.mxu0 0
    %2728 = vmatpush1.bf16.msra.mxu0 0
    %2729 = vmatprep.subr.bf16.mxu0 0
    %2730 = vmatpush1.bf16.msra.mxu0 0
    %2731 = vmatprep.subr.bf16.mxu0 0
    %2732 = vmatpush1.bf16.msra.mxu0 0
    %2733 = vmatprep.subr.bf16.mxu0 0
    %2734 = vmatpush1.bf16.msra.mxu0 0
    %2735 = vmatprep.subr.bf16.mxu0 0
    %2736 = vmatpush1.bf16.msra.mxu0 0
    %2737 = vmatprep.mubr.bf16.mxu0 0
    %2738 = vmatmul.mubr.bf16.gmra.mrb[0].mxu0 %v2663
    %v2739 = vpop.f32.mrb[0].mxu0
    %v2740 = vadd.f32 0.0, %v2739
    %v2741 = vpop.f32.mrb[0].mxu0
    %v2742 = vadd.f32 0.0, %v2741
    %v2743 = vpop.f32.mrb[0].mxu0
    %v2744 = vpop.f32.mrb[0].mxu0
    %2745 = vdwg.mxu0
    %2746 = vmatprep.subr.bf16.mxu0 %v889
    %2747 = vmatpush1.bf16.msra.mxu0 %v888
    %2748 = vmatprep.subr.bf16.mxu0 %v893
    %2749 = vmatpush1.bf16.msra.mxu0 %v892
    %2750 = vmatprep.subr.bf16.mxu0 %v897
    %2751 = vmatpush1.bf16.msra.mxu0 %v896
    %2752 = vmatprep.subr.bf16.mxu0 %v901
    %2753 = vmatpush1.bf16.msra.mxu0 %v900
    %2754 = vmatprep.subr.bf16.mxu0 %v905
    %2755 = vmatpush1.bf16.msra.mxu0 %v904
    %2756 = vmatprep.subr.bf16.mxu0 %v909
    %2757 = vmatpush1.bf16.msra.mxu0 %v908
    %2758 = vmatprep.subr.bf16.mxu0 %v913
    %2759 = vmatpush1.bf16.msra.mxu0 %v912
    %2760 = vmatprep.subr.bf16.mxu0 %v917
    %2761 = vmatpush1.bf16.msra.mxu0 %v916
    %2762 = vmatprep.subr.bf16.mxu0 0
    %2763 = vmatpush1.bf16.msra.mxu0 0
    %2764 = vmatprep.subr.bf16.mxu0 0
    %2765 = vmatpush1.bf16.msra.mxu0 0
    %2766 = vmatprep.subr.bf16.mxu0 0
    %2767 = vmatpush1.bf16.msra.mxu0 0
    %2768 = vmatprep.subr.bf16.mxu0 0
    %2769 = vmatpush1.bf16.msra.mxu0 0
    %2770 = vmatprep.subr.bf16.mxu0 0
    %2771 = vmatpush1.bf16.msra.mxu0 0
    %2772 = vmatprep.subr.bf16.mxu0 0
    %2773 = vmatpush1.bf16.msra.mxu0 0
    %2774 = vmatprep.subr.bf16.mxu0 0
    %2775 = vmatpush1.bf16.msra.mxu0 0
    %2776 = vmatprep.subr.bf16.mxu0 0
    %2777 = vmatpush1.bf16.msra.mxu0 0
    %2778 = vmatprep.mubr.bf16.mxu0 0
    %2779 = vmatmul.mubr.bf16.gmra.mrb[0].mxu0 %v2662
    %v2780 = vpop.f32.mrb[0].mxu0
    %v2781 = vadd.f32 %v2699, %v2780
    %v2782 = vpop.f32.mrb[0].mxu0
    %v2783 = vadd.f32 %v2701, %v2782
    %v2784 = vpop.f32.mrb[0].mxu0
    %v2785 = vpop.f32.mrb[0].mxu0
    %2786 = vdwg.mxu0
    %2787 = vmatprep.subr.bf16.mxu0 %v891
    %2788 = vmatpush1.bf16.msra.mxu0 %v890
    %2789 = vmatprep.subr.bf16.mxu0 %v895
    %2790 = vmatpush1.bf16.msra.mxu0 %v894
    %2791 = vmatprep.subr.bf16.mxu0 %v899
    %2792 = vmatpush1.bf16.msra.mxu0 %v898
    %2793 = vmatprep.subr.bf16.mxu0 %v903
    %2794 = vmatpush1.bf16.msra.mxu0 %v902
    %2795 = vmatprep.subr.bf16.mxu0 %v907
    %2796 = vmatpush1.bf16.msra.mxu0 %v906
    %2797 = vmatprep.subr.bf16.mxu0 %v911
    %2798 = vmatpush1.bf16.msra.mxu0 %v910
    %2799 = vmatprep.subr.bf16.mxu0 %v915
    %2800 = vmatpush1.bf16.msra.mxu0 %v914
    %2801 = vmatprep.subr.bf16.mxu0 %v919
    %2802 = vmatpush1.bf16.msra.mxu0 %v918
    %2803 = vmatprep.subr.bf16.mxu0 0
    %2804 = vmatpush1.bf16.msra.mxu0 0
    %2805 = vmatprep.subr.bf16.mxu0 0
    %2806 = vmatpush1.bf16.msra.mxu0 0
    %2807 = vmatprep.subr.bf16.mxu0 0
    %2808 = vmatpush1.bf16.msra.mxu0 0
    %2809 = vmatprep.subr.bf16.mxu0 0
    %2810 = vmatpush1.bf16.msra.mxu0 0
    %2811 = vmatprep.subr.bf16.mxu0 0
    %2812 = vmatpush1.bf16.msra.mxu0 0
    %2813 = vmatprep.subr.bf16.mxu0 0
    %2814 = vmatpush1.bf16.msra.mxu0 0
    %2815 = vmatprep.subr.bf16.mxu0 0
    %2816 = vmatpush1.bf16.msra.mxu0 0
    %2817 = vmatprep.subr.bf16.mxu0 0
    %2818 = vmatpush1.bf16.msra.mxu0 0
    %2819 = vmatprep.mubr.bf16.mxu0 0
    %2820 = vmatmul.mubr.bf16.gmra.mrb[0].mxu0 %v2662
    %v2821 = vpop.f32.mrb[0].mxu0
    %v2822 = vadd.f32 %v2740, %v2821
    %v2823 = vpop.f32.mrb[0].mxu0
    %v2824 = vadd.f32 %v2742, %v2823
    %v2825 = vpop.f32.mrb[0].mxu0
    %v2826 = vpop.f32.mrb[0].mxu0
    %2827 = vdwg.mxu0
    %v2828 = vadd.f32 %v2781, %v254
    %v2829 = vadd.f32 %v2783, %v258
    %v2830 = vadd.f32 %v2822, %v262
    %v2831 = vadd.f32 %v2824, %v266
    %v2832 = vmul.f32 %v2828, 0.5
    %v2833 = vtanh.pop %v2832
    %v2834 = vmul.f32 %v2833, 0.5
    %v2835 = vadd.f32 %v2834, 0.5
    %v2836 = vmul.f32 %v2829, 0.5
    %v2837 = vtanh.pop %v2836
    %v2838 = vmul.f32 %v2837, 0.5
    %v2839 = vadd.f32 %v2838, 0.5
    %v2840 = vtanh.pop %v2830
    %v2841 = vmul.f32 %v2831, 0.5
    %v2842 = vtanh.pop %v2841
    %v2843 = vmul.f32 %v2842, 0.5
    %v2844 = vadd.f32 %v2843, 0.5
    %v2845 = vmul.f32 %v2839, %v2548
    %v2846 = vmul.f32 %v2835, %v2840
    %v2847 = vadd.f32 %v2845, %v2846
    %v2848 = vtanh.pop %v2847
    %v2849 = vmul.f32 %v2844, %v2848
    %s2850 = scalar_lea.vmem [#allocation4], 112
    %v2851 = vld [vmem:[%s2850] sm:$0xff]
    %v2852 = vld [vmem:[%s2850 + $0x8] sm:$0xff]
    %v2853 = vunpack.c.l.bf16 %v2851
    %v2854 = vunpack.c.h.bf16 %v2851
    %v2855 = vunpack.c.l.bf16 %v2852
    %v2856 = vunpack.c.h.bf16 %v2852
    %2857 = vmatprep.subr.bf16.mxu0 %v381
    %2858 = vmatpush1.bf16.msra.mxu0 %v380
    %2859 = vmatprep.subr.bf16.mxu0 %v385
    %2860 = vmatpush1.bf16.msra.mxu0 %v384
    %2861 = vmatprep.subr.bf16.mxu0 %v389
    %2862 = vmatpush1.bf16.msra.mxu0 %v388
    %2863 = vmatprep.subr.bf16.mxu0 %v393
    %2864 = vmatpush1.bf16.msra.mxu0 %v392
    %2865 = vmatprep.subr.bf16.mxu0 %v397
    %2866 = vmatpush1.bf16.msra.mxu0 %v396
    %2867 = vmatprep.subr.bf16.mxu0 %v401
    %2868 = vmatpush1.bf16.msra.mxu0 %v400
    %2869 = vmatprep.subr.bf16.mxu0 %v405
    %2870 = vmatpush1.bf16.msra.mxu0 %v404
    %2871 = vmatprep.subr.bf16.mxu0 %v409
    %2872 = vmatpush1.bf16.msra.mxu0 %v408
    %2873 = vmatprep.subr.bf16.mxu0 0
    %2874 = vmatpush1.bf16.msra.mxu0 0
    %2875 = vmatprep.subr.bf16.mxu0 0
    %2876 = vmatpush1.bf16.msra.mxu0 0
    %2877 = vmatprep.subr.bf16.mxu0 0
    %2878 = vmatpush1.bf16.msra.mxu0 0
    %2879 = vmatprep.subr.bf16.mxu0 0
    %2880 = vmatpush1.bf16.msra.mxu0 0
    %2881 = vmatprep.subr.bf16.mxu0 0
    %2882 = vmatpush1.bf16.msra.mxu0 0
    %2883 = vmatprep.subr.bf16.mxu0 0
    %2884 = vmatpush1.bf16.msra.mxu0 0
    %2885 = vmatprep.subr.bf16.mxu0 0
    %2886 = vmatpush1.bf16.msra.mxu0 0
    %2887 = vmatprep.subr.bf16.mxu0 0
    %2888 = vmatpush1.bf16.msra.mxu0 0
    %2889 = vmatprep.mubr.bf16.mxu0 0
    %2890 = vmatmul.mubr.bf16.gmra.mrb[0].mxu0 %v2662
    %v2891 = vpop.f32.mrb[0].mxu0
    %v2892 = vadd.f32 %v2853, %v2891
    %v2893 = vpop.f32.mrb[0].mxu0
    %v2894 = vadd.f32 %v2854, %v2893
    %v2895 = vpop.f32.mrb[0].mxu0
    %v2896 = vpop.f32.mrb[0].mxu0
    %2897 = vdwg.mxu0
    %2898 = vmatprep.subr.bf16.mxu0 %v383
    %2899 = vmatpush1.bf16.msra.mxu0 %v382
    %2900 = vmatprep.subr.bf16.mxu0 %v387
    %2901 = vmatpush1.bf16.msra.mxu0 %v386
    %2902 = vmatprep.subr.bf16.mxu0 %v391
    %2903 = vmatpush1.bf16.msra.mxu0 %v390
    %2904 = vmatprep.subr.bf16.mxu0 %v395
    %2905 = vmatpush1.bf16.msra.mxu0 %v394
    %2906 = vmatprep.subr.bf16.mxu0 %v399
    %2907 = vmatpush1.bf16.msra.mxu0 %v398
    %2908 = vmatprep.subr.bf16.mxu0 %v403
    %2909 = vmatpush1.bf16.msra.mxu0 %v402
    %2910 = vmatprep.subr.bf16.mxu0 %v407
    %2911 = vmatpush1.bf16.msra.mxu0 %v406
    %2912 = vmatprep.subr.bf16.mxu0 %v411
    %2913 = vmatpush1.bf16.msra.mxu0 %v410
    %2914 = vmatprep.subr.bf16.mxu0 0
    %2915 = vmatpush1.bf16.msra.mxu0 0
    %2916 = vmatprep.subr.bf16.mxu0 0
    %2917 = vmatpush1.bf16.msra.mxu0 0
    %2918 = vmatprep.subr.bf16.mxu0 0
    %2919 = vmatpush1.bf16.msra.mxu0 0
    %2920 = vmatprep.subr.bf16.mxu0 0
    %2921 = vmatpush1.bf16.msra.mxu0 0
    %2922 = vmatprep.subr.bf16.mxu0 0
    %2923 = vmatpush1.bf16.msra.mxu0 0
    %2924 = vmatprep.subr.bf16.mxu0 0
    %2925 = vmatpush1.bf16.msra.mxu0 0
    %2926 = vmatprep.subr.bf16.mxu0 0
    %2927 = vmatpush1.bf16.msra.mxu0 0
    %2928 = vmatprep.subr.bf16.mxu0 0
    %2929 = vmatpush1.bf16.msra.mxu0 0
    %2930 = vmatprep.mubr.bf16.mxu0 0
    %2931 = vmatmul.mubr.bf16.gmra.mrb[0].mxu0 %v2662
    %v2932 = vpop.f32.mrb[0].mxu0
    %v2933 = vadd.f32 %v2855, %v2932
    %v2934 = vpop.f32.mrb[0].mxu0
    %v2935 = vadd.f32 %v2856, %v2934
    %v2936 = vpop.f32.mrb[0].mxu0
    %v2937 = vpop.f32.mrb[0].mxu0
    %2938 = vdwg.mxu0
    %v2939 = vadd.f32 %v2892, %v168
    %v2940 = vadd.f32 %v2894, %v172
    %v2941 = vadd.f32 %v2933, %v176
    %v2942 = vadd.f32 %v2935, %v180
    %v2943 = vmul.f32 %v2939, 0.5
    %v2944 = vtanh.pop %v2943
    %v2945 = vmul.f32 %v2944, 0.5
    %v2946 = vadd.f32 %v2945, 0.5
    %v2947 = vmul.f32 %v2940, 0.5
    %v2948 = vtanh.pop %v2947
    %v2949 = vmul.f32 %v2948, 0.5
    %v2950 = vadd.f32 %v2949, 0.5
    %v2951 = vtanh.pop %v2941
    %v2952 = vmul.f32 %v2942, 0.5
    %v2953 = vtanh.pop %v2952
    %v2954 = vmul.f32 %v2953, 0.5
    %v2955 = vadd.f32 %v2954, 0.5
    %v2956 = vmul.f32 %v2950, %v2659
    %v2957 = vmul.f32 %v2946, %v2951
    %v2958 = vadd.f32 %v2956, %v2957
    %v2959 = vtanh.pop %v2958
    %v2960 = vmul.f32 %v2955, %v2959
    %v2961 = vpack.c.bf16 %v2960, %v2960
    %v2962 = vpack.c.bf16 %v2849, %v2849
    %2963 = vmatprep.subr.bf16.mxu0 %v647
    %2964 = vmatpush1.bf16.msra.mxu0 %v646
    %2965 = vmatprep.subr.bf16.mxu0 %v651
    %2966 = vmatpush1.bf16.msra.mxu0 %v650
    %2967 = vmatprep.subr.bf16.mxu0 %v655
    %2968 = vmatpush1.bf16.msra.mxu0 %v654
    %2969 = vmatprep.subr.bf16.mxu0 %v659
    %2970 = vmatpush1.bf16.msra.mxu0 %v658
    %2971 = vmatprep.subr.bf16.mxu0 %v663
    %2972 = vmatpush1.bf16.msra.mxu0 %v662
    %2973 = vmatprep.subr.bf16.mxu0 %v667
    %2974 = vmatpush1.bf16.msra.mxu0 %v666
    %2975 = vmatprep.subr.bf16.mxu0 %v671
    %2976 = vmatpush1.bf16.msra.mxu0 %v670
    %2977 = vmatprep.subr.bf16.mxu0 %v675
    %2978 = vmatpush1.bf16.msra.mxu0 %v674
    %2979 = vmatprep.subr.bf16.mxu0 0
    %2980 = vmatpush1.bf16.msra.mxu0 0
    %2981 = vmatprep.subr.bf16.mxu0 0
    %2982 = vmatpush1.bf16.msra.mxu0 0
    %2983 = vmatprep.subr.bf16.mxu0 0
    %2984 = vmatpush1.bf16.msra.mxu0 0
    %2985 = vmatprep.subr.bf16.mxu0 0
    %2986 = vmatpush1.bf16.msra.mxu0 0
    %2987 = vmatprep.subr.bf16.mxu0 0
    %2988 = vmatpush1.bf16.msra.mxu0 0
    %2989 = vmatprep.subr.bf16.mxu0 0
    %2990 = vmatpush1.bf16.msra.mxu0 0
    %2991 = vmatprep.subr.bf16.mxu0 0
    %2992 = vmatpush1.bf16.msra.mxu0 0
    %2993 = vmatprep.subr.bf16.mxu0 0
    %2994 = vmatpush1.bf16.msra.mxu0 0
    %2995 = vmatprep.mubr.bf16.mxu0 0
    %2996 = vmatmul.mubr.bf16.gmra.mrb[0].mxu0 %v2962
    %v2997 = vpop.f32.mrb[0].mxu0
    %v2998 = vadd.f32 0.0, %v2997
    %v2999 = vpop.f32.mrb[0].mxu0
    %v3000 = vadd.f32 0.0, %v2999
    %v3001 = vpop.f32.mrb[0].mxu0
    %v3002 = vpop.f32.mrb[0].mxu0
    %3003 = vdwg.mxu0
    %3004 = vmatprep.subr.bf16.mxu0 %v649
    %3005 = vmatpush1.bf16.msra.mxu0 %v648
    %3006 = vmatprep.subr.bf16.mxu0 %v653
    %3007 = vmatpush1.bf16.msra.mxu0 %v652
    %3008 = vmatprep.subr.bf16.mxu0 %v657
    %3009 = vmatpush1.bf16.msra.mxu0 %v656
    %3010 = vmatprep.subr.bf16.mxu0 %v661
    %3011 = vmatpush1.bf16.msra.mxu0 %v660
    %3012 = vmatprep.subr.bf16.mxu0 %v665
    %3013 = vmatpush1.bf16.msra.mxu0 %v664
    %3014 = vmatprep.subr.bf16.mxu0 %v669
    %3015 = vmatpush1.bf16.msra.mxu0 %v668
    %3016 = vmatprep.subr.bf16.mxu0 %v673
    %3017 = vmatpush1.bf16.msra.mxu0 %v672
    %3018 = vmatprep.subr.bf16.mxu0 %v677
    %3019 = vmatpush1.bf16.msra.mxu0 %v676
    %3020 = vmatprep.subr.bf16.mxu0 0
    %3021 = vmatpush1.bf16.msra.mxu0 0
    %3022 = vmatprep.subr.bf16.mxu0 0
    %3023 = vmatpush1.bf16.msra.mxu0 0
    %3024 = vmatprep.subr.bf16.mxu0 0
    %3025 = vmatpush1.bf16.msra.mxu0 0
    %3026 = vmatprep.subr.bf16.mxu0 0
    %3027 = vmatpush1.bf16.msra.mxu0 0
    %3028 = vmatprep.subr.bf16.mxu0 0
    %3029 = vmatpush1.bf16.msra.mxu0 0
    %3030 = vmatprep.subr.bf16.mxu0 0
    %3031 = vmatpush1.bf16.msra.mxu0 0
    %3032 = vmatprep.subr.bf16.mxu0 0
    %3033 = vmatpush1.bf16.msra.mxu0 0
    %3034 = vmatprep.subr.bf16.mxu0 0
    %3035 = vmatpush1.bf16.msra.mxu0 0
    %3036 = vmatprep.mubr.bf16.mxu0 0
    %3037 = vmatmul.mubr.bf16.gmra.mrb[0].mxu0 %v2962
    %v3038 = vpop.f32.mrb[0].mxu0
    %v3039 = vadd.f32 0.0, %v3038
    %v3040 = vpop.f32.mrb[0].mxu0
    %v3041 = vadd.f32 0.0, %v3040
    %v3042 = vpop.f32.mrb[0].mxu0
    %v3043 = vpop.f32.mrb[0].mxu0
    %3044 = vdwg.mxu0
    %3045 = vmatprep.subr.bf16.mxu0 %v889
    %3046 = vmatpush1.bf16.msra.mxu0 %v888
    %3047 = vmatprep.subr.bf16.mxu0 %v893
    %3048 = vmatpush1.bf16.msra.mxu0 %v892
    %3049 = vmatprep.subr.bf16.mxu0 %v897
    %3050 = vmatpush1.bf16.msra.mxu0 %v896
    %3051 = vmatprep.subr.bf16.mxu0 %v901
    %3052 = vmatpush1.bf16.msra.mxu0 %v900
    %3053 = vmatprep.subr.bf16.mxu0 %v905
    %3054 = vmatpush1.bf16.msra.mxu0 %v904
    %3055 = vmatprep.subr.bf16.mxu0 %v909
    %3056 = vmatpush1.bf16.msra.mxu0 %v908
    %3057 = vmatprep.subr.bf16.mxu0 %v913
    %3058 = vmatpush1.bf16.msra.mxu0 %v912
    %3059 = vmatprep.subr.bf16.mxu0 %v917
    %3060 = vmatpush1.bf16.msra.mxu0 %v916
    %3061 = vmatprep.subr.bf16.mxu0 0
    %3062 = vmatpush1.bf16.msra.mxu0 0
    %3063 = vmatprep.subr.bf16.mxu0 0
    %3064 = vmatpush1.bf16.msra.mxu0 0
    %3065 = vmatprep.subr.bf16.mxu0 0
    %3066 = vmatpush1.bf16.msra.mxu0 0
    %3067 = vmatprep.subr.bf16.mxu0 0
    %3068 = vmatpush1.bf16.msra.mxu0 0
    %3069 = vmatprep.subr.bf16.mxu0 0
    %3070 = vmatpush1.bf16.msra.mxu0 0
    %3071 = vmatprep.subr.bf16.mxu0 0
    %3072 = vmatpush1.bf16.msra.mxu0 0
    %3073 = vmatprep.subr.bf16.mxu0 0
    %3074 = vmatpush1.bf16.msra.mxu0 0
    %3075 = vmatprep.subr.bf16.mxu0 0
    %3076 = vmatpush1.bf16.msra.mxu0 0
    %3077 = vmatprep.mubr.bf16.mxu0 0
    %3078 = vmatmul.mubr.bf16.gmra.mrb[0].mxu0 %v2961
    %v3079 = vpop.f32.mrb[0].mxu0
    %v3080 = vadd.f32 %v2998, %v3079
    %v3081 = vpop.f32.mrb[0].mxu0
    %v3082 = vadd.f32 %v3000, %v3081
    %v3083 = vpop.f32.mrb[0].mxu0
    %v3084 = vpop.f32.mrb[0].mxu0
    %3085 = vdwg.mxu0
    %3086 = vmatprep.subr.bf16.mxu0 %v891
    %3087 = vmatpush1.bf16.msra.mxu0 %v890
    %3088 = vmatprep.subr.bf16.mxu0 %v895
    %3089 = vmatpush1.bf16.msra.mxu0 %v894
    %3090 = vmatprep.subr.bf16.mxu0 %v899
    %3091 = vmatpush1.bf16.msra.mxu0 %v898
    %3092 = vmatprep.subr.bf16.mxu0 %v903
    %3093 = vmatpush1.bf16.msra.mxu0 %v902
    %3094 = vmatprep.subr.bf16.mxu0 %v907
    %3095 = vmatpush1.bf16.msra.mxu0 %v906
    %3096 = vmatprep.subr.bf16.mxu0 %v911
    %3097 = vmatpush1.bf16.msra.mxu0 %v910
    %3098 = vmatprep.subr.bf16.mxu0 %v915
    %3099 = vmatpush1.bf16.msra.mxu0 %v914
    %3100 = vmatprep.subr.bf16.mxu0 %v919
    %3101 = vmatpush1.bf16.msra.mxu0 %v918
    %3102 = vmatprep.subr.bf16.mxu0 0
    %3103 = vmatpush1.bf16.msra.mxu0 0
    %3104 = vmatprep.subr.bf16.mxu0 0
    %3105 = vmatpush1.bf16.msra.mxu0 0
    %3106 = vmatprep.subr.bf16.mxu0 0
    %3107 = vmatpush1.bf16.msra.mxu0 0
    %3108 = vmatprep.subr.bf16.mxu0 0
    %3109 = vmatpush1.bf16.msra.mxu0 0
    %3110 = vmatprep.subr.bf16.mxu0 0
    %3111 = vmatpush1.bf16.msra.mxu0 0
    %3112 = vmatprep.subr.bf16.mxu0 0
    %3113 = vmatpush1.bf16.msra.mxu0 0
    %3114 = vmatprep.subr.bf16.mxu0 0
    %3115 = vmatpush1.bf16.msra.mxu0 0
    %3116 = vmatprep.subr.bf16.mxu0 0
    %3117 = vmatpush1.bf16.msra.mxu0 0
    %3118 = vmatprep.mubr.bf16.mxu0 0
    %3119 = vmatmul.mubr.bf16.gmra.mrb[0].mxu0 %v2961
    %v3120 = vpop.f32.mrb[0].mxu0
    %v3121 = vadd.f32 %v3039, %v3120
    %v3122 = vpop.f32.mrb[0].mxu0
    %v3123 = vadd.f32 %v3041, %v3122
    %v3124 = vpop.f32.mrb[0].mxu0
    %v3125 = vpop.f32.mrb[0].mxu0
    %3126 = vdwg.mxu0
    %v3127 = vadd.f32 %v3080, %v254
    %v3128 = vadd.f32 %v3082, %v258
    %v3129 = vadd.f32 %v3121, %v262
    %v3130 = vadd.f32 %v3123, %v266
    %v3131 = vmul.f32 %v3127, 0.5
    %v3132 = vtanh.pop %v3131
    %v3133 = vmul.f32 %v3132, 0.5
    %v3134 = vadd.f32 %v3133, 0.5
    %v3135 = vmul.f32 %v3128, 0.5
    %v3136 = vtanh.pop %v3135
    %v3137 = vmul.f32 %v3136, 0.5
    %v3138 = vadd.f32 %v3137, 0.5
    %v3139 = vtanh.pop %v3129
    %v3140 = vmul.f32 %v3130, 0.5
    %v3141 = vtanh.pop %v3140
    %v3142 = vmul.f32 %v3141, 0.5
    %v3143 = vadd.f32 %v3142, 0.5
    %v3144 = vmul.f32 %v3138, %v2847
    %v3145 = vmul.f32 %v3134, %v3139
    %v3146 = vadd.f32 %v3144, %v3145
    %v3147 = vtanh.pop %v3146
    %v3148 = vmul.f32 %v3143, %v3147
    %3149 = vst [vmem:[#allocation2] sm:$0xff] %v2960
    %3150 = vst [vmem:[#allocation3] sm:$0xff] %v2958
    %3151 = vst [vmem:[%s272] sm:$0xff] %v3148
    %3152 = vst [vmem:[%s275] sm:$0xff] %v3146
    // Predicated region
    $region70: #{tpu_custom_call.1} parent=1 // pred_check
      %p3153 = pneg %p123
    $region71: #{tpu_custom_call.1} parent=1 // pred_check_branch
      %3155 = sbr.rel (%p3153) target = $region73
    $region72: #{tpu_custom_call.1} parent=1 // pred_region
      %3156 = vst [vmem:[#allocation15] sm:$0xff] %v2960
      %3157 = vst [vmem:[#allocation16] sm:$0xff] %v2958
      %s3158 = scalar_lea.vmem [#allocation15], 8
      %3159 = vst [vmem:[%s3158] sm:$0xff] %v3148
      %s3160 = scalar_lea.vmem [#allocation16], 8
      %3161 = vst [vmem:[%s3160] sm:$0xff] %v3146
      %v3162 = vpack.c.bf16 %v3148, %v3148
      %v3163 = vld [vmem:[#allocation12] sm:$0xff]
      %v3164 = vld [vmem:[#allocation12 + $0x8] sm:$0xff]
      %v3165 = vld [vmem:[#allocation12 + $0x10] sm:$0xff]
      %v3166 = vld [vmem:[#allocation12 + $0x18] sm:$0xff]
      %v3167 = vld [vmem:[#allocation12 + $0x20] sm:$0xff]
      %v3168 = vld [vmem:[#allocation12 + $0x28] sm:$0xff]
      %v3169 = vld [vmem:[#allocation12 + $0x30] sm:$0xff]
      %v3170 = vld [vmem:[#allocation12 + $0x38] sm:$0xff]
      %v3171 = vld [vmem:[#allocation12 + $0x40] sm:$0xff]
      %v3172 = vld [vmem:[#allocation12 + $0x48] sm:$0xff]
      %v3173 = vld [vmem:[#allocation12 + $0x50] sm:$0xff]
      %v3174 = vld [vmem:[#allocation12 + $0x58] sm:$0xff]
      %v3175 = vld [vmem:[#allocation12 + $0x60] sm:$0xff]
      %v3176 = vld [vmem:[#allocation12 + $0x68] sm:$0xff]
      %v3177 = vld [vmem:[#allocation12 + $0x70] sm:$0xff]
      %v3178 = vld [vmem:[#allocation12 + $0x78] sm:$0xff]
      %v3179 = vld [vmem:[%s7] sm:$0x3]
      %v3181 = vlaneseq
      %v3182 = vshrl.u32 %v3181, 7
      %v3183 = vsub.s32 0, %v3182
      %v3184 = vrot.slane %v3179, %v3183
      %v3185 = vlaneseq
      %v3186 = vshrl.u32 %v3185, 7
      %v3187 = vsub.s32 1, %v3186
      %v3188 = vrot.slane %v3179, %v3187
      %v3207 = vunpack.c.l.b16 %v3163
      %v3208 = vunpack.c.h.b16 %v3163
      %v3209 = vunpack.c.l.b16 %v3164
      %v3210 = vunpack.c.h.b16 %v3164
      %v3211 = vunpack.c.l.b16 %v3165
      %v3212 = vunpack.c.h.b16 %v3165
      %v3213 = vunpack.c.l.b16 %v3166
      %v3214 = vunpack.c.h.b16 %v3166
      %v3215 = vunpack.c.l.b16 %v3167
      %v3216 = vunpack.c.h.b16 %v3167
      %v3217 = vunpack.c.l.b16 %v3168
      %v3218 = vunpack.c.h.b16 %v3168
      %v3219 = vunpack.c.l.b16 %v3169
      %v3220 = vunpack.c.h.b16 %v3169
      %v3221 = vunpack.c.l.b16 %v3170
      %v3222 = vunpack.c.h.b16 %v3170
      %v3223 = vunpack.c.l.b16 %v3171
      %v3224 = vunpack.c.h.b16 %v3171
      %v3225 = vunpack.c.l.b16 %v3172
      %v3226 = vunpack.c.h.b16 %v3172
      %v3227 = vunpack.c.l.b16 %v3173
      %v3228 = vunpack.c.h.b16 %v3173
      %v3229 = vunpack.c.l.b16 %v3174
      %v3230 = vunpack.c.h.b16 %v3174
      %v3231 = vunpack.c.l.b16 %v3175
      %v3232 = vunpack.c.h.b16 %v3175
      %v3233 = vunpack.c.l.b16 %v3176
      %v3234 = vunpack.c.h.b16 %v3176
      %v3235 = vunpack.c.l.b16 %v3177
      %v3236 = vunpack.c.h.b16 %v3177
      %v3237 = vunpack.c.l.b16 %v3178
      %v3238 = vunpack.c.h.b16 %v3178
      %v3239 = vpack.c.b16 %v3209, %v3207
      %v3240 = vpack.c.b16 %v3210, %v3208
      %v3241 = vpack.c.b16 %v3213, %v3211
      %v3242 = vpack.c.b16 %v3214, %v3212
      %v3243 = vpack.c.b16 %v3217, %v3215
      %v3244 = vpack.c.b16 %v3218, %v3216
      %v3245 = vpack.c.b16 %v3221, %v3219
      %v3246 = vpack.c.b16 %v3222, %v3220
      %v3247 = vpack.c.b16 %v3225, %v3223
      %v3248 = vpack.c.b16 %v3226, %v3224
      %v3249 = vpack.c.b16 %v3229, %v3227
      %v3250 = vpack.c.b16 %v3230, %v3228
      %v3251 = vpack.c.b16 %v3233, %v3231
      %v3252 = vpack.c.b16 %v3234, %v3232
      %v3253 = vpack.c.b16 %v3237, %v3235
      %v3254 = vpack.c.b16 %v3238, %v3236
      %3271 = vmatprep.subr.bf16.mxu0 %v3240
      %3272 = vmatpush1.bf16.msra.mxu0 %v3239
      %3273 = vmatprep.subr.bf16.mxu0 %v3242
      %3274 = vmatpush1.bf16.msra.mxu0 %v3241
      %3275 = vmatprep.subr.bf16.mxu0 %v3244
      %3276 = vmatpush1.bf16.msra.mxu0 %v3243
      %3277 = vmatprep.subr.bf16.mxu0 %v3246
      %3278 = vmatpush1.bf16.msra.mxu0 %v3245
      %3279 = vmatprep.subr.bf16.mxu0 %v3248
      %3280 = vmatpush1.bf16.msra.mxu0 %v3247
      %3281 = vmatprep.subr.bf16.mxu0 %v3250
      %3282 = vmatpush1.bf16.msra.mxu0 %v3249
      %3283 = vmatprep.subr.bf16.mxu0 %v3252
      %3284 = vmatpush1.bf16.msra.mxu0 %v3251
      %3285 = vmatprep.subr.bf16.mxu0 %v3254
      %3286 = vmatpush1.bf16.msra.mxu0 %v3253
      %3287 = vmatprep.subr.bf16.mxu0 0
      %3288 = vmatpush1.bf16.msra.mxu0 0
      %3289 = vmatprep.subr.bf16.mxu0 0
      %3290 = vmatpush1.bf16.msra.mxu0 0
      %3291 = vmatprep.subr.bf16.mxu0 0
      %3292 = vmatpush1.bf16.msra.mxu0 0
      %3293 = vmatprep.subr.bf16.mxu0 0
      %3294 = vmatpush1.bf16.msra.mxu0 0
      %3295 = vmatprep.subr.bf16.mxu0 0
      %3296 = vmatpush1.bf16.msra.mxu0 0
      %3297 = vmatprep.subr.bf16.mxu0 0
      %3298 = vmatpush1.bf16.msra.mxu0 0
      %3299 = vmatprep.subr.bf16.mxu0 0
      %3300 = vmatpush1.bf16.msra.mxu0 0
      %3301 = vmatprep.subr.bf16.mxu0 0
      %3302 = vmatpush1.bf16.msra.mxu0 0
      %3303 = vmatprep.mubr.bf16.mxu0 0
      %3304 = vmatmul.mubr.bf16.gmra.mrb[0].mxu0 %v3162
      %v3305 = vpop.f32.mrb[0].mxu0
      %v3306 = vadd.f32 %v3184, %v3305
      %v3307 = vpop.f32.mrb[0].mxu0
      %v3308 = vadd.f32 %v3188, %v3307
      %v3309 = vpop.f32.mrb[0].mxu0
      %v3310 = vpop.f32.mrb[0].mxu0
      %3311 = vdwg.mxu0
      %v3312 = vmax.f32 %v3306, 0.0
      %v3313 = vmax.f32 %v3308, 0.0
      %v3314 = vpack.c.bf16 %v3312, %v3312
      %v3315 = vpack.c.bf16 %v3313, %v3313
      %v3316 = vld [vmem:[#allocation13] sm:$0xf]
      %v3317 = vld [vmem:[#allocation13 + $0x4] sm:$0xf]
      %v3318 = vld [vmem:[#allocation13 + $0x8] sm:$0xf]
      %v3319 = vld [vmem:[#allocation13 + $0xc] sm:$0xf]
      %v3320 = vld [vmem:[#allocation13 + $0x10] sm:$0xf]
      %v3321 = vld [vmem:[#allocation13 + $0x14] sm:$0xf]
      %v3322 = vld [vmem:[#allocation13 + $0x18] sm:$0xf]
      %v3323 = vld [vmem:[#allocation13 + $0x1c] sm:$0xf]
      %v3324 = vld [vmem:[#allocation13 + $0x20] sm:$0xf]
      %v3325 = vld [vmem:[#allocation13 + $0x24] sm:$0xf]
      %v3326 = vld [vmem:[#allocation13 + $0x28] sm:$0xf]
      %v3327 = vld [vmem:[#allocation13 + $0x2c] sm:$0xf]
      %v3328 = vld [vmem:[#allocation13 + $0x30] sm:$0xf]
      %v3329 = vld [vmem:[#allocation13 + $0x34] sm:$0xf]
      %v3330 = vld [vmem:[#allocation13 + $0x38] sm:$0xf]
      %v3331 = vld [vmem:[#allocation13 + $0x3c] sm:$0xf]
      %v3332 = vld [vmem:[#allocation13 + $0x40] sm:$0xf]
      %v3333 = vld [vmem:[#allocation13 + $0x44] sm:$0xf]
      %v3334 = vld [vmem:[#allocation13 + $0x48] sm:$0xf]
      %v3335 = vld [vmem:[#allocation13 + $0x4c] sm:$0xf]
      %v3336 = vld [vmem:[#allocation13 + $0x50] sm:$0xf]
      %v3337 = vld [vmem:[#allocation13 + $0x54] sm:$0xf]
      %v3338 = vld [vmem:[#allocation13 + $0x58] sm:$0xf]
      %v3339 = vld [vmem:[#allocation13 + $0x5c] sm:$0xf]
      %v3340 = vld [vmem:[#allocation13 + $0x60] sm:$0xf]
      %v3341 = vld [vmem:[#allocation13 + $0x64] sm:$0xf]
      %v3342 = vld [vmem:[#allocation13 + $0x68] sm:$0xf]
      %v3343 = vld [vmem:[#allocation13 + $0x6c] sm:$0xf]
      %v3344 = vld [vmem:[#allocation13 + $0x70] sm:$0xf]
      %v3345 = vld [vmem:[#allocation13 + $0x74] sm:$0xf]
      %v3346 = vld [vmem:[#allocation13 + $0x78] sm:$0xf]
      %v3347 = vld [vmem:[#allocation13 + $0x7c] sm:$0xf]
      %v3348 = vld [vmem:[%s9] sm:$0x1]
      %v3350 = vlaneseq
      %v3351 = vshrl.u32 %v3350, 7
      %v3352 = vsub.s32 0, %v3351
      %v3353 = vrot.slane %v3348, %v3352
      %v3387 = vunpack.c.l.b16 %v3316
      %v3388 = vunpack.c.l.b16 %v3317
      %v3389 = vunpack.c.l.b16 %v3318
      %v3390 = vunpack.c.l.b16 %v3319
      %v3391 = vunpack.c.l.b16 %v3320
      %v3392 = vunpack.c.l.b16 %v3321
      %v3393 = vunpack.c.l.b16 %v3322
      %v3394 = vunpack.c.l.b16 %v3323
      %v3395 = vunpack.c.l.b16 %v3324
      %v3396 = vunpack.c.l.b16 %v3325
      %v3397 = vunpack.c.l.b16 %v3326
      %v3398 = vunpack.c.l.b16 %v3327
      %v3399 = vunpack.c.l.b16 %v3328
      %v3400 = vunpack.c.l.b16 %v3329
      %v3401 = vunpack.c.l.b16 %v3330
      %v3402 = vunpack.c.l.b16 %v3331
      %v3403 = vunpack.c.l.b16 %v3332
      %v3404 = vunpack.c.l.b16 %v3333
      %v3405 = vunpack.c.l.b16 %v3334
      %v3406 = vunpack.c.l.b16 %v3335
      %v3407 = vunpack.c.l.b16 %v3336
      %v3408 = vunpack.c.l.b16 %v3337
      %v3409 = vunpack.c.l.b16 %v3338
      %v3410 = vunpack.c.l.b16 %v3339
      %v3411 = vunpack.c.l.b16 %v3340
      %v3412 = vunpack.c.l.b16 %v3341
      %v3413 = vunpack.c.l.b16 %v3342
      %v3414 = vunpack.c.l.b16 %v3343
      %v3415 = vunpack.c.l.b16 %v3344
      %v3416 = vunpack.c.l.b16 %v3345
      %v3417 = vunpack.c.l.b16 %v3346
      %v3418 = vunpack.c.l.b16 %v3347
      %v3419 = vpack.c.b16 %v3388, %v3387
      %v3420 = vpack.c.b16 %v3390, %v3389
      %v3421 = vpack.c.b16 %v3392, %v3391
      %v3422 = vpack.c.b16 %v3394, %v3393
      %v3423 = vpack.c.b16 %v3396, %v3395
      %v3424 = vpack.c.b16 %v3398, %v3397
      %v3425 = vpack.c.b16 %v3400, %v3399
      %v3426 = vpack.c.b16 %v3402, %v3401
      %v3427 = vpack.c.b16 %v3404, %v3403
      %v3428 = vpack.c.b16 %v3406, %v3405
      %v3429 = vpack.c.b16 %v3408, %v3407
      %v3430 = vpack.c.b16 %v3410, %v3409
      %v3431 = vpack.c.b16 %v3412, %v3411
      %v3432 = vpack.c.b16 %v3414, %v3413
      %v3433 = vpack.c.b16 %v3416, %v3415
      %v3434 = vpack.c.b16 %v3418, %v3417
      %3451 = vmatprep.subr.bf16.mxu0 0
      %3452 = vmatpush1.bf16.msra.mxu0 %v3419
      %3453 = vmatprep.subr.bf16.mxu0 0
      %3454 = vmatpush1.bf16.msra.mxu0 %v3420
      %3455 = vmatprep.subr.bf16.mxu0 0
      %3456 = vmatpush1.bf16.msra.mxu0 %v3421
      %3457 = vmatprep.subr.bf16.mxu0 0
      %3458 = vmatpush1.bf16.msra.mxu0 %v3422
      %3459 = vmatprep.subr.bf16.mxu0 0
      %3460 = vmatpush1.bf16.msra.mxu0 %v3423
      %3461 = vmatprep.subr.bf16.mxu0 0
      %3462 = vmatpush1.bf16.msra.mxu0 %v3424
      %3463 = vmatprep.subr.bf16.mxu0 0
      %3464 = vmatpush1.bf16.msra.mxu0 %v3425
      %3465 = vmatprep.subr.bf16.mxu0 0
      %3466 = vmatpush1.bf16.msra.mxu0 %v3426
      %3467 = vmatprep.subr.bf16.mxu0 0
      %3468 = vmatpush1.bf16.msra.mxu0 %v3427
      %3469 = vmatprep.subr.bf16.mxu0 0
      %3470 = vmatpush1.bf16.msra.mxu0 %v3428
      %3471 = vmatprep.subr.bf16.mxu0 0
      %3472 = vmatpush1.bf16.msra.mxu0 %v3429
      %3473 = vmatprep.subr.bf16.mxu0 0
      %3474 = vmatpush1.bf16.msra.mxu0 %v3430
      %3475 = vmatprep.subr.bf16.mxu0 0
      %3476 = vmatpush1.bf16.msra.mxu0 %v3431
      %3477 = vmatprep.subr.bf16.mxu0 0
      %3478 = vmatpush1.bf16.msra.mxu0 %v3432
      %3479 = vmatprep.subr.bf16.mxu0 0
      %3480 = vmatpush1.bf16.msra.mxu0 %v3433
      %3481 = vmatprep.subr.bf16.mxu0 0
      %3482 = vmatpush1.bf16.msra.mxu0 %v3434
      %3483 = vmatprep.mubr.bf16.mxu0 %v3315
      %3484 = vmatmul.mubr.bf16.gmra.mrb[0].mxu0 %v3314
      %v3485 = vpop.f32.mrb[0].mxu0
      %v3486 = vadd.f32 %v3353, %v3485
      %v3487 = vpop.f32.mrb[0].mxu0
      %v3488 = vpop.f32.mrb[0].mxu0
      %v3489 = vpop.f32.mrb[0].mxu0
      %3490 = vdwg.mxu0
      %3491 = vst [vmem:[#allocation18] sm:$0xff] %v3486
    $region73: #{tpu_custom_call.1} parent=1 // pred_fallthru
      _
    // Predicated region
    $region74: #{tpu_custom_call.1} parent=1 // pred_check
      _
    $region75: #{tpu_custom_call.1} parent=1 // pred_check_branch
      %3493 = sbr.rel (0) target = $region77
    $region76: #{tpu_custom_call.1} parent=1 // pred_region
      %s3495 = ssub.s32 256, 256
      %3496 = vsyncadd [#allocation6], %s3495
      %s3497 = sshll.u32 [#allocation15], 4
      %s3498 = int_to_ptr.vmem [resolvable:$true] %s3497
      %3503 = dma.vmem_to_hbm [thread:$0]  %s3498, 256, %s10, [#allocation6], 128, 128, 8
    $region77: #{tpu_custom_call.1} parent=1 // pred_fallthru
      _
    // Predicated region
    $region78: #{tpu_custom_call.1} parent=1 // pred_check
      _
    $region79: #{tpu_custom_call.1} parent=1 // pred_check_branch
      %3505 = sbr.rel (0) target = $region81
    $region80: #{tpu_custom_call.1} parent=1 // pred_region
      %s3507 = ssub.s32 256, 256
      %3508 = vsyncadd [#allocation17], %s3507
      %s3509 = sshll.u32 [#allocation16], 4
      %s3510 = int_to_ptr.vmem [resolvable:$true] %s3509
      %3515 = dma.vmem_to_hbm [thread:$0]  %s3510, 256, %s11, [#allocation17], 128, 128, 8
    $region81: #{tpu_custom_call.1} parent=1 // pred_fallthru
      _
    // Predicated region
    $region82: #{tpu_custom_call.1} parent=1 // pred_check
      _
    $region83: #{tpu_custom_call.1} parent=1 // pred_check_branch
      %3517 = sbr.rel (0) target = $region85
    $region84: #{tpu_custom_call.1} parent=1 // pred_region
      %s3519 = ssub.s32 128, 128
      %3520 = vsyncadd [#allocation17], %s3519
      %s3522 = sshll.u32 [#allocation18], 4
      %s3523 = int_to_ptr.vmem [resolvable:$true] %s3522
      %3525 = dma.vmem_to_hbm [thread:$0]  %s3523, 128, %s12, [#allocation17]
    $region85: #{tpu_custom_call.1} parent=1 // pred_fallthru
      _
    // Predicated region
    $region86: #{tpu_custom_call.1} parent=1 // pred_check
      _
    $region87: #{tpu_custom_call.1} parent=1 // pred_check_branch
      %3527 = sbr.rel (0) target = $region89
    $region88: #{tpu_custom_call.1} parent=1 // pred_region
      %3528 = dma.done [#allocation6], 256
    $region89: #{tpu_custom_call.1} parent=1 // pred_fallthru
      _
    // Predicated region
    $region90: #{tpu_custom_call.1} parent=1 // pred_check
      _
    $region91: #{tpu_custom_call.1} parent=1 // pred_check_branch
      %3530 = sbr.rel (0) target = $region93
    $region92: #{tpu_custom_call.1} parent=1 // pred_region
      %3531 = dma.done [#allocation17], 256
    $region93: #{tpu_custom_call.1} parent=1 // pred_fallthru
      _
    // Predicated region
    $region94: #{tpu_custom_call.1} parent=1 // pred_check
      _
    $region95: #{tpu_custom_call.1} parent=1 // pred_check_branch
      %3533 = sbr.rel (0) target = $region97
    $region96: #{tpu_custom_call.1} parent=1 // pred_region
      %3534 = dma.done [#allocation17], 128
    $region97: #{tpu_custom_call.1} parent=1 // pred_fallthru
      _
    %3535 = vsyncpa [#allocation5], 1
    %3536 = vsyncpa [#allocation8], 1
    %3537 = vsyncpa [#allocation11], 1
    %3538 = vsyncpa [#allocation14], 1
    %3539 = vsyncpa [#allocation6], 1
    %3540 = vsyncpa [#allocation17], 1

</llo_original>
